<compile_context>
chip_gen: v7x
topology: tpu7x:2x2x1
jax: 0.10.0
libtpu: 0.0.40
codegen_flags: <defaults>
</compile_context>

<pallas_src>
import jax
import jax.numpy as jnp
from jax import lax
from jax.experimental import pallas as pl
from jax.experimental.pallas import tpu as pltpu


def _pick_tile(dim, target):
    """Largest tile <= target that divides dim (falls back to full dim)."""
    if dim <= target:
        return dim
    t = target
    while t >= 128:
        if dim % t == 0:
            return t
        t //= 2
    return dim


def _compiler_params(op_bytes, semantics=None):
    """CompilerParams with a vmem limit sized from the actual operands.

    Clamped to [32 MiB, 64 MiB]: never below the per-generation defaults,
    never above v7x's 64 MiB physical VMEM.
    """
    limit = int(min(max(op_bytes + (4 << 20), 32 << 20), 64 << 20))
    return pltpu.CompilerParams(dimension_semantics=semantics,
                                vmem_limit_bytes=limit)


# ----------------------------------------------------------------------------
# Kernel A: fused encoder head (CNN projection folded into the weight)
#   hc = relu(v_mean @ W_enc + b12)  ->  h = hc[:, :H], c = hc[:, H:]
# ----------------------------------------------------------------------------
def encoder_kernel(vmean_ref, wenc_ref, b12_ref, h_ref, c_ref):
    hc = jnp.dot(vmean_ref[...], wenc_ref[...],
                 preferred_element_type=jnp.float32) + b12_ref[...]
    hc = jax.nn.relu(hc)                                   # (B, 2H) f32
    Hd = h_ref.shape[-1]
    h_ref[...] = hc[:, :Hd]
    c_ref[...] = hc[:, Hd:]


def encoder_forward(v_mean, w_enc, b12):
    B = v_mean.shape[0]
    Hd = w_enc.shape[1] // 2
    op_bytes = sum(int(a.size) * a.dtype.itemsize for a in (v_mean, w_enc, b12))
    op_bytes += 2 * B * Hd * 4
    return pl.pallas_call(
        encoder_kernel,
        out_shape=(jax.ShapeDtypeStruct((B, Hd), jnp.float32),
                   jax.ShapeDtypeStruct((B, Hd), jnp.float32)),
        compiler_params=_compiler_params(op_bytes),
    )(v_mean, w_enc, b12)


# ----------------------------------------------------------------------------
# Kernel B: tiled Linear  y = x @ w + b   (grid over M, N; N innermost so the
# x tile is reused across the j loop; lane-dense output tiles)
# ----------------------------------------------------------------------------
def linear_kernel(x_ref, w_ref, b_ref, o_ref):
    x = x_ref[...].astype(jnp.bfloat16)
    o_ref[...] = (jnp.dot(x, w_ref[...], preferred_element_type=jnp.float32)
                  + b_ref[...]).astype(o_ref.dtype)


def linear_tiled(x, w, b, *, tm=256, tn=512):
    M, K = x.shape
    _, N = w.shape
    tm = _pick_tile(M, tm)
    tn = _pick_tile(N, tn)
    # double-buffered tile footprint
    op_bytes = 2 * (tm * K * x.dtype.itemsize + K * tn * w.dtype.itemsize
                    + tn * b.dtype.itemsize + tm * tn * 4)
    return pl.pallas_call(
        linear_kernel,
        out_shape=jax.ShapeDtypeStruct((M, N), jnp.float32),
        grid=(M // tm, N // tn),
        in_specs=[pl.BlockSpec((tm, K), lambda i, j: (i, 0)),
                  pl.BlockSpec((K, tn), lambda i, j: (0, j)),
                  pl.BlockSpec((1, tn), lambda i, j: (0, j))],
        out_specs=pl.BlockSpec((tm, tn), lambda i, j: (i, j)),
        compiler_params=_compiler_params(op_bytes,
                                         semantics=("parallel", "parallel")),
    )(x, w, b)


# ----------------------------------------------------------------------------
# Kernel C: fused 2-layer LSTM, ONE grid step, in-kernel loop over T
#   layer-0 input gates (x@Wih + b) are precomputed (gx); PyTorch gate order
#   i, f, g, o.  Layer-0 state = 0, layer-1 state = encoder (h, c).
#   Layer-1 weights are pre-fused: gates1 = [h0, h1] @ [Wih1; Whh1] + b1.
# ----------------------------------------------------------------------------
def lstm2_kernel(gx_ref, henc_ref, cenc_ref, whh0_ref, w1cat_ref, b1_ref,
                 out_ref):
    T = out_ref.shape[0]
    B, Hd = henc_ref.shape

    whh0 = whh0_ref[...]                     # (H, 4H) bf16
    w1cat = w1cat_ref[...]                   # (2H, 4H) bf16
    b1 = b1_ref[...]                         # (1, 4H) f32

    def cell(gates, c_prev):
        i_g = jax.nn.sigmoid(gates[:, 0 * Hd:1 * Hd])
        f_g = jax.nn.sigmoid(gates[:, 1 * Hd:2 * Hd])
        g_g = jnp.tanh(gates[:, 2 * Hd:3 * Hd])
        o_g = jax.nn.sigmoid(gates[:, 3 * Hd:4 * Hd])
        c_new = f_g * c_prev + i_g * g_g
        h_new = o_g * jnp.tanh(c_new)
        return h_new, c_new

    def body(t, carry):
        h0, c0, h1, c1 = carry
        # layer 0 (input-gate matmul precomputed outside the recurrence)
        gates0 = gx_ref[t] + jnp.dot(h0.astype(jnp.bfloat16), whh0,
                                     preferred_element_type=jnp.float32)
        h0n, c0n = cell(gates0, c0)
        # layer 1: single fused matmul on the concatenated activation
        x1 = jnp.concatenate([h0n.astype(jnp.bfloat16),
                              h1.astype(jnp.bfloat16)], axis=-1)
        gates1 = jnp.dot(x1, w1cat, preferred_element_type=jnp.float32) + b1
        h1n, c1n = cell(gates1, c1)
        out_ref[t] = h1n.astype(out_ref.dtype)
        return (h0n, c0n, h1n, c1n)

    zero = jnp.zeros((B, Hd), jnp.float32)
    init = (zero, zero,
            henc_ref[...].astype(jnp.float32),
            cenc_ref[...].astype(jnp.float32))
    lax.fori_loop(0, T, body, init, unroll=(T <= 16))


def lstm2(gates_x0, h_enc, c_enc, whh0, w1cat, b1):
    T, B, _ = gates_x0.shape
    Hd = h_enc.shape[1]
    op_bytes = sum(int(a.size) * a.dtype.itemsize
                   for a in (gates_x0, h_enc, c_enc, whh0, w1cat, b1))
    op_bytes += T * B * Hd * 2   # bf16 output
    return pl.pallas_call(
        lstm2_kernel,
        out_shape=jax.ShapeDtypeStruct((T, B, Hd), jnp.bfloat16),
        compiler_params=_compiler_params(op_bytes),
    )(gates_x0, h_enc, c_enc, whh0, w1cat, b1)


# ----------------------------------------------------------------------------
# Glue: patchify (stand-in CNN front-end), embedding lookup, layout plumbing
# ----------------------------------------------------------------------------
def patchify(images, patch=32):
    B, C, Hh, Ww = images.shape
    gh, gw = Hh // patch, Ww // patch
    x = images.reshape(B, C, gh, patch, gw, patch)
    x = jnp.transpose(x, (0, 2, 4, 1, 3, 5))          # (B, gh, gw, C, p, p)
    return x.reshape(B, gh * gw, C * patch * patch)   # (B, hw, 3072)


def glo_forward(images, captions, lengths, params):
    del lengths  # see TODO at top: masking happens downstream
    B = images.shape[0]
    T = captions.shape[1]

    # ---- encoder -----------------------------------------------------------
    v = patchify(images)                                   # (B, hw, 3072) f32
    v_mean = jnp.mean(v, axis=1).astype(jnp.bfloat16)      # (B, 3072) bf16
    h_enc, c_enc = encoder_forward(v_mean, params["w_enc"], params["b12"])
    Hd = h_enc.shape[1]

    # ---- decoder -----------------------------------------------------------
    emb = jax.nn.relu(jnp.take(params["embed"], captions, axis=0))  # (B,T,E)
    x_tm = jnp.transpose(emb, (1, 0, 2)).reshape(T * B, emb.shape[-1])
    x_tm = x_tm.astype(jnp.bfloat16)

    # batched layer-0 input-gate precompute: one big MXU-friendly matmul
    gates_x0 = linear_tiled(x_tm, params["l0_wih"], params["l0_b"])
    gates_x0 = gates_x0.reshape(T, B, 4 * Hd)

    hid = lstm2(gates_x0, h_enc, c_enc, params["l0_whh"],
                params["l1_w"], params["l1_b"])            # (T, B, H) bf16

    # output projection; pad vocab to a lane-dense multiple of the N tile
    w_mlp, b_mlp = params["w_mlp"], params["b_mlp"]
    V = w_mlp.shape[1]
    pad = (-V) % 512
    if pad:
        w_mlp = jnp.pad(w_mlp, ((0, 0), (0, pad)))
        b_mlp = jnp.pad(b_mlp, ((0, 0), (0, pad)))
    logits = linear_tiled(hid.reshape(T * B, Hd), w_mlp, b_mlp)
    logits = logits[:, :V]
    return jnp.transpose(logits.reshape(T, B, V), (1, 0, 2))   # (B, T, V)


# ----------------------------------------------------------------------------
# Deterministic parameter construction (bf16 matmul weights, f32 biases)
# ----------------------------------------------------------------------------
def make_params(key, *, vocab, embed, hidden, feat_in, feat_out):
    ks = jax.random.split(key, 16)
    u = lambda k, s, a: jax.random.uniform(k, s, jnp.float32, -a, a)
    s_f = feat_out ** -0.5
    s_h = hidden ** -0.5

    # stand-in CNN (stride-32 patch projection to 2048 channels), then the
    # two encoder heads (linear1 | linear2); both are linear so they fold
    # exactly into one (3072, 2H) weight (fold done in f32, cast once).
    w_feat = jax.random.normal(ks[0], (feat_in, feat_out), jnp.float32) * 0.02
    w1 = u(ks[1], (feat_out, hidden), s_f)
    b1 = u(ks[2], (1, hidden), s_f)
    w2 = u(ks[3], (feat_out, hidden), s_f)
    b2 = u(ks[4], (1, hidden), s_f)
    w12 = jnp.concatenate([w1, w2], axis=1)                 # (2048, 2H)
    w_enc = jnp.dot(w_feat, w12).astype(jnp.bfloat16)       # (3072, 2H)

    # 2-layer LSTM, weights stored transposed: (in, 4H) / (H, 4H);
    # layer-1 input/hidden weights pre-concatenated for the fused matmul.
    l1_wih = u(ks[10], (hidden, 4 * hidden), s_h)
    l1_whh = u(ks[11], (hidden, 4 * hidden), s_h)

    return {
        "w_enc": w_enc,
        "b12": jnp.concatenate([b1, b2], axis=1),
        # decoder embedding (uniform(-0.1, 0.1) as in __init__)
        "embed": jax.random.uniform(ks[5], (vocab, embed), jnp.float32,
                                    -0.1, 0.1),
        "l0_wih": u(ks[6], (embed, 4 * hidden), s_h).astype(jnp.bfloat16),
        "l0_whh": u(ks[7], (hidden, 4 * hidden), s_h).astype(jnp.bfloat16),
        "l0_b": (u(ks[8], (1, 4 * hidden), s_h)
                 + u(ks[9], (1, 4 * hidden), s_h)),          # b_ih + b_hh
        "l1_w": jnp.concatenate([l1_wih, l1_whh], axis=0).astype(jnp.bfloat16),
        "l1_b": (u(ks[12], (1, 4 * hidden), s_h)
                 + u(ks[13], (1, 4 * hidden), s_h)),
        # output projection Linear(hidden, vocab)
        "w_mlp": u(ks[14], (hidden, vocab), s_h).astype(jnp.bfloat16),
        "b_mlp": u(ks[15], (1, vocab), s_h),
    }


if __name__ == "__main__":
    # small, lane-aligned config consistent with the module
    VOCAB, EMBED, HIDDEN = 256, 128, 128
    B, T, CROP = 4, 8, 64
    FEAT_IN, FEAT_OUT = 3 * 32 * 32, 2048

    key = jax.random.PRNGKey(0)
    k_img, k_cap, k_par = jax.random.split(key, 3)

    images = jax.random.normal(k_img, (B, 3, CROP, CROP), jnp.float32)
    captions = jax.random.randint(k_cap, (B, T), 0, VOCAB, jnp.int32)
    lengths = jnp.full((B,), T, jnp.int32)

    params = make_params(k_par, vocab=VOCAB, embed=EMBED, hidden=HIDDEN,
                         feat_in=FEAT_IN, feat_out=FEAT_OUT)

    fwd = jax.jit(glo_forward)
    out = jax.block_until_ready(fwd(images, captions, lengths, params))
    assert out.shape == (B, T, VOCAB), out.shape
    assert bool(jnp.all(jnp.isfinite(out)))
    print("KERNEL_OK")
</pallas_src>

<mosaic_0001>
module attributes {stable_mosaic.version = 11 : i64} {
  func.func @encoder_kernel(%arg0: memref<4x3072xbf16, #tpu.memory_space<vmem>>, %arg1: memref<3072x256xbf16, #tpu.memory_space<vmem>>, %arg2: memref<1x256xf32, #tpu.memory_space<vmem>>, %arg3: memref<4x128xf32, #tpu.memory_space<vmem>>, %arg4: memref<4x128xf32, #tpu.memory_space<vmem>>) attributes {dimension_semantics = [], scalar_prefetch = 0 : i64, scratch_operands = 0 : i64, tpu.core_type = #tpu.core_type<tc>} {
    %c0 = arith.constant 0 : index
    %c0_0 = arith.constant 0 : index
    %0 = vector.load %arg0[%c0, %c0_0] : memref<4x3072xbf16, #tpu.memory_space<vmem>>, vector<4x3072xbf16>
    %c0_1 = arith.constant 0 : index
    %c0_2 = arith.constant 0 : index
    %1 = vector.load %arg1[%c0_1, %c0_2] : memref<3072x256xbf16, #tpu.memory_space<vmem>>, vector<3072x256xbf16>
    %cst = arith.constant dense<0.000000e+00> : vector<4x256xf32>
    %2 = tpu.matmul %0, %1, %cst {dimension_numbers = #tpu.dot_dimension_numbers<[1], [0], [0], [1], [0, 0, 1, 1], [], []>} : vector<4x3072xbf16>, vector<3072x256xbf16>, vector<4x256xf32> -> vector<4x256xf32>
    %c0_3 = arith.constant 0 : index
    %c0_4 = arith.constant 0 : index
    %3 = vector.load %arg2[%c0_3, %c0_4] : memref<1x256xf32, #tpu.memory_space<vmem>>, vector<1x256xf32>
    %4 = vector.broadcast %3 : vector<1x256xf32> to vector<4x256xf32>
    %5 = arith.addf %2, %4 : vector<4x256xf32>
    %cst_5 = arith.constant 0.000000e+00 : f32
    %6 = vector.broadcast %cst_5 : f32 to vector<4x256xf32>
    %7 = arith.maximumf %5, %6 : vector<4x256xf32>
    %8 = vector.extract_strided_slice %7 {offsets = [0, 0], sizes = [4, 128], strides = [1, 1]} : vector<4x256xf32> to vector<4x128xf32>
    %c0_6 = arith.constant 0 : index
    %c0_7 = arith.constant 0 : index
    %9 = vector.load %arg3[%c0_6, %c0_7] : memref<4x128xf32, #tpu.memory_space<vmem>>, vector<4x128xf32>
    tpu.vector_store %arg3[%c0_6, %c0_7], %8 {strides = array<i32>} : memref<4x128xf32, #tpu.memory_space<vmem>>, vector<4x128xf32>,
    %10 = vector.extract_strided_slice %7 {offsets = [0, 128], sizes = [4, 128], strides = [1, 1]} : vector<4x256xf32> to vector<4x128xf32>
    %c0_8 = arith.constant 0 : index
    %c0_9 = arith.constant 0 : index
    %11 = vector.load %arg4[%c0_8, %c0_9] : memref<4x128xf32, #tpu.memory_space<vmem>>, vector<4x128xf32>
    tpu.vector_store %arg4[%c0_8, %c0_9], %10 {strides = array<i32>} : memref<4x128xf32, #tpu.memory_space<vmem>>, vector<4x128xf32>,
    return
  }
}

module attributes {stable_mosaic.version = 11 : i64} {
  func.func @linear_kernel(%arg0: i32, %arg1: i32, %arg2: memref<32x128xbf16, #tpu.memory_space<vmem>>, %arg3: memref<128x512xbf16, #tpu.memory_space<vmem>>, %arg4: memref<1x512xf32, #tpu.memory_space<vmem>>, %arg5: memref<32x512xf32, #tpu.memory_space<vmem>>) attributes {dimension_semantics = [#tpu.dimension_semantics<parallel>, #tpu.dimension_semantics<parallel>], iteration_bounds = array<i64: 1, 1>, scalar_prefetch = 0 : i64, scratch_operands = 0 : i64, tpu.core_type = #tpu.core_type<tc>, window_params = [{transform_indices = @transform_0, window_bounds = array<i64: 32, 128>}, {transform_indices = @transform_1, window_bounds = array<i64: 128, 512>}, {transform_indices = @transform_2, window_bounds = array<i64: 1, 512>}, {transform_indices = @transform_3, window_bounds = array<i64: 32, 512>}]} {
    %c0 = arith.constant 0 : index
    %c0_0 = arith.constant 0 : index
    %0 = vector.load %arg2[%c0, %c0_0] : memref<32x128xbf16, #tpu.memory_space<vmem>>, vector<32x128xbf16>
    %c0_1 = arith.constant 0 : index
    %c0_2 = arith.constant 0 : index
    %1 = vector.load %arg3[%c0_1, %c0_2] : memref<128x512xbf16, #tpu.memory_space<vmem>>, vector<128x512xbf16>
    %cst = arith.constant dense<0.000000e+00> : vector<32x512xf32>
    %2 = tpu.matmul %0, %1, %cst {dimension_numbers = #tpu.dot_dimension_numbers<[1], [0], [0], [1], [0, 0, 1, 1], [], []>} : vector<32x128xbf16>, vector<128x512xbf16>, vector<32x512xf32> -> vector<32x512xf32>
    %c0_3 = arith.constant 0 : index
    %c0_4 = arith.constant 0 : index
    %3 = vector.load %arg4[%c0_3, %c0_4] : memref<1x512xf32, #tpu.memory_space<vmem>>, vector<1x512xf32>
    %4 = vector.broadcast %3 : vector<1x512xf32> to vector<32x512xf32>
    %5 = arith.addf %2, %4 : vector<32x512xf32>
    %c0_5 = arith.constant 0 : index
    %c0_6 = arith.constant 0 : index
    %6 = vector.load %arg5[%c0_5, %c0_6] : memref<32x512xf32, #tpu.memory_space<vmem>>, vector<32x512xf32>
    tpu.vector_store %arg5[%c0_5, %c0_6], %5 {strides = array<i32>} : memref<32x512xf32, #tpu.memory_space<vmem>>, vector<32x512xf32>,
    return
  }
  func.func @transform_0(%arg0: i32, %arg1: i32) -> (i32, i32) {
    %c0_i32 = arith.constant 0 : i32
    %c0_i32_0 = arith.constant 0 : i32
    return %arg0, %c0_i32 : i32, i32
  }
  func.func @transform_1(%arg0: i32, %arg1: i32) -> (i32, i32) {
    %c0_i32 = arith.constant 0 : i32
    %c0_i32_0 = arith.constant 0 : i32
    return %c0_i32, %arg1 : i32, i32
  }
  func.func @transform_2(%arg0: i32, %arg1: i32) -> (i32, i32) {
    %c0_i32 = arith.constant 0 : i32
    %c0_i32_0 = arith.constant 0 : i32
    return %c0_i32, %arg1 : i32, i32
  }
  func.func @transform_3(%arg0: i32, %arg1: i32) -> (i32, i32) {
    %c0_i32 = arith.constant 0 : i32
    return %arg0, %arg1 : i32, i32
  }
}

module attributes {stable_mosaic.version = 11 : i64} {
  func.func @lstm2_kernel(%arg0: memref<8x4x512xf32, #tpu.memory_space<vmem>>, %arg1: memref<4x128xf32, #tpu.memory_space<vmem>>, %arg2: memref<4x128xf32, #tpu.memory_space<vmem>>, %arg3: memref<128x512xbf16, #tpu.memory_space<vmem>>, %arg4: memref<256x512xbf16, #tpu.memory_space<vmem>>, %arg5: memref<1x512xf32, #tpu.memory_space<vmem>>, %arg6: memref<8x4x128xbf16, #tpu.memory_space<vmem>>) attributes {dimension_semantics = [], scalar_prefetch = 0 : i64, scratch_operands = 0 : i64, tpu.core_type = #tpu.core_type<tc>} {
    %c0 = arith.constant 0 : index
    %c0_0 = arith.constant 0 : index
    %0 = vector.load %arg3[%c0, %c0_0] : memref<128x512xbf16, #tpu.memory_space<vmem>>, vector<128x512xbf16>
    %c0_1 = arith.constant 0 : index
    %c0_2 = arith.constant 0 : index
    %1 = vector.load %arg4[%c0_1, %c0_2] : memref<256x512xbf16, #tpu.memory_space<vmem>>, vector<256x512xbf16>
    %c0_3 = arith.constant 0 : index
    %c0_4 = arith.constant 0 : index
    %2 = vector.load %arg5[%c0_3, %c0_4] : memref<1x512xf32, #tpu.memory_space<vmem>>, vector<1x512xf32>
    %cst = arith.constant 0.000000e+00 : f32
    %3 = vector.broadcast %cst : f32 to vector<4x128xf32>
    %c0_5 = arith.constant 0 : index
    %c0_6 = arith.constant 0 : index
    %4 = vector.load %arg1[%c0_5, %c0_6] : memref<4x128xf32, #tpu.memory_space<vmem>>, vector<4x128xf32>
    %c0_7 = arith.constant 0 : index
    %c0_8 = arith.constant 0 : index
    %5 = vector.load %arg2[%c0_7, %c0_8] : memref<4x128xf32, #tpu.memory_space<vmem>>, vector<4x128xf32>
    %c0_i32 = arith.constant 0 : i32
    %6 = arith.index_cast %c0_i32 : i32 to index
    %c0_9 = arith.constant 0 : index
    %c0_10 = arith.constant 0 : index
    %7 = vector.load %arg0[%6, %c0_9, %c0_10] : memref<8x4x512xf32, #tpu.memory_space<vmem>>, vector<1x4x512xf32>
    %8 = vector.shape_cast %7 : vector<1x4x512xf32> to vector<4x512xf32>
    %9 = arith.truncf %3 : vector<4x128xf32> to vector<4x128xbf16>
    %cst_11 = arith.constant dense<0.000000e+00> : vector<4x512xf32>
    %10 = tpu.matmul %9, %0, %cst_11 {dimension_numbers = #tpu.dot_dimension_numbers<[1], [0], [0], [1], [0, 0, 1, 1], [], []>} : vector<4x128xbf16>, vector<128x512xbf16>, vector<4x512xf32> -> vector<4x512xf32>
    %11 = arith.addf %8, %10 : vector<4x512xf32>
    %12 = vector.extract_strided_slice %11 {offsets = [0, 0], sizes = [4, 128], strides = [1, 1]} : vector<4x512xf32> to vector<4x128xf32>
    %13 = arith.negf %12 : vector<4x128xf32>
    %14 = math.exp %13 : vector<4x128xf32>
    %cst_12 = arith.constant 1.000000e+00 : f32
    %15 = vector.broadcast %cst_12 : f32 to vector<4x128xf32>
    %16 = arith.addf %15, %14 : vector<4x128xf32>
    %17 = arith.divf %15, %16 : vector<4x128xf32>
    %18 = vector.extract_strided_slice %11 {offsets = [0, 128], sizes = [4, 128], strides = [1, 1]} : vector<4x512xf32> to vector<4x128xf32>
    %19 = arith.negf %18 : vector<4x128xf32>
    %20 = math.exp %19 : vector<4x128xf32>
    %cst_13 = arith.constant 1.000000e+00 : f32
    %21 = vector.broadcast %cst_13 : f32 to vector<4x128xf32>
    %22 = arith.addf %21, %20 : vector<4x128xf32>
    %23 = arith.divf %21, %22 : vector<4x128xf32>
    %24 = vector.extract_strided_slice %11 {offsets = [0, 256], sizes = [4, 128], strides = [1, 1]} : vector<4x512xf32> to vector<4x128xf32>
    %25 = math.tanh %24 : vector<4x128xf32>
    %26 = vector.extract_strided_slice %11 {offsets = [0, 384], sizes = [4, 128], strides = [1, 1]} : vector<4x512xf32> to vector<4x128xf32>
    %27 = arith.negf %26 : vector<4x128xf32>
    %28 = math.exp %27 : vector<4x128xf32>
    %cst_14 = arith.constant 1.000000e+00 : f32
    %29 = vector.broadcast %cst_14 : f32 to vector<4x128xf32>
    %30 = arith.addf %29, %28 : vector<4x128xf32>
    %31 = arith.divf %29, %30 : vector<4x128xf32>
    %32 = arith.mulf %23, %3 : vector<4x128xf32>
    %33 = arith.mulf %17, %25 : vector<4x128xf32>
    %34 = arith.addf %32, %33 : vector<4x128xf32>
    %35 = math.tanh %34 : vector<4x128xf32>
    %36 = arith.mulf %31, %35 : vector<4x128xf32>
    %37 = arith.truncf %36 : vector<4x128xf32> to vector<4x128xbf16>
    %38 = arith.truncf %4 : vector<4x128xf32> to vector<4x128xbf16>
    %39 = tpu.concatenate %37, %38 in 1 : vector<4x128xbf16>, vector<4x128xbf16> -> vector<4x256xbf16>
    %cst_15 = arith.constant dense<0.000000e+00> : vector<4x512xf32>
    %40 = tpu.matmul %39, %1, %cst_15 {dimension_numbers = #tpu.dot_dimension_numbers<[1], [0], [0], [1], [0, 0, 1, 1], [], []>} : vector<4x256xbf16>, vector<256x512xbf16>, vector<4x512xf32> -> vector<4x512xf32>
    %41 = vector.broadcast %2 : vector<1x512xf32> to vector<4x512xf32>
    %42 = arith.addf %40, %41 : vector<4x512xf32>
    %43 = vector.extract_strided_slice %42 {offsets = [0, 0], sizes = [4, 128], strides = [1, 1]} : vector<4x512xf32> to vector<4x128xf32>
    %44 = arith.negf %43 : vector<4x128xf32>
    %45 = math.exp %44 : vector<4x128xf32>
    %cst_16 = arith.constant 1.000000e+00 : f32
    %46 = vector.broadcast %cst_16 : f32 to vector<4x128xf32>
    %47 = arith.addf %46, %45 : vector<4x128xf32>
    %48 = arith.divf %46, %47 : vector<4x128xf32>
    %49 = vector.extract_strided_slice %42 {offsets = [0, 128], sizes = [4, 128], strides = [1, 1]} : vector<4x512xf32> to vector<4x128xf32>
    %50 = arith.negf %49 : vector<4x128xf32>
    %51 = math.exp %50 : vector<4x128xf32>
    %cst_17 = arith.constant 1.000000e+00 : f32
    %52 = vector.broadcast %cst_17 : f32 to vector<4x128xf32>
    %53 = arith.addf %52, %51 : vector<4x128xf32>
    %54 = arith.divf %52, %53 : vector<4x128xf32>
    %55 = vector.extract_strided_slice %42 {offsets = [0, 256], sizes = [4, 128], strides = [1, 1]} : vector<4x512xf32> to vector<4x128xf32>
    %56 = math.tanh %55 : vector<4x128xf32>
    %57 = vector.extract_strided_slice %42 {offsets = [0, 384], sizes = [4, 128], strides = [1, 1]} : vector<4x512xf32> to vector<4x128xf32>
    %58 = arith.negf %57 : vector<4x128xf32>
    %59 = math.exp %58 : vector<4x128xf32>
    %cst_18 = arith.constant 1.000000e+00 : f32
    %60 = vector.broadcast %cst_18 : f32 to vector<4x128xf32>
    %61 = arith.addf %60, %59 : vector<4x128xf32>
    %62 = arith.divf %60, %61 : vector<4x128xf32>
    %63 = arith.mulf %54, %5 : vector<4x128xf32>
    %64 = arith.mulf %48, %56 : vector<4x128xf32>
    %65 = arith.addf %63, %64 : vector<4x128xf32>
    %66 = math.tanh %65 : vector<4x128xf32>
    %67 = arith.mulf %62, %66 : vector<4x128xf32>
    %68 = arith.truncf %67 : vector<4x128xf32> to vector<4x128xbf16>
    %69 = arith.index_cast %c0_i32 : i32 to index
    %c0_19 = arith.constant 0 : index
    %c0_20 = arith.constant 0 : index
    %70 = vector.load %arg6[%69, %c0_19, %c0_20] : memref<8x4x128xbf16, #tpu.memory_space<vmem>>, vector<1x4x128xbf16>
    %71 = vector.shape_cast %70 : vector<1x4x128xbf16> to vector<4x128xbf16>
    %72 = vector.shape_cast %68 : vector<4x128xbf16> to vector<1x4x128xbf16>
    tpu.vector_store %arg6[%69, %c0_19, %c0_20], %72 {strides = array<i32>} : memref<8x4x128xbf16, #tpu.memory_space<vmem>>, vector<1x4x128xbf16>,
    %c1_i32 = arith.constant 1 : i32
    %73 = arith.index_cast %c1_i32 : i32 to index
    %c0_21 = arith.constant 0 : index
    %c0_22 = arith.constant 0 : index
    %74 = vector.load %arg0[%73, %c0_21, %c0_22] : memref<8x4x512xf32, #tpu.memory_space<vmem>>, vector<1x4x512xf32>
    %75 = vector.shape_cast %74 : vector<1x4x512xf32> to vector<4x512xf32>
    %76 = arith.truncf %36 : vector<4x128xf32> to vector<4x128xbf16>
    %cst_23 = arith.constant dense<0.000000e+00> : vector<4x512xf32>
    %77 = tpu.matmul %76, %0, %cst_23 {dimension_numbers = #tpu.dot_dimension_numbers<[1], [0], [0], [1], [0, 0, 1, 1], [], []>} : vector<4x128xbf16>, vector<128x512xbf16>, vector<4x512xf32> -> vector<4x512xf32>
    %78 = arith.addf %75, %77 : vector<4x512xf32>
    %79 = vector.extract_strided_slice %78 {offsets = [0, 0], sizes = [4, 128], strides = [1, 1]} : vector<4x512xf32> to vector<4x128xf32>
    %80 = arith.negf %79 : vector<4x128xf32>
    %81 = math.exp %80 : vector<4x128xf32>
    %cst_24 = arith.constant 1.000000e+00 : f32
    %82 = vector.broadcast %cst_24 : f32 to vector<4x128xf32>
    %83 = arith.addf %82, %81 : vector<4x128xf32>
    %84 = arith.divf %82, %83 : vector<4x128xf32>
    %85 = vector.extract_strided_slice %78 {offsets = [0, 128], sizes = [4, 128], strides = [1, 1]} : vector<4x512xf32> to vector<4x128xf32>
    %86 = arith.negf %85 : vector<4x128xf32>
    %87 = math.exp %86 : vector<4x128xf32>
    %cst_25 = arith.constant 1.000000e+00 : f32
    %88 = vector.broadcast %cst_25 : f32 to vector<4x128xf32>
    %89 = arith.addf %88, %87 : vector<4x128xf32>
    %90 = arith.divf %88, %89 : vector<4x128xf32>
    %91 = vector.extract_strided_slice %78 {offsets = [0, 256], sizes = [4, 128], strides = [1, 1]} : vector<4x512xf32> to vector<4x128xf32>
    %92 = math.tanh %91 : vector<4x128xf32>
    %93 = vector.extract_strided_slice %78 {offsets = [0, 384], sizes = [4, 128], strides = [1, 1]} : vector<4x512xf32> to vector<4x128xf32>
    %94 = arith.negf %93 : vector<4x128xf32>
    %95 = math.exp %94 : vector<4x128xf32>
    %cst_26 = arith.constant 1.000000e+00 : f32
    %96 = vector.broadcast %cst_26 : f32 to vector<4x128xf32>
    %97 = arith.addf %96, %95 : vector<4x128xf32>
    %98 = arith.divf %96, %97 : vector<4x128xf32>
    %99 = arith.mulf %90, %34 : vector<4x128xf32>
    %100 = arith.mulf %84, %92 : vector<4x128xf32>
    %101 = arith.addf %99, %100 : vector<4x128xf32>
    %102 = math.tanh %101 : vector<4x128xf32>
    %103 = arith.mulf %98, %102 : vector<4x128xf32>
    %104 = arith.truncf %103 : vector<4x128xf32> to vector<4x128xbf16>
    %105 = arith.truncf %67 : vector<4x128xf32> to vector<4x128xbf16>
    %106 = tpu.concatenate %104, %105 in 1 : vector<4x128xbf16>, vector<4x128xbf16> -> vector<4x256xbf16>
    %cst_27 = arith.constant dense<0.000000e+00> : vector<4x512xf32>
    %107 = tpu.matmul %106, %1, %cst_27 {dimension_numbers = #tpu.dot_dimension_numbers<[1], [0], [0], [1], [0, 0, 1, 1], [], []>} : vector<4x256xbf16>, vector<256x512xbf16>, vector<4x512xf32> -> vector<4x512xf32>
    %108 = vector.broadcast %2 : vector<1x512xf32> to vector<4x512xf32>
    %109 = arith.addf %107, %108 : vector<4x512xf32>
    %110 = vector.extract_strided_slice %109 {offsets = [0, 0], sizes = [4, 128], strides = [1, 1]} : vector<4x512xf32> to vector<4x128xf32>
    %111 = arith.negf %110 : vector<4x128xf32>
    %112 = math.exp %111 : vector<4x128xf32>
    %cst_28 = arith.constant 1.000000e+00 : f32
    %113 = vector.broadcast %cst_28 : f32 to vector<4x128xf32>
    %114 = arith.addf %113, %112 : vector<4x128xf32>
    %115 = arith.divf %113, %114 : vector<4x128xf32>
    %116 = vector.extract_strided_slice %109 {offsets = [0, 128], sizes = [4, 128], strides = [1, 1]} : vector<4x512xf32> to vector<4x128xf32>
    %117 = arith.negf %116 : vector<4x128xf32>
    %118 = math.exp %117 : vector<4x128xf32>
    %cst_29 = arith.constant 1.000000e+00 : f32
    %119 = vector.broadcast %cst_29 : f32 to vector<4x128xf32>
    %120 = arith.addf %119, %118 : vector<4x128xf32>
    %121 = arith.divf %119, %120 : vector<4x128xf32>
    %122 = vector.extract_strided_slice %109 {offsets = [0, 256], sizes = [4, 128], strides = [1, 1]} : vector<4x512xf32> to vector<4x128xf32>
    %123 = math.tanh %122 : vector<4x128xf32>
    %124 = vector.extract_strided_slice %109 {offsets = [0, 384], sizes = [4, 128], strides = [1, 1]} : vector<4x512xf32> to vector<4x128xf32>
    %125 = arith.negf %124 : vector<4x128xf32>
    %126 = math.exp %125 : vector<4x128xf32>
    %cst_30 = arith.constant 1.000000e+00 : f32
    %127 = vector.broadcast %cst_30 : f32 to vector<4x128xf32>
    %128 = arith.addf %127, %126 : vector<4x128xf32>
    %129 = arith.divf %127, %128 : vector<4x128xf32>
    %130 = arith.mulf %121, %65 : vector<4x128xf32>
    %131 = arith.mulf %115, %123 : vector<4x128xf32>
    %132 = arith.addf %130, %131 : vector<4x128xf32>
    %133 = math.tanh %132 : vector<4x128xf32>
    %134 = arith.mulf %129, %133 : vector<4x128xf32>
    %135 = arith.truncf %134 : vector<4x128xf32> to vector<4x128xbf16>
    %136 = arith.index_cast %c1_i32 : i32 to index
    %c0_31 = arith.constant 0 : index
    %c0_32 = arith.constant 0 : index
    %137 = vector.load %arg6[%136, %c0_31, %c0_32] : memref<8x4x128xbf16, #tpu.memory_space<vmem>>, vector<1x4x128xbf16>
    %138 = vector.shape_cast %137 : vector<1x4x128xbf16> to vector<4x128xbf16>
    %139 = vector.shape_cast %135 : vector<4x128xbf16> to vector<1x4x128xbf16>
    tpu.vector_store %arg6[%136, %c0_31, %c0_32], %139 {strides = array<i32>} : memref<8x4x128xbf16, #tpu.memory_space<vmem>>, vector<1x4x128xbf16>,
    %c2_i32 = arith.constant 2 : i32
    %140 = arith.index_cast %c2_i32 : i32 to index
    %c0_33 = arith.constant 0 : index
    %c0_34 = arith.constant 0 : index
    %141 = vector.load %arg0[%140, %c0_33, %c0_34] : memref<8x4x512xf32, #tpu.memory_space<vmem>>, vector<1x4x512xf32>
    %142 = vector.shape_cast %141 : vector<1x4x512xf32> to vector<4x512xf32>
    %143 = arith.truncf %103 : vector<4x128xf32> to vector<4x128xbf16>
    %cst_35 = arith.constant dense<0.000000e+00> : vector<4x512xf32>
    %144 = tpu.matmul %143, %0, %cst_35 {dimension_numbers = #tpu.dot_dimension_numbers<[1], [0], [0], [1], [0, 0, 1, 1], [], []>} : vector<4x128xbf16>, vector<128x512xbf16>, vector<4x512xf32> -> vector<4x512xf32>
    %145 = arith.addf %142, %144 : vector<4x512xf32>
    %146 = vector.extract_strided_slice %145 {offsets = [0, 0], sizes = [4, 128], strides = [1, 1]} : vector<4x512xf32> to vector<4x128xf32>
    %147 = arith.negf %146 : vector<4x128xf32>
    %148 = math.exp %147 : vector<4x128xf32>
    %cst_36 = arith.constant 1.000000e+00 : f32
    %149 = vector.broadcast %cst_36 : f32 to vector<4x128xf32>
    %150 = arith.addf %149, %148 : vector<4x128xf32>
    %151 = arith.divf %149, %150 : vector<4x128xf32>
    %152 = vector.extract_strided_slice %145 {offsets = [0, 128], sizes = [4, 128], strides = [1, 1]} : vector<4x512xf32> to vector<4x128xf32>
    %153 = arith.negf %152 : vector<4x128xf32>
    %154 = math.exp %153 : vector<4x128xf32>
    %cst_37 = arith.constant 1.000000e+00 : f32
    %155 = vector.broadcast %cst_37 : f32 to vector<4x128xf32>
    %156 = arith.addf %155, %154 : vector<4x128xf32>
    %157 = arith.divf %155, %156 : vector<4x128xf32>
    %158 = vector.extract_strided_slice %145 {offsets = [0, 256], sizes = [4, 128], strides = [1, 1]} : vector<4x512xf32> to vector<4x128xf32>
    %159 = math.tanh %158 : vector<4x128xf32>
    %160 = vector.extract_strided_slice %145 {offsets = [0, 384], sizes = [4, 128], strides = [1, 1]} : vector<4x512xf32> to vector<4x128xf32>
    %161 = arith.negf %160 : vector<4x128xf32>
    %162 = math.exp %161 : vector<4x128xf32>
    %cst_38 = arith.constant 1.000000e+00 : f32
    %163 = vector.broadcast %cst_38 : f32 to vector<4x128xf32>
    %164 = arith.addf %163, %162 : vector<4x128xf32>
    %165 = arith.divf %163, %164 : vector<4x128xf32>
    %166 = arith.mulf %157, %101 : vector<4x128xf32>
    %167 = arith.mulf %151, %159 : vector<4x128xf32>
    %168 = arith.addf %166, %167 : vector<4x128xf32>
    %169 = math.tanh %168 : vector<4x128xf32>
    %170 = arith.mulf %165, %169 : vector<4x128xf32>
    %171 = arith.truncf %170 : vector<4x128xf32> to vector<4x128xbf16>
    %172 = arith.truncf %134 : vector<4x128xf32> to vector<4x128xbf16>
    %173 = tpu.concatenate %171, %172 in 1 : vector<4x128xbf16>, vector<4x128xbf16> -> vector<4x256xbf16>
    %cst_39 = arith.constant dense<0.000000e+00> : vector<4x512xf32>
    %174 = tpu.matmul %173, %1, %cst_39 {dimension_numbers = #tpu.dot_dimension_numbers<[1], [0], [0], [1], [0, 0, 1, 1], [], []>} : vector<4x256xbf16>, vector<256x512xbf16>, vector<4x512xf32> -> vector<4x512xf32>
    %175 = vector.broadcast %2 : vector<1x512xf32> to vector<4x512xf32>
    %176 = arith.addf %174, %175 : vector<4x512xf32>
    %177 = vector.extract_strided_slice %176 {offsets = [0, 0], sizes = [4, 128], strides = [1, 1]} : vector<4x512xf32> to vector<4x128xf32>
    %178 = arith.negf %177 : vector<4x128xf32>
    %179 = math.exp %178 : vector<4x128xf32>
    %cst_40 = arith.constant 1.000000e+00 : f32
    %180 = vector.broadcast %cst_40 : f32 to vector<4x128xf32>
    %181 = arith.addf %180, %179 : vector<4x128xf32>
    %182 = arith.divf %180, %181 : vector<4x128xf32>
    %183 = vector.extract_strided_slice %176 {offsets = [0, 128], sizes = [4, 128], strides = [1, 1]} : vector<4x512xf32> to vector<4x128xf32>
    %184 = arith.negf %183 : vector<4x128xf32>
    %185 = math.exp %184 : vector<4x128xf32>
    %cst_41 = arith.constant 1.000000e+00 : f32
    %186 = vector.broadcast %cst_41 : f32 to vector<4x128xf32>
    %187 = arith.addf %186, %185 : vector<4x128xf32>
    %188 = arith.divf %186, %187 : vector<4x128xf32>
    %189 = vector.extract_strided_slice %176 {offsets = [0, 256], sizes = [4, 128], strides = [1, 1]} : vector<4x512xf32> to vector<4x128xf32>
    %190 = math.tanh %189 : vector<4x128xf32>
    %191 = vector.extract_strided_slice %176 {offsets = [0, 384], sizes = [4, 128], strides = [1, 1]} : vector<4x512xf32> to vector<4x128xf32>
    %192 = arith.negf %191 : vector<4x128xf32>
    %193 = math.exp %192 : vector<4x128xf32>
    %cst_42 = arith.constant 1.000000e+00 : f32
    %194 = vector.broadcast %cst_42 : f32 to vector<4x128xf32>
    %195 = arith.addf %194, %193 : vector<4x128xf32>
    %196 = arith.divf %194, %195 : vector<4x128xf32>
    %197 = arith.mulf %188, %132 : vector<4x128xf32>
    %198 = arith.mulf %182, %190 : vector<4x128xf32>
    %199 = arith.addf %197, %198 : vector<4x128xf32>
    %200 = math.tanh %199 : vector<4x128xf32>
    %201 = arith.mulf %196, %200 : vector<4x128xf32>
    %202 = arith.truncf %201 : vector<4x128xf32> to vector<4x128xbf16>
    %203 = arith.index_cast %c2_i32 : i32 to index
    %c0_43 = arith.constant 0 : index
    %c0_44 = arith.constant 0 : index
    %204 = vector.load %arg6[%203, %c0_43, %c0_44] : memref<8x4x128xbf16, #tpu.memory_space<vmem>>, vector<1x4x128xbf16>
    %205 = vector.shape_cast %204 : vector<1x4x128xbf16> to vector<4x128xbf16>
    %206 = vector.shape_cast %202 : vector<4x128xbf16> to vector<1x4x128xbf16>
    tpu.vector_store %arg6[%203, %c0_43, %c0_44], %206 {strides = array<i32>} : memref<8x4x128xbf16, #tpu.memory_space<vmem>>, vector<1x4x128xbf16>,
    %c3_i32 = arith.constant 3 : i32
    %207 = arith.index_cast %c3_i32 : i32 to index
    %c0_45 = arith.constant 0 : index
    %c0_46 = arith.constant 0 : index
    %208 = vector.load %arg0[%207, %c0_45, %c0_46] : memref<8x4x512xf32, #tpu.memory_space<vmem>>, vector<1x4x512xf32>
    %209 = vector.shape_cast %208 : vector<1x4x512xf32> to vector<4x512xf32>
    %210 = arith.truncf %170 : vector<4x128xf32> to vector<4x128xbf16>
    %cst_47 = arith.constant dense<0.000000e+00> : vector<4x512xf32>
    %211 = tpu.matmul %210, %0, %cst_47 {dimension_numbers = #tpu.dot_dimension_numbers<[1], [0], [0], [1], [0, 0, 1, 1], [], []>} : vector<4x128xbf16>, vector<128x512xbf16>, vector<4x512xf32> -> vector<4x512xf32>
    %212 = arith.addf %209, %211 : vector<4x512xf32>
    %213 = vector.extract_strided_slice %212 {offsets = [0, 0], sizes = [4, 128], strides = [1, 1]} : vector<4x512xf32> to vector<4x128xf32>
    %214 = arith.negf %213 : vector<4x128xf32>
    %215 = math.exp %214 : vector<4x128xf32>
    %cst_48 = arith.constant 1.000000e+00 : f32
    %216 = vector.broadcast %cst_48 : f32 to vector<4x128xf32>
    %217 = arith.addf %216, %215 : vector<4x128xf32>
    %218 = arith.divf %216, %217 : vector<4x128xf32>
    %219 = vector.extract_strided_slice %212 {offsets = [0, 128], sizes = [4, 128], strides = [1, 1]} : vector<4x512xf32> to vector<4x128xf32>
    %220 = arith.negf %219 : vector<4x128xf32>
    %221 = math.exp %220 : vector<4x128xf32>
    %cst_49 = arith.constant 1.000000e+00 : f32
    %222 = vector.broadcast %cst_49 : f32 to vector<4x128xf32>
    %223 = arith.addf %222, %221 : vector<4x128xf32>
    %224 = arith.divf %222, %223 : vector<4x128xf32>
    %225 = vector.extract_strided_slice %212 {offsets = [0, 256], sizes = [4, 128], strides = [1, 1]} : vector<4x512xf32> to vector<4x128xf32>
    %226 = math.tanh %225 : vector<4x128xf32>
    %227 = vector.extract_strided_slice %212 {offsets = [0, 384], sizes = [4, 128], strides = [1, 1]} : vector<4x512xf32> to vector<4x128xf32>
    %228 = arith.negf %227 : vector<4x128xf32>
    %229 = math.exp %228 : vector<4x128xf32>
    %cst_50 = arith.constant 1.000000e+00 : f32
    %230 = vector.broadcast %cst_50 : f32 to vector<4x128xf32>
    %231 = arith.addf %230, %229 : vector<4x128xf32>
    %232 = arith.divf %230, %231 : vector<4x128xf32>
    %233 = arith.mulf %224, %168 : vector<4x128xf32>
    %234 = arith.mulf %218, %226 : vector<4x128xf32>
    %235 = arith.addf %233, %234 : vector<4x128xf32>
    %236 = math.tanh %235 : vector<4x128xf32>
    %237 = arith.mulf %232, %236 : vector<4x128xf32>
    %238 = arith.truncf %237 : vector<4x128xf32> to vector<4x128xbf16>
    %239 = arith.truncf %201 : vector<4x128xf32> to vector<4x128xbf16>
    %240 = tpu.concatenate %238, %239 in 1 : vector<4x128xbf16>, vector<4x128xbf16> -> vector<4x256xbf16>
    %cst_51 = arith.constant dense<0.000000e+00> : vector<4x512xf32>
    %241 = tpu.matmul %240, %1, %cst_51 {dimension_numbers = #tpu.dot_dimension_numbers<[1], [0], [0], [1], [0, 0, 1, 1], [], []>} : vector<4x256xbf16>, vector<256x512xbf16>, vector<4x512xf32> -> vector<4x512xf32>
    %242 = vector.broadcast %2 : vector<1x512xf32> to vector<4x512xf32>
    %243 = arith.addf %241, %242 : vector<4x512xf32>
    %244 = vector.extract_strided_slice %243 {offsets = [0, 0], sizes = [4, 128], strides = [1, 1]} : vector<4x512xf32> to vector<4x128xf32>
    %245 = arith.negf %244 : vector<4x128xf32>
    %246 = math.exp %245 : vector<4x128xf32>
    %cst_52 = arith.constant 1.000000e+00 : f32
    %247 = vector.broadcast %cst_52 : f32 to vector<4x128xf32>
    %248 = arith.addf %247, %246 : vector<4x128xf32>
    %249 = arith.divf %247, %248 : vector<4x128xf32>
    %250 = vector.extract_strided_slice %243 {offsets = [0, 128], sizes = [4, 128], strides = [1, 1]} : vector<4x512xf32> to vector<4x128xf32>
    %251 = arith.negf %250 : vector<4x128xf32>
    %252 = math.exp %251 : vector<4x128xf32>
    %cst_53 = arith.constant 1.000000e+00 : f32
    %253 = vector.broadcast %cst_53 : f32 to vector<4x128xf32>
    %254 = arith.addf %253, %252 : vector<4x128xf32>
    %255 = arith.divf %253, %254 : vector<4x128xf32>
    %256 = vector.extract_strided_slice %243 {offsets = [0, 256], sizes = [4, 128], strides = [1, 1]} : vector<4x512xf32> to vector<4x128xf32>
    %257 = math.tanh %256 : vector<4x128xf32>
    %258 = vector.extract_strided_slice %243 {offsets = [0, 384], sizes = [4, 128], strides = [1, 1]} : vector<4x512xf32> to vector<4x128xf32>
    %259 = arith.negf %258 : vector<4x128xf32>
    %260 = math.exp %259 : vector<4x128xf32>
    %cst_54 = arith.constant 1.000000e+00 : f32
    %261 = vector.broadcast %cst_54 : f32 to vector<4x128xf32>
    %262 = arith.addf %261, %260 : vector<4x128xf32>
    %263 = arith.divf %261, %262 : vector<4x128xf32>
    %264 = arith.mulf %255, %199 : vector<4x128xf32>
    %265 = arith.mulf %249, %257 : vector<4x128xf32>
    %266 = arith.addf %264, %265 : vector<4x128xf32>
    %267 = math.tanh %266 : vector<4x128xf32>
    %268 = arith.mulf %263, %267 : vector<4x128xf32>
    %269 = arith.truncf %268 : vector<4x128xf32> to vector<4x128xbf16>
    %270 = arith.index_cast %c3_i32 : i32 to index
    %c0_55 = arith.constant 0 : index
    %c0_56 = arith.constant 0 : index
    %271 = vector.load %arg6[%270, %c0_55, %c0_56] : memref<8x4x128xbf16, #tpu.memory_space<vmem>>, vector<1x4x128xbf16>
    %272 = vector.shape_cast %271 : vector<1x4x128xbf16> to vector<4x128xbf16>
    %273 = vector.shape_cast %269 : vector<4x128xbf16> to vector<1x4x128xbf16>
    tpu.vector_store %arg6[%270, %c0_55, %c0_56], %273 {strides = array<i32>} : memref<8x4x128xbf16, #tpu.memory_space<vmem>>, vector<1x4x128xbf16>,
    %c4_i32 = arith.constant 4 : i32
    %274 = arith.index_cast %c4_i32 : i32 to index
    %c0_57 = arith.constant 0 : index
    %c0_58 = arith.constant 0 : index
    %275 = vector.load %arg0[%274, %c0_57, %c0_58] : memref<8x4x512xf32, #tpu.memory_space<vmem>>, vector<1x4x512xf32>
    %276 = vector.shape_cast %275 : vector<1x4x512xf32> to vector<4x512xf32>
    %277 = arith.truncf %237 : vector<4x128xf32> to vector<4x128xbf16>
    %cst_59 = arith.constant dense<0.000000e+00> : vector<4x512xf32>
    %278 = tpu.matmul %277, %0, %cst_59 {dimension_numbers = #tpu.dot_dimension_numbers<[1], [0], [0], [1], [0, 0, 1, 1], [], []>} : vector<4x128xbf16>, vector<128x512xbf16>, vector<4x512xf32> -> vector<4x512xf32>
    %279 = arith.addf %276, %278 : vector<4x512xf32>
    %280 = vector.extract_strided_slice %279 {offsets = [0, 0], sizes = [4, 128], strides = [1, 1]} : vector<4x512xf32> to vector<4x128xf32>
    %281 = arith.negf %280 : vector<4x128xf32>
    %282 = math.exp %281 : vector<4x128xf32>
    %cst_60 = arith.constant 1.000000e+00 : f32
    %283 = vector.broadcast %cst_60 : f32 to vector<4x128xf32>
    %284 = arith.addf %283, %282 : vector<4x128xf32>
    %285 = arith.divf %283, %284 : vector<4x128xf32>
    %286 = vector.extract_strided_slice %279 {offsets = [0, 128], sizes = [4, 128], strides = [1, 1]} : vector<4x512xf32> to vector<4x128xf32>
    %287 = arith.negf %286 : vector<4x128xf32>
    %288 = math.exp %287 : vector<4x128xf32>
    %cst_61 = arith.constant 1.000000e+00 : f32
    %289 = vector.broadcast %cst_61 : f32 to vector<4x128xf32>
    %290 = arith.addf %289, %288 : vector<4x128xf32>
    %291 = arith.divf %289, %290 : vector<4x128xf32>
    %292 = vector.extract_strided_slice %279 {offsets = [0, 256], sizes = [4, 128], strides = [1, 1]} : vector<4x512xf32> to vector<4x128xf32>
    %293 = math.tanh %292 : vector<4x128xf32>
    %294 = vector.extract_strided_slice %279 {offsets = [0, 384], sizes = [4, 128], strides = [1, 1]} : vector<4x512xf32> to vector<4x128xf32>
    %295 = arith.negf %294 : vector<4x128xf32>
    %296 = math.exp %295 : vector<4x128xf32>
    %cst_62 = arith.constant 1.000000e+00 : f32
    %297 = vector.broadcast %cst_62 : f32 to vector<4x128xf32>
    %298 = arith.addf %297, %296 : vector<4x128xf32>
    %299 = arith.divf %297, %298 : vector<4x128xf32>
    %300 = arith.mulf %291, %235 : vector<4x128xf32>
    %301 = arith.mulf %285, %293 : vector<4x128xf32>
    %302 = arith.addf %300, %301 : vector<4x128xf32>
    %303 = math.tanh %302 : vector<4x128xf32>
    %304 = arith.mulf %299, %303 : vector<4x128xf32>
    %305 = arith.truncf %304 : vector<4x128xf32> to vector<4x128xbf16>
    %306 = arith.truncf %268 : vector<4x128xf32> to vector<4x128xbf16>
    %307 = tpu.concatenate %305, %306 in 1 : vector<4x128xbf16>, vector<4x128xbf16> -> vector<4x256xbf16>
    %cst_63 = arith.constant dense<0.000000e+00> : vector<4x512xf32>
    %308 = tpu.matmul %307, %1, %cst_63 {dimension_numbers = #tpu.dot_dimension_numbers<[1], [0], [0], [1], [0, 0, 1, 1], [], []>} : vector<4x256xbf16>, vector<256x512xbf16>, vector<4x512xf32> -> vector<4x512xf32>
    %309 = vector.broadcast %2 : vector<1x512xf32> to vector<4x512xf32>
    %310 = arith.addf %308, %309 : vector<4x512xf32>
    %311 = vector.extract_strided_slice %310 {offsets = [0, 0], sizes = [4, 128], strides = [1, 1]} : vector<4x512xf32> to vector<4x128xf32>
    %312 = arith.negf %311 : vector<4x128xf32>
    %313 = math.exp %312 : vector<4x128xf32>
    %cst_64 = arith.constant 1.000000e+00 : f32
    %314 = vector.broadcast %cst_64 : f32 to vector<4x128xf32>
    %315 = arith.addf %314, %313 : vector<4x128xf32>
    %316 = arith.divf %314, %315 : vector<4x128xf32>
    %317 = vector.extract_strided_slice %310 {offsets = [0, 128], sizes = [4, 128], strides = [1, 1]} : vector<4x512xf32> to vector<4x128xf32>
    %318 = arith.negf %317 : vector<4x128xf32>
    %319 = math.exp %318 : vector<4x128xf32>
    %cst_65 = arith.constant 1.000000e+00 : f32
    %320 = vector.broadcast %cst_65 : f32 to vector<4x128xf32>
    %321 = arith.addf %320, %319 : vector<4x128xf32>
    %322 = arith.divf %320, %321 : vector<4x128xf32>
    %323 = vector.extract_strided_slice %310 {offsets = [0, 256], sizes = [4, 128], strides = [1, 1]} : vector<4x512xf32> to vector<4x128xf32>
    %324 = math.tanh %323 : vector<4x128xf32>
    %325 = vector.extract_strided_slice %310 {offsets = [0, 384], sizes = [4, 128], strides = [1, 1]} : vector<4x512xf32> to vector<4x128xf32>
    %326 = arith.negf %325 : vector<4x128xf32>
    %327 = math.exp %326 : vector<4x128xf32>
    %cst_66 = arith.constant 1.000000e+00 : f32
    %328 = vector.broadcast %cst_66 : f32 to vector<4x128xf32>
    %329 = arith.addf %328, %327 : vector<4x128xf32>
    %330 = arith.divf %328, %329 : vector<4x128xf32>
    %331 = arith.mulf %322, %266 : vector<4x128xf32>
    %332 = arith.mulf %316, %324 : vector<4x128xf32>
    %333 = arith.addf %331, %332 : vector<4x128xf32>
    %334 = math.tanh %333 : vector<4x128xf32>
    %335 = arith.mulf %330, %334 : vector<4x128xf32>
    %336 = arith.truncf %335 : vector<4x128xf32> to vector<4x128xbf16>
    %337 = arith.index_cast %c4_i32 : i32 to index
    %c0_67 = arith.constant 0 : index
    %c0_68 = arith.constant 0 : index
    %338 = vector.load %arg6[%337, %c0_67, %c0_68] : memref<8x4x128xbf16, #tpu.memory_space<vmem>>, vector<1x4x128xbf16>
    %339 = vector.shape_cast %338 : vector<1x4x128xbf16> to vector<4x128xbf16>
    %340 = vector.shape_cast %336 : vector<4x128xbf16> to vector<1x4x128xbf16>
    tpu.vector_store %arg6[%337, %c0_67, %c0_68], %340 {strides = array<i32>} : memref<8x4x128xbf16, #tpu.memory_space<vmem>>, vector<1x4x128xbf16>,
    %c5_i32 = arith.constant 5 : i32
    %341 = arith.index_cast %c5_i32 : i32 to index
    %c0_69 = arith.constant 0 : index
    %c0_70 = arith.constant 0 : index
    %342 = vector.load %arg0[%341, %c0_69, %c0_70] : memref<8x4x512xf32, #tpu.memory_space<vmem>>, vector<1x4x512xf32>
    %343 = vector.shape_cast %342 : vector<1x4x512xf32> to vector<4x512xf32>
    %344 = arith.truncf %304 : vector<4x128xf32> to vector<4x128xbf16>
    %cst_71 = arith.constant dense<0.000000e+00> : vector<4x512xf32>
    %345 = tpu.matmul %344, %0, %cst_71 {dimension_numbers = #tpu.dot_dimension_numbers<[1], [0], [0], [1], [0, 0, 1, 1], [], []>} : vector<4x128xbf16>, vector<128x512xbf16>, vector<4x512xf32> -> vector<4x512xf32>
    %346 = arith.addf %343, %345 : vector<4x512xf32>
    %347 = vector.extract_strided_slice %346 {offsets = [0, 0], sizes = [4, 128], strides = [1, 1]} : vector<4x512xf32> to vector<4x128xf32>
    %348 = arith.negf %347 : vector<4x128xf32>
    %349 = math.exp %348 : vector<4x128xf32>
    %cst_72 = arith.constant 1.000000e+00 : f32
    %350 = vector.broadcast %cst_72 : f32 to vector<4x128xf32>
    %351 = arith.addf %350, %349 : vector<4x128xf32>
    %352 = arith.divf %350, %351 : vector<4x128xf32>
    %353 = vector.extract_strided_slice %346 {offsets = [0, 128], sizes = [4, 128], strides = [1, 1]} : vector<4x512xf32> to vector<4x128xf32>
    %354 = arith.negf %353 : vector<4x128xf32>
    %355 = math.exp %354 : vector<4x128xf32>
    %cst_73 = arith.constant 1.000000e+00 : f32
    %356 = vector.broadcast %cst_73 : f32 to vector<4x128xf32>
    %357 = arith.addf %356, %355 : vector<4x128xf32>
    %358 = arith.divf %356, %357 : vector<4x128xf32>
    %359 = vector.extract_strided_slice %346 {offsets = [0, 256], sizes = [4, 128], strides = [1, 1]} : vector<4x512xf32> to vector<4x128xf32>
    %360 = math.tanh %359 : vector<4x128xf32>
    %361 = vector.extract_strided_slice %346 {offsets = [0, 384], sizes = [4, 128], strides = [1, 1]} : vector<4x512xf32> to vector<4x128xf32>
    %362 = arith.negf %361 : vector<4x128xf32>
    %363 = math.exp %362 : vector<4x128xf32>
    %cst_74 = arith.constant 1.000000e+00 : f32
    %364 = vector.broadcast %cst_74 : f32 to vector<4x128xf32>
    %365 = arith.addf %364, %363 : vector<4x128xf32>
    %366 = arith.divf %364, %365 : vector<4x128xf32>
    %367 = arith.mulf %358, %302 : vector<4x128xf32>
    %368 = arith.mulf %352, %360 : vector<4x128xf32>
    %369 = arith.addf %367, %368 : vector<4x128xf32>
    %370 = math.tanh %369 : vector<4x128xf32>
    %371 = arith.mulf %366, %370 : vector<4x128xf32>
    %372 = arith.truncf %371 : vector<4x128xf32> to vector<4x128xbf16>
    %373 = arith.truncf %335 : vector<4x128xf32> to vector<4x128xbf16>
    %374 = tpu.concatenate %372, %373 in 1 : vector<4x128xbf16>, vector<4x128xbf16> -> vector<4x256xbf16>
    %cst_75 = arith.constant dense<0.000000e+00> : vector<4x512xf32>
    %375 = tpu.matmul %374, %1, %cst_75 {dimension_numbers = #tpu.dot_dimension_numbers<[1], [0], [0], [1], [0, 0, 1, 1], [], []>} : vector<4x256xbf16>, vector<256x512xbf16>, vector<4x512xf32> -> vector<4x512xf32>
    %376 = vector.broadcast %2 : vector<1x512xf32> to vector<4x512xf32>
    %377 = arith.addf %375, %376 : vector<4x512xf32>
    %378 = vector.extract_strided_slice %377 {offsets = [0, 0], sizes = [4, 128], strides = [1, 1]} : vector<4x512xf32> to vector<4x128xf32>
    %379 = arith.negf %378 : vector<4x128xf32>
    %380 = math.exp %379 : vector<4x128xf32>
    %cst_76 = arith.constant 1.000000e+00 : f32
    %381 = vector.broadcast %cst_76 : f32 to vector<4x128xf32>
    %382 = arith.addf %381, %380 : vector<4x128xf32>
    %383 = arith.divf %381, %382 : vector<4x128xf32>
    %384 = vector.extract_strided_slice %377 {offsets = [0, 128], sizes = [4, 128], strides = [1, 1]} : vector<4x512xf32> to vector<4x128xf32>
    %385 = arith.negf %384 : vector<4x128xf32>
    %386 = math.exp %385 : vector<4x128xf32>
    %cst_77 = arith.constant 1.000000e+00 : f32
    %387 = vector.broadcast %cst_77 : f32 to vector<4x128xf32>
    %388 = arith.addf %387, %386 : vector<4x128xf32>
    %389 = arith.divf %387, %388 : vector<4x128xf32>
    %390 = vector.extract_strided_slice %377 {offsets = [0, 256], sizes = [4, 128], strides = [1, 1]} : vector<4x512xf32> to vector<4x128xf32>
    %391 = math.tanh %390 : vector<4x128xf32>
    %392 = vector.extract_strided_slice %377 {offsets = [0, 384], sizes = [4, 128], strides = [1, 1]} : vector<4x512xf32> to vector<4x128xf32>
    %393 = arith.negf %392 : vector<4x128xf32>
    %394 = math.exp %393 : vector<4x128xf32>
    %cst_78 = arith.constant 1.000000e+00 : f32
    %395 = vector.broadcast %cst_78 : f32 to vector<4x128xf32>
    %396 = arith.addf %395, %394 : vector<4x128xf32>
    %397 = arith.divf %395, %396 : vector<4x128xf32>
    %398 = arith.mulf %389, %333 : vector<4x128xf32>
    %399 = arith.mulf %383, %391 : vector<4x128xf32>
    %400 = arith.addf %398, %399 : vector<4x128xf32>
    %401 = math.tanh %400 : vector<4x128xf32>
    %402 = arith.mulf %397, %401 : vector<4x128xf32>
    %403 = arith.truncf %402 : vector<4x128xf32> to vector<4x128xbf16>
    %404 = arith.index_cast %c5_i32 : i32 to index
    %c0_79 = arith.constant 0 : index
    %c0_80 = arith.constant 0 : index
    %405 = vector.load %arg6[%404, %c0_79, %c0_80] : memref<8x4x128xbf16, #tpu.memory_space<vmem>>, vector<1x4x128xbf16>
    %406 = vector.shape_cast %405 : vector<1x4x128xbf16> to vector<4x128xbf16>
    %407 = vector.shape_cast %403 : vector<4x128xbf16> to vector<1x4x128xbf16>
    tpu.vector_store %arg6[%404, %c0_79, %c0_80], %407 {strides = array<i32>} : memref<8x4x128xbf16, #tpu.memory_space<vmem>>, vector<1x4x128xbf16>,
    %c6_i32 = arith.constant 6 : i32
    %408 = arith.index_cast %c6_i32 : i32 to index
    %c0_81 = arith.constant 0 : index
    %c0_82 = arith.constant 0 : index
    %409 = vector.load %arg0[%408, %c0_81, %c0_82] : memref<8x4x512xf32, #tpu.memory_space<vmem>>, vector<1x4x512xf32>
    %410 = vector.shape_cast %409 : vector<1x4x512xf32> to vector<4x512xf32>
    %411 = arith.truncf %371 : vector<4x128xf32> to vector<4x128xbf16>
    %cst_83 = arith.constant dense<0.000000e+00> : vector<4x512xf32>
    %412 = tpu.matmul %411, %0, %cst_83 {dimension_numbers = #tpu.dot_dimension_numbers<[1], [0], [0], [1], [0, 0, 1, 1], [], []>} : vector<4x128xbf16>, vector<128x512xbf16>, vector<4x512xf32> -> vector<4x512xf32>
    %413 = arith.addf %410, %412 : vector<4x512xf32>
    %414 = vector.extract_strided_slice %413 {offsets = [0, 0], sizes = [4, 128], strides = [1, 1]} : vector<4x512xf32> to vector<4x128xf32>
    %415 = arith.negf %414 : vector<4x128xf32>
    %416 = math.exp %415 : vector<4x128xf32>
    %cst_84 = arith.constant 1.000000e+00 : f32
    %417 = vector.broadcast %cst_84 : f32 to vector<4x128xf32>
    %418 = arith.addf %417, %416 : vector<4x128xf32>
    %419 = arith.divf %417, %418 : vector<4x128xf32>
    %420 = vector.extract_strided_slice %413 {offsets = [0, 128], sizes = [4, 128], strides = [1, 1]} : vector<4x512xf32> to vector<4x128xf32>
    %421 = arith.negf %420 : vector<4x128xf32>
    %422 = math.exp %421 : vector<4x128xf32>
    %cst_85 = arith.constant 1.000000e+00 : f32
    %423 = vector.broadcast %cst_85 : f32 to vector<4x128xf32>
    %424 = arith.addf %423, %422 : vector<4x128xf32>
    %425 = arith.divf %423, %424 : vector<4x128xf32>
    %426 = vector.extract_strided_slice %413 {offsets = [0, 256], sizes = [4, 128], strides = [1, 1]} : vector<4x512xf32> to vector<4x128xf32>
    %427 = math.tanh %426 : vector<4x128xf32>
    %428 = vector.extract_strided_slice %413 {offsets = [0, 384], sizes = [4, 128], strides = [1, 1]} : vector<4x512xf32> to vector<4x128xf32>
    %429 = arith.negf %428 : vector<4x128xf32>
    %430 = math.exp %429 : vector<4x128xf32>
    %cst_86 = arith.constant 1.000000e+00 : f32
    %431 = vector.broadcast %cst_86 : f32 to vector<4x128xf32>
    %432 = arith.addf %431, %430 : vector<4x128xf32>
    %433 = arith.divf %431, %432 : vector<4x128xf32>
    %434 = arith.mulf %425, %369 : vector<4x128xf32>
    %435 = arith.mulf %419, %427 : vector<4x128xf32>
    %436 = arith.addf %434, %435 : vector<4x128xf32>
    %437 = math.tanh %436 : vector<4x128xf32>
    %438 = arith.mulf %433, %437 : vector<4x128xf32>
    %439 = arith.truncf %438 : vector<4x128xf32> to vector<4x128xbf16>
    %440 = arith.truncf %402 : vector<4x128xf32> to vector<4x128xbf16>
    %441 = tpu.concatenate %439, %440 in 1 : vector<4x128xbf16>, vector<4x128xbf16> -> vector<4x256xbf16>
    %cst_87 = arith.constant dense<0.000000e+00> : vector<4x512xf32>
    %442 = tpu.matmul %441, %1, %cst_87 {dimension_numbers = #tpu.dot_dimension_numbers<[1], [0], [0], [1], [0, 0, 1, 1], [], []>} : vector<4x256xbf16>, vector<256x512xbf16>, vector<4x512xf32> -> vector<4x512xf32>
    %443 = vector.broadcast %2 : vector<1x512xf32> to vector<4x512xf32>
    %444 = arith.addf %442, %443 : vector<4x512xf32>
    %445 = vector.extract_strided_slice %444 {offsets = [0, 0], sizes = [4, 128], strides = [1, 1]} : vector<4x512xf32> to vector<4x128xf32>
    %446 = arith.negf %445 : vector<4x128xf32>
    %447 = math.exp %446 : vector<4x128xf32>
    %cst_88 = arith.constant 1.000000e+00 : f32
    %448 = vector.broadcast %cst_88 : f32 to vector<4x128xf32>
    %449 = arith.addf %448, %447 : vector<4x128xf32>
    %450 = arith.divf %448, %449 : vector<4x128xf32>
    %451 = vector.extract_strided_slice %444 {offsets = [0, 128], sizes = [4, 128], strides = [1, 1]} : vector<4x512xf32> to vector<4x128xf32>
    %452 = arith.negf %451 : vector<4x128xf32>
    %453 = math.exp %452 : vector<4x128xf32>
    %cst_89 = arith.constant 1.000000e+00 : f32
    %454 = vector.broadcast %cst_89 : f32 to vector<4x128xf32>
    %455 = arith.addf %454, %453 : vector<4x128xf32>
    %456 = arith.divf %454, %455 : vector<4x128xf32>
    %457 = vector.extract_strided_slice %444 {offsets = [0, 256], sizes = [4, 128], strides = [1, 1]} : vector<4x512xf32> to vector<4x128xf32>
    %458 = math.tanh %457 : vector<4x128xf32>
    %459 = vector.extract_strided_slice %444 {offsets = [0, 384], sizes = [4, 128], strides = [1, 1]} : vector<4x512xf32> to vector<4x128xf32>
    %460 = arith.negf %459 : vector<4x128xf32>
    %461 = math.exp %460 : vector<4x128xf32>
    %cst_90 = arith.constant 1.000000e+00 : f32
    %462 = vector.broadcast %cst_90 : f32 to vector<4x128xf32>
    %463 = arith.addf %462, %461 : vector<4x128xf32>
    %464 = arith.divf %462, %463 : vector<4x128xf32>
    %465 = arith.mulf %456, %400 : vector<4x128xf32>
    %466 = arith.mulf %450, %458 : vector<4x128xf32>
    %467 = arith.addf %465, %466 : vector<4x128xf32>
    %468 = math.tanh %467 : vector<4x128xf32>
    %469 = arith.mulf %464, %468 : vector<4x128xf32>
    %470 = arith.truncf %469 : vector<4x128xf32> to vector<4x128xbf16>
    %471 = arith.index_cast %c6_i32 : i32 to index
    %c0_91 = arith.constant 0 : index
    %c0_92 = arith.constant 0 : index
    %472 = vector.load %arg6[%471, %c0_91, %c0_92] : memref<8x4x128xbf16, #tpu.memory_space<vmem>>, vector<1x4x128xbf16>
    %473 = vector.shape_cast %472 : vector<1x4x128xbf16> to vector<4x128xbf16>
    %474 = vector.shape_cast %470 : vector<4x128xbf16> to vector<1x4x128xbf16>
    tpu.vector_store %arg6[%471, %c0_91, %c0_92], %474 {strides = array<i32>} : memref<8x4x128xbf16, #tpu.memory_space<vmem>>, vector<1x4x128xbf16>,
    %c7_i32 = arith.constant 7 : i32
    %475 = arith.index_cast %c7_i32 : i32 to index
    %c0_93 = arith.constant 0 : index
    %c0_94 = arith.constant 0 : index
    %476 = vector.load %arg0[%475, %c0_93, %c0_94] : memref<8x4x512xf32, #tpu.memory_space<vmem>>, vector<1x4x512xf32>
    %477 = vector.shape_cast %476 : vector<1x4x512xf32> to vector<4x512xf32>
    %478 = arith.truncf %438 : vector<4x128xf32> to vector<4x128xbf16>
    %cst_95 = arith.constant dense<0.000000e+00> : vector<4x512xf32>
    %479 = tpu.matmul %478, %0, %cst_95 {dimension_numbers = #tpu.dot_dimension_numbers<[1], [0], [0], [1], [0, 0, 1, 1], [], []>} : vector<4x128xbf16>, vector<128x512xbf16>, vector<4x512xf32> -> vector<4x512xf32>
    %480 = arith.addf %477, %479 : vector<4x512xf32>
    %481 = vector.extract_strided_slice %480 {offsets = [0, 0], sizes = [4, 128], strides = [1, 1]} : vector<4x512xf32> to vector<4x128xf32>
    %482 = arith.negf %481 : vector<4x128xf32>
    %483 = math.exp %482 : vector<4x128xf32>
    %cst_96 = arith.constant 1.000000e+00 : f32
    %484 = vector.broadcast %cst_96 : f32 to vector<4x128xf32>
    %485 = arith.addf %484, %483 : vector<4x128xf32>
    %486 = arith.divf %484, %485 : vector<4x128xf32>
    %487 = vector.extract_strided_slice %480 {offsets = [0, 128], sizes = [4, 128], strides = [1, 1]} : vector<4x512xf32> to vector<4x128xf32>
    %488 = arith.negf %487 : vector<4x128xf32>
    %489 = math.exp %488 : vector<4x128xf32>
    %cst_97 = arith.constant 1.000000e+00 : f32
    %490 = vector.broadcast %cst_97 : f32 to vector<4x128xf32>
    %491 = arith.addf %490, %489 : vector<4x128xf32>
    %492 = arith.divf %490, %491 : vector<4x128xf32>
    %493 = vector.extract_strided_slice %480 {offsets = [0, 256], sizes = [4, 128], strides = [1, 1]} : vector<4x512xf32> to vector<4x128xf32>
    %494 = math.tanh %493 : vector<4x128xf32>
    %495 = vector.extract_strided_slice %480 {offsets = [0, 384], sizes = [4, 128], strides = [1, 1]} : vector<4x512xf32> to vector<4x128xf32>
    %496 = arith.negf %495 : vector<4x128xf32>
    %497 = math.exp %496 : vector<4x128xf32>
    %cst_98 = arith.constant 1.000000e+00 : f32
    %498 = vector.broadcast %cst_98 : f32 to vector<4x128xf32>
    %499 = arith.addf %498, %497 : vector<4x128xf32>
    %500 = arith.divf %498, %499 : vector<4x128xf32>
    %501 = arith.mulf %492, %436 : vector<4x128xf32>
    %502 = arith.mulf %486, %494 : vector<4x128xf32>
    %503 = arith.addf %501, %502 : vector<4x128xf32>
    %504 = math.tanh %503 : vector<4x128xf32>
    %505 = arith.mulf %500, %504 : vector<4x128xf32>
    %506 = arith.truncf %505 : vector<4x128xf32> to vector<4x128xbf16>
    %507 = arith.truncf %469 : vector<4x128xf32> to vector<4x128xbf16>
    %508 = tpu.concatenate %506, %507 in 1 : vector<4x128xbf16>, vector<4x128xbf16> -> vector<4x256xbf16>
    %cst_99 = arith.constant dense<0.000000e+00> : vector<4x512xf32>
    %509 = tpu.matmul %508, %1, %cst_99 {dimension_numbers = #tpu.dot_dimension_numbers<[1], [0], [0], [1], [0, 0, 1, 1], [], []>} : vector<4x256xbf16>, vector<256x512xbf16>, vector<4x512xf32> -> vector<4x512xf32>
    %510 = vector.broadcast %2 : vector<1x512xf32> to vector<4x512xf32>
    %511 = arith.addf %509, %510 : vector<4x512xf32>
    %512 = vector.extract_strided_slice %511 {offsets = [0, 0], sizes = [4, 128], strides = [1, 1]} : vector<4x512xf32> to vector<4x128xf32>
    %513 = arith.negf %512 : vector<4x128xf32>
    %514 = math.exp %513 : vector<4x128xf32>
    %cst_100 = arith.constant 1.000000e+00 : f32
    %515 = vector.broadcast %cst_100 : f32 to vector<4x128xf32>
    %516 = arith.addf %515, %514 : vector<4x128xf32>
    %517 = arith.divf %515, %516 : vector<4x128xf32>
    %518 = vector.extract_strided_slice %511 {offsets = [0, 128], sizes = [4, 128], strides = [1, 1]} : vector<4x512xf32> to vector<4x128xf32>
    %519 = arith.negf %518 : vector<4x128xf32>
    %520 = math.exp %519 : vector<4x128xf32>
    %cst_101 = arith.constant 1.000000e+00 : f32
    %521 = vector.broadcast %cst_101 : f32 to vector<4x128xf32>
    %522 = arith.addf %521, %520 : vector<4x128xf32>
    %523 = arith.divf %521, %522 : vector<4x128xf32>
    %524 = vector.extract_strided_slice %511 {offsets = [0, 256], sizes = [4, 128], strides = [1, 1]} : vector<4x512xf32> to vector<4x128xf32>
    %525 = math.tanh %524 : vector<4x128xf32>
    %526 = vector.extract_strided_slice %511 {offsets = [0, 384], sizes = [4, 128], strides = [1, 1]} : vector<4x512xf32> to vector<4x128xf32>
    %527 = arith.negf %526 : vector<4x128xf32>
    %528 = math.exp %527 : vector<4x128xf32>
    %cst_102 = arith.constant 1.000000e+00 : f32
    %529 = vector.broadcast %cst_102 : f32 to vector<4x128xf32>
    %530 = arith.addf %529, %528 : vector<4x128xf32>
    %531 = arith.divf %529, %530 : vector<4x128xf32>
    %532 = arith.mulf %523, %467 : vector<4x128xf32>
    %533 = arith.mulf %517, %525 : vector<4x128xf32>
    %534 = arith.addf %532, %533 : vector<4x128xf32>
    %535 = math.tanh %534 : vector<4x128xf32>
    %536 = arith.mulf %531, %535 : vector<4x128xf32>
    %537 = arith.truncf %536 : vector<4x128xf32> to vector<4x128xbf16>
    %538 = arith.index_cast %c7_i32 : i32 to index
    %c0_103 = arith.constant 0 : index
    %c0_104 = arith.constant 0 : index
    %539 = vector.load %arg6[%538, %c0_103, %c0_104] : memref<8x4x128xbf16, #tpu.memory_space<vmem>>, vector<1x4x128xbf16>
    %540 = vector.shape_cast %539 : vector<1x4x128xbf16> to vector<4x128xbf16>
    %541 = vector.shape_cast %537 : vector<4x128xbf16> to vector<1x4x128xbf16>
    tpu.vector_store %arg6[%538, %c0_103, %c0_104], %541 {strides = array<i32>} : memref<8x4x128xbf16, #tpu.memory_space<vmem>>, vector<1x4x128xbf16>,
    %c8_i32 = arith.constant 8 : i32
    return
  }
}

</mosaic_0001>

<llo_original>
// kernel: glo_forward.5
$region0: #{glo_forward.5}
  #allocation0 [shape = 'u32[]', space=smem, size = 0x4, offset = 0x4, fixed_abs, tag = 'smem constant byte address 0x4 - core index']
  #allocation1 [shape = 'u32[144,128]{1,0:T(1,128)}', space=vmem, size = 0x12000, scoped, tag = 'internal scratch']
  %s0 = inlined_call_operand.vmem [shape: bf16[32,128], index: 0, kind: input, shape index: {}]
  %s1 = inlined_call_operand.vmem [shape: bf16[128,512], index: 1, kind: input, shape index: {}]
  %s2 = inlined_call_operand.vmem [shape: f32[1,512], index: 2, kind: input, shape index: {}]
  %s3 = inlined_call_operand.vmem [shape: f32[32,512], index: 3, kind: output, shape index: {}]
  %s4 = sld [smem:[#allocation0]]
  $region22: #{glo_forward.5} parent=0
    _
  %s6 = ssub.s32 1, %s4
  %s7 = scalar_select 0, %s6, %s4
  // Predicated region
  $region2: #{glo_forward.5} parent=0 // pred_check
    _
  $region3: #{glo_forward.5} parent=0 // pred_check_branch
    %9 = sbr.rel (0) target = $region5
  $region4: #{glo_forward.5} parent=0 // pred_region
    _
  $region5: #{glo_forward.5} parent=0 // pred_fallthru
    _
  // Predicated region
  $region6: #{glo_forward.5} parent=0 // pred_check
    _
  $region7: #{glo_forward.5} parent=0 // pred_check_branch
    %11 = sbr.rel (0) target = $region9
  $region8: #{glo_forward.5} parent=0 // pred_region
    _
  $region9: #{glo_forward.5} parent=0 // pred_fallthru
    _
  // Predicated region
  $region10: #{glo_forward.5} parent=0 // pred_check
    _
  $region11: #{glo_forward.5} parent=0 // pred_check_branch
    %13 = sbr.rel (0) target = $region13
  $region12: #{glo_forward.5} parent=0 // pred_region
    _
  $region13: #{glo_forward.5} parent=0 // pred_fallthru
    _
  %v15 = vld [vmem:[%s0] sm:$0xf]
  %v16 = vld [vmem:[%s0 + $0x4] sm:$0xf]
  %v17 = vld [vmem:[%s0 + $0x8] sm:$0xf]
  %v18 = vld [vmem:[%s0 + $0xc] sm:$0xf]
  %v19 = vld [vmem:[%s1] sm:$0xff]
  %v20 = vld [vmem:[%s1 + $0x8] sm:$0xff]
  %v21 = vld [vmem:[%s1 + $0x10] sm:$0xff]
  %v22 = vld [vmem:[%s1 + $0x18] sm:$0xff]
  %v23 = vld [vmem:[%s1 + $0x20] sm:$0xff]
  %v24 = vld [vmem:[%s1 + $0x28] sm:$0xff]
  %v25 = vld [vmem:[%s1 + $0x30] sm:$0xff]
  %v26 = vld [vmem:[%s1 + $0x38] sm:$0xff]
  %v27 = vld [vmem:[%s1 + $0x40] sm:$0xff]
  %v28 = vld [vmem:[%s1 + $0x48] sm:$0xff]
  %v29 = vld [vmem:[%s1 + $0x50] sm:$0xff]
  %v30 = vld [vmem:[%s1 + $0x58] sm:$0xff]
  %v31 = vld [vmem:[%s1 + $0x60] sm:$0xff]
  %v32 = vld [vmem:[%s1 + $0x68] sm:$0xff]
  %v33 = vld [vmem:[%s1 + $0x70] sm:$0xff]
  %v34 = vld [vmem:[%s1 + $0x78] sm:$0xff]
  %v35 = vld [vmem:[%s1 + $0x80] sm:$0xff]
  %v36 = vld [vmem:[%s1 + $0x88] sm:$0xff]
  %v37 = vld [vmem:[%s1 + $0x90] sm:$0xff]
  %v38 = vld [vmem:[%s1 + $0x98] sm:$0xff]
  %v39 = vld [vmem:[%s1 + $0xa0] sm:$0xff]
  %v40 = vld [vmem:[%s1 + $0xa8] sm:$0xff]
  %v41 = vld [vmem:[%s1 + $0xb0] sm:$0xff]
  %v42 = vld [vmem:[%s1 + $0xb8] sm:$0xff]
  %v43 = vld [vmem:[%s1 + $0xc0] sm:$0xff]
  %v44 = vld [vmem:[%s1 + $0xc8] sm:$0xff]
  %v45 = vld [vmem:[%s1 + $0xd0] sm:$0xff]
  %v46 = vld [vmem:[%s1 + $0xd8] sm:$0xff]
  %v47 = vld [vmem:[%s1 + $0xe0] sm:$0xff]
  %v48 = vld [vmem:[%s1 + $0xe8] sm:$0xff]
  %v49 = vld [vmem:[%s1 + $0xf0] sm:$0xff]
  %v50 = vld [vmem:[%s1 + $0xf8] sm:$0xff]
  %v51 = vld [vmem:[%s2] sm:$0xf]
  %v53 = vlaneseq
  %v54 = vshrl.u32 %v53, 7
  %v55 = vsub.s32 0, %v54
  %v56 = vrot.slane %v51, %v55
  %v57 = vlaneseq
  %v58 = vshrl.u32 %v57, 7
  %v59 = vsub.s32 1, %v58
  %v60 = vrot.slane %v51, %v59
  %v61 = vlaneseq
  %v62 = vshrl.u32 %v61, 7
  %v63 = vsub.s32 2, %v62
  %v64 = vrot.slane %v51, %v63
  %v65 = vlaneseq
  %v66 = vshrl.u32 %v65, 7
  %v67 = vsub.s32 3, %v66
  %v68 = vrot.slane %v51, %v67
  %v77 = vunpack.c.l.b16 %v15
  %v78 = vunpack.c.l.b16 %v16
  %v79 = vunpack.c.l.b16 %v17
  %v80 = vunpack.c.l.b16 %v18
  %v81 = vpack.c.b16 %v78, %v77
  %v82 = vpack.c.b16 %v80, %v79
  %v117 = vunpack.c.l.b16 %v19
  %v118 = vunpack.c.h.b16 %v19
  %v119 = vunpack.c.l.b16 %v20
  %v120 = vunpack.c.h.b16 %v20
  %v121 = vunpack.c.l.b16 %v21
  %v122 = vunpack.c.h.b16 %v21
  %v123 = vunpack.c.l.b16 %v22
  %v124 = vunpack.c.h.b16 %v22
  %v125 = vunpack.c.l.b16 %v23
  %v126 = vunpack.c.h.b16 %v23
  %v127 = vunpack.c.l.b16 %v24
  %v128 = vunpack.c.h.b16 %v24
  %v129 = vunpack.c.l.b16 %v25
  %v130 = vunpack.c.h.b16 %v25
  %v131 = vunpack.c.l.b16 %v26
  %v132 = vunpack.c.h.b16 %v26
  %v133 = vunpack.c.l.b16 %v27
  %v134 = vunpack.c.h.b16 %v27
  %v135 = vunpack.c.l.b16 %v28
  %v136 = vunpack.c.h.b16 %v28
  %v137 = vunpack.c.l.b16 %v29
  %v138 = vunpack.c.h.b16 %v29
  %v139 = vunpack.c.l.b16 %v30
  %v140 = vunpack.c.h.b16 %v30
  %v141 = vunpack.c.l.b16 %v31
  %v142 = vunpack.c.h.b16 %v31
  %v143 = vunpack.c.l.b16 %v32
  %v144 = vunpack.c.h.b16 %v32
  %v145 = vunpack.c.l.b16 %v33
  %v146 = vunpack.c.h.b16 %v33
  %v147 = vunpack.c.l.b16 %v34
  %v148 = vunpack.c.h.b16 %v34
  %v149 = vunpack.c.l.b16 %v35
  %v150 = vunpack.c.h.b16 %v35
  %v151 = vunpack.c.l.b16 %v36
  %v152 = vunpack.c.h.b16 %v36
  %v153 = vunpack.c.l.b16 %v37
  %v154 = vunpack.c.h.b16 %v37
  %v155 = vunpack.c.l.b16 %v38
  %v156 = vunpack.c.h.b16 %v38
  %v157 = vunpack.c.l.b16 %v39
  %v158 = vunpack.c.h.b16 %v39
  %v159 = vunpack.c.l.b16 %v40
  %v160 = vunpack.c.h.b16 %v40
  %v161 = vunpack.c.l.b16 %v41
  %v162 = vunpack.c.h.b16 %v41
  %v163 = vunpack.c.l.b16 %v42
  %v164 = vunpack.c.h.b16 %v42
  %v165 = vunpack.c.l.b16 %v43
  %v166 = vunpack.c.h.b16 %v43
  %v167 = vunpack.c.l.b16 %v44
  %v168 = vunpack.c.h.b16 %v44
  %v169 = vunpack.c.l.b16 %v45
  %v170 = vunpack.c.h.b16 %v45
  %v171 = vunpack.c.l.b16 %v46
  %v172 = vunpack.c.h.b16 %v46
  %v173 = vunpack.c.l.b16 %v47
  %v174 = vunpack.c.h.b16 %v47
  %v175 = vunpack.c.l.b16 %v48
  %v176 = vunpack.c.h.b16 %v48
  %v177 = vunpack.c.l.b16 %v49
  %v178 = vunpack.c.h.b16 %v49
  %v179 = vunpack.c.l.b16 %v50
  %v180 = vunpack.c.h.b16 %v50
  %v181 = vpack.c.b16 %v121, %v117
  %v182 = vpack.c.b16 %v122, %v118
  %v183 = vpack.c.b16 %v123, %v119
  %v184 = vpack.c.b16 %v124, %v120
  %v185 = vpack.c.b16 %v129, %v125
  %v186 = vpack.c.b16 %v130, %v126
  %v187 = vpack.c.b16 %v131, %v127
  %v188 = vpack.c.b16 %v132, %v128
  %v189 = vpack.c.b16 %v137, %v133
  %v190 = vpack.c.b16 %v138, %v134
  %v191 = vpack.c.b16 %v139, %v135
  %v192 = vpack.c.b16 %v140, %v136
  %v193 = vpack.c.b16 %v145, %v141
  %v194 = vpack.c.b16 %v146, %v142
  %v195 = vpack.c.b16 %v147, %v143
  %v196 = vpack.c.b16 %v148, %v144
  %v197 = vpack.c.b16 %v153, %v149
  %v198 = vpack.c.b16 %v154, %v150
  %v199 = vpack.c.b16 %v155, %v151
  %v200 = vpack.c.b16 %v156, %v152
  %v201 = vpack.c.b16 %v161, %v157
  %v202 = vpack.c.b16 %v162, %v158
  %v203 = vpack.c.b16 %v163, %v159
  %v204 = vpack.c.b16 %v164, %v160
  %v205 = vpack.c.b16 %v169, %v165
  %v206 = vpack.c.b16 %v170, %v166
  %v207 = vpack.c.b16 %v171, %v167
  %v208 = vpack.c.b16 %v172, %v168
  %v209 = vpack.c.b16 %v177, %v173
  %v210 = vpack.c.b16 %v178, %v174
  %v211 = vpack.c.b16 %v179, %v175
  %v212 = vpack.c.b16 %v180, %v176
  %245 = vmatprep.subr.bf16.mxu0 %v182
  %246 = vmatpush1.bf16.msra.mxu0 %v181
  %247 = vmatprep.subr.bf16.mxu0 %v186
  %248 = vmatpush1.bf16.msra.mxu0 %v185
  %249 = vmatprep.subr.bf16.mxu0 %v190
  %250 = vmatpush1.bf16.msra.mxu0 %v189
  %251 = vmatprep.subr.bf16.mxu0 %v194
  %252 = vmatpush1.bf16.msra.mxu0 %v193
  %253 = vmatprep.subr.bf16.mxu0 %v198
  %254 = vmatpush1.bf16.msra.mxu0 %v197
  %255 = vmatprep.subr.bf16.mxu0 %v202
  %256 = vmatpush1.bf16.msra.mxu0 %v201
  %257 = vmatprep.subr.bf16.mxu0 %v206
  %258 = vmatpush1.bf16.msra.mxu0 %v205
  %259 = vmatprep.subr.bf16.mxu0 %v210
  %260 = vmatpush1.bf16.msra.mxu0 %v209
  %261 = vmatprep.subr.bf16.mxu0 0
  %262 = vmatpush1.bf16.msra.mxu0 0
  %263 = vmatprep.subr.bf16.mxu0 0
  %264 = vmatpush1.bf16.msra.mxu0 0
  %265 = vmatprep.subr.bf16.mxu0 0
  %266 = vmatpush1.bf16.msra.mxu0 0
  %267 = vmatprep.subr.bf16.mxu0 0
  %268 = vmatpush1.bf16.msra.mxu0 0
  %269 = vmatprep.subr.bf16.mxu0 0
  %270 = vmatpush1.bf16.msra.mxu0 0
  %271 = vmatprep.subr.bf16.mxu0 0
  %272 = vmatpush1.bf16.msra.mxu0 0
  %273 = vmatprep.subr.bf16.mxu0 0
  %274 = vmatpush1.bf16.msra.mxu0 0
  %275 = vmatprep.subr.bf16.mxu0 0
  %276 = vmatpush1.bf16.msra.mxu0 0
  %277 = vmatprep.mubr.bf16.mxu0 0
  %278 = vmatmul.mubr.bf16.gmra.mrb[0].mxu0 %v81
  %v279 = vpop.f32.mrb[0].mxu0
  %v280 = vadd.f32 %v56, %v279
  %v281 = vpop.f32.mrb[0].mxu0
  %v282 = vadd.f32 %v60, %v281
  %v283 = vpop.f32.mrb[0].mxu0
  %v284 = vadd.f32 %v56, %v283
  %v285 = vpop.f32.mrb[0].mxu0
  %v286 = vadd.f32 %v60, %v285
  %287 = vmatprep.mubr.bf16.mxu0 0
  %288 = vmatmul.mubr.bf16.gmra.mrb[0].mxu0 %v82
  %v289 = vpop.f32.mrb[0].mxu0
  %v290 = vadd.f32 %v56, %v289
  %v291 = vpop.f32.mrb[0].mxu0
  %v292 = vadd.f32 %v60, %v291
  %v293 = vpop.f32.mrb[0].mxu0
  %v294 = vadd.f32 %v56, %v293
  %v295 = vpop.f32.mrb[0].mxu0
  %v296 = vadd.f32 %v60, %v295
  %297 = vdwg.mxu0
  %298 = vmatprep.subr.bf16.mxu0 %v184
  %299 = vmatpush1.bf16.msra.mxu0 %v183
  %300 = vmatprep.subr.bf16.mxu0 %v188
  %301 = vmatpush1.bf16.msra.mxu0 %v187
  %302 = vmatprep.subr.bf16.mxu0 %v192
  %303 = vmatpush1.bf16.msra.mxu0 %v191
  %304 = vmatprep.subr.bf16.mxu0 %v196
  %305 = vmatpush1.bf16.msra.mxu0 %v195
  %306 = vmatprep.subr.bf16.mxu0 %v200
  %307 = vmatpush1.bf16.msra.mxu0 %v199
  %308 = vmatprep.subr.bf16.mxu0 %v204
  %309 = vmatpush1.bf16.msra.mxu0 %v203
  %310 = vmatprep.subr.bf16.mxu0 %v208
  %311 = vmatpush1.bf16.msra.mxu0 %v207
  %312 = vmatprep.subr.bf16.mxu0 %v212
  %313 = vmatpush1.bf16.msra.mxu0 %v211
  %314 = vmatprep.subr.bf16.mxu0 0
  %315 = vmatpush1.bf16.msra.mxu0 0
  %316 = vmatprep.subr.bf16.mxu0 0
  %317 = vmatpush1.bf16.msra.mxu0 0
  %318 = vmatprep.subr.bf16.mxu0 0
  %319 = vmatpush1.bf16.msra.mxu0 0
  %320 = vmatprep.subr.bf16.mxu0 0
  %321 = vmatpush1.bf16.msra.mxu0 0
  %322 = vmatprep.subr.bf16.mxu0 0
  %323 = vmatpush1.bf16.msra.mxu0 0
  %324 = vmatprep.subr.bf16.mxu0 0
  %325 = vmatpush1.bf16.msra.mxu0 0
  %326 = vmatprep.subr.bf16.mxu0 0
  %327 = vmatpush1.bf16.msra.mxu0 0
  %328 = vmatprep.subr.bf16.mxu0 0
  %329 = vmatpush1.bf16.msra.mxu0 0
  %330 = vmatprep.mubr.bf16.mxu0 0
  %331 = vmatmul.mubr.bf16.gmra.mrb[0].mxu0 %v81
  %v332 = vpop.f32.mrb[0].mxu0
  %v333 = vadd.f32 %v64, %v332
  %v334 = vpop.f32.mrb[0].mxu0
  %v335 = vadd.f32 %v68, %v334
  %v336 = vpop.f32.mrb[0].mxu0
  %v337 = vadd.f32 %v64, %v336
  %v338 = vpop.f32.mrb[0].mxu0
  %v339 = vadd.f32 %v68, %v338
  %340 = vmatprep.mubr.bf16.mxu0 0
  %341 = vmatmul.mubr.bf16.gmra.mrb[0].mxu0 %v82
  %v342 = vpop.f32.mrb[0].mxu0
  %v343 = vadd.f32 %v64, %v342
  %v344 = vpop.f32.mrb[0].mxu0
  %v345 = vadd.f32 %v68, %v344
  %v346 = vpop.f32.mrb[0].mxu0
  %v347 = vadd.f32 %v64, %v346
  %v348 = vpop.f32.mrb[0].mxu0
  %v349 = vadd.f32 %v68, %v348
  %350 = vdwg.mxu0
  %351 = vst [vmem:[%s3] sm:$0xff] %v280
  %352 = vst [vmem:[%s3 + $0x8] sm:$0xff] %v282
  %353 = vst [vmem:[%s3 + $0x10] sm:$0xff] %v333
  %354 = vst [vmem:[%s3 + $0x18] sm:$0xff] %v335
  %355 = vst [vmem:[%s3 + $0x20] sm:$0xff] %v284
  %356 = vst [vmem:[%s3 + $0x28] sm:$0xff] %v286
  %357 = vst [vmem:[%s3 + $0x30] sm:$0xff] %v337
  %358 = vst [vmem:[%s3 + $0x38] sm:$0xff] %v339
  %359 = vst [vmem:[%s3 + $0x40] sm:$0xff] %v290
  %360 = vst [vmem:[%s3 + $0x48] sm:$0xff] %v292
  %361 = vst [vmem:[%s3 + $0x50] sm:$0xff] %v343
  %362 = vst [vmem:[%s3 + $0x58] sm:$0xff] %v345
  %363 = vst [vmem:[%s3 + $0x60] sm:$0xff] %v294
  %364 = vst [vmem:[%s3 + $0x68] sm:$0xff] %v296
  %365 = vst [vmem:[%s3 + $0x70] sm:$0xff] %v347
  %366 = vst [vmem:[%s3 + $0x78] sm:$0xff] %v349
  // Predicated region
  $region14: #{glo_forward.5} parent=0 // pred_check
    _
  $region15: #{glo_forward.5} parent=0 // pred_check_branch
    %368 = sbr.rel (0) target = $region17
  $region16: #{glo_forward.5} parent=0 // pred_region
    _
  $region17: #{glo_forward.5} parent=0 // pred_fallthru
    _
  // Predicated region
  $region18: #{glo_forward.5} parent=0 // pred_check
    _
  $region19: #{glo_forward.5} parent=0 // pred_check_branch
    %370 = sbr.rel (0) target = $region21
  $region20: #{glo_forward.5} parent=0 // pred_region
    _
  $region21: #{glo_forward.5} parent=0 // pred_fallthru
    _

// kernel: glo_forward.4
$region0: #{glo_forward.4}
  #allocation0 [shape = 'u32[]', space=smem, size = 0x4, offset = 0x4, fixed_abs, tag = 'smem constant byte address 0x4 - core index']
  #allocation1 [shape = 'u32[144,128]{1,0:T(1,128)}', space=vmem, size = 0x12000, scoped, tag = 'internal scratch']
  %s0 = inlined_call_operand.vmem [shape: bf16[4,3072], index: 0, kind: input, shape index: {}]
  %s1 = inlined_call_operand.vmem [shape: bf16[3072,256], index: 1, kind: input, shape index: {}]
  %s2 = inlined_call_operand.vmem [shape: f32[1,256], index: 2, kind: input, shape index: {}]
  %s3 = inlined_call_operand.vmem [shape: f32[4,128], index: 3, kind: output, shape index: {0}]
  %s4 = inlined_call_operand.vmem [shape: f32[4,128], index: 4, kind: output, shape index: {1}]
  %5 = xla_tuple %s3, %s4
  %s6 = sld [smem:[#allocation0]]
  $region30: #{glo_forward.4} parent=0
    _
  %s8 = ssub.s32 1, %s6
  %s9 = scalar_select 0, %s8, %s6
  // Predicated region
  $region2: #{glo_forward.4} parent=0 // pred_check
    _
  $region3: #{glo_forward.4} parent=0 // pred_check_branch
    %11 = sbr.rel (0) target = $region5
  $region4: #{glo_forward.4} parent=0 // pred_region
    _
  $region5: #{glo_forward.4} parent=0 // pred_fallthru
    _
  // Predicated region
  $region6: #{glo_forward.4} parent=0 // pred_check
    _
  $region7: #{glo_forward.4} parent=0 // pred_check_branch
    %13 = sbr.rel (0) target = $region9
  $region8: #{glo_forward.4} parent=0 // pred_region
    _
  $region9: #{glo_forward.4} parent=0 // pred_fallthru
    _
  // Predicated region
  $region10: #{glo_forward.4} parent=0 // pred_check
    _
  $region11: #{glo_forward.4} parent=0 // pred_check_branch
    %15 = sbr.rel (0) target = $region13
  $region12: #{glo_forward.4} parent=0 // pred_region
    _
  $region13: #{glo_forward.4} parent=0 // pred_fallthru
    _
  %v16 = vld [vmem:[%s0] sm:$0xff]
  %v17 = vld [vmem:[%s0 + $0x8] sm:$0xff]
  %v18 = vld [vmem:[%s0 + $0x10] sm:$0xff]
  %v19 = vld [vmem:[%s0 + $0x18] sm:$0xff]
  %v20 = vld [vmem:[%s0 + $0x20] sm:$0xff]
  %v21 = vld [vmem:[%s0 + $0x28] sm:$0xff]
  %v22 = vld [vmem:[%s1] sm:$0xff]
  %v23 = vld [vmem:[%s1 + $0x8] sm:$0xff]
  %v24 = vld [vmem:[%s1 + $0x10] sm:$0xff]
  %v25 = vld [vmem:[%s1 + $0x18] sm:$0xff]
  %v26 = vld [vmem:[%s1 + $0x20] sm:$0xff]
  %v27 = vld [vmem:[%s1 + $0x28] sm:$0xff]
  %v28 = vld [vmem:[%s1 + $0x30] sm:$0xff]
  %v29 = vld [vmem:[%s1 + $0x38] sm:$0xff]
  %v30 = vld [vmem:[%s1 + $0x40] sm:$0xff]
  %v31 = vld [vmem:[%s1 + $0x48] sm:$0xff]
  %v32 = vld [vmem:[%s1 + $0x50] sm:$0xff]
  %v33 = vld [vmem:[%s1 + $0x58] sm:$0xff]
  %v34 = vld [vmem:[%s1 + $0x60] sm:$0xff]
  %v35 = vld [vmem:[%s1 + $0x68] sm:$0xff]
  %v36 = vld [vmem:[%s1 + $0x70] sm:$0xff]
  %v37 = vld [vmem:[%s1 + $0x78] sm:$0xff]
  %v38 = vld [vmem:[%s1 + $0x80] sm:$0xff]
  %v39 = vld [vmem:[%s1 + $0x88] sm:$0xff]
  %v40 = vld [vmem:[%s1 + $0x90] sm:$0xff]
  %v41 = vld [vmem:[%s1 + $0x98] sm:$0xff]
  %v42 = vld [vmem:[%s1 + $0xa0] sm:$0xff]
  %v43 = vld [vmem:[%s1 + $0xa8] sm:$0xff]
  %v44 = vld [vmem:[%s1 + $0xb0] sm:$0xff]
  %v45 = vld [vmem:[%s1 + $0xb8] sm:$0xff]
  %v46 = vld [vmem:[%s1 + $0xc0] sm:$0xff]
  %v47 = vld [vmem:[%s1 + $0xc8] sm:$0xff]
  %v48 = vld [vmem:[%s1 + $0xd0] sm:$0xff]
  %v49 = vld [vmem:[%s1 + $0xd8] sm:$0xff]
  %v50 = vld [vmem:[%s1 + $0xe0] sm:$0xff]
  %v51 = vld [vmem:[%s1 + $0xe8] sm:$0xff]
  %v52 = vld [vmem:[%s1 + $0xf0] sm:$0xff]
  %v53 = vld [vmem:[%s1 + $0xf8] sm:$0xff]
  %v54 = vld [vmem:[%s1 + $0x100] sm:$0xff]
  %v55 = vld [vmem:[%s1 + $0x108] sm:$0xff]
  %v56 = vld [vmem:[%s1 + $0x110] sm:$0xff]
  %v57 = vld [vmem:[%s1 + $0x118] sm:$0xff]
  %v58 = vld [vmem:[%s1 + $0x120] sm:$0xff]
  %v59 = vld [vmem:[%s1 + $0x128] sm:$0xff]
  %v60 = vld [vmem:[%s1 + $0x130] sm:$0xff]
  %v61 = vld [vmem:[%s1 + $0x138] sm:$0xff]
  %v62 = vld [vmem:[%s1 + $0x140] sm:$0xff]
  %v63 = vld [vmem:[%s1 + $0x148] sm:$0xff]
  %v64 = vld [vmem:[%s1 + $0x150] sm:$0xff]
  %v65 = vld [vmem:[%s1 + $0x158] sm:$0xff]
  %v66 = vld [vmem:[%s1 + $0x160] sm:$0xff]
  %v67 = vld [vmem:[%s1 + $0x168] sm:$0xff]
  %v68 = vld [vmem:[%s1 + $0x170] sm:$0xff]
  %v69 = vld [vmem:[%s1 + $0x178] sm:$0xff]
  %v70 = vld [vmem:[%s1 + $0x180] sm:$0xff]
  %v71 = vld [vmem:[%s1 + $0x188] sm:$0xff]
  %v72 = vld [vmem:[%s1 + $0x190] sm:$0xff]
  %v73 = vld [vmem:[%s1 + $0x198] sm:$0xff]
  %v74 = vld [vmem:[%s1 + $0x1a0] sm:$0xff]
  %v75 = vld [vmem:[%s1 + $0x1a8] sm:$0xff]
  %v76 = vld [vmem:[%s1 + $0x1b0] sm:$0xff]
  %v77 = vld [vmem:[%s1 + $0x1b8] sm:$0xff]
  %v78 = vld [vmem:[%s1 + $0x1c0] sm:$0xff]
  %v79 = vld [vmem:[%s1 + $0x1c8] sm:$0xff]
  %v80 = vld [vmem:[%s1 + $0x1d0] sm:$0xff]
  %v81 = vld [vmem:[%s1 + $0x1d8] sm:$0xff]
  %v82 = vld [vmem:[%s1 + $0x1e0] sm:$0xff]
  %v83 = vld [vmem:[%s1 + $0x1e8] sm:$0xff]
  %v84 = vld [vmem:[%s1 + $0x1f0] sm:$0xff]
  %v85 = vld [vmem:[%s1 + $0x1f8] sm:$0xff]
  %v86 = vld [vmem:[%s1 + $0x200] sm:$0xff]
  %v87 = vld [vmem:[%s1 + $0x208] sm:$0xff]
  %v88 = vld [vmem:[%s1 + $0x210] sm:$0xff]
  %v89 = vld [vmem:[%s1 + $0x218] sm:$0xff]
  %v90 = vld [vmem:[%s1 + $0x220] sm:$0xff]
  %v91 = vld [vmem:[%s1 + $0x228] sm:$0xff]
  %v92 = vld [vmem:[%s1 + $0x230] sm:$0xff]
  %v93 = vld [vmem:[%s1 + $0x238] sm:$0xff]
  %v94 = vld [vmem:[%s1 + $0x240] sm:$0xff]
  %v95 = vld [vmem:[%s1 + $0x248] sm:$0xff]
  %v96 = vld [vmem:[%s1 + $0x250] sm:$0xff]
  %v97 = vld [vmem:[%s1 + $0x258] sm:$0xff]
  %v98 = vld [vmem:[%s1 + $0x260] sm:$0xff]
  %v99 = vld [vmem:[%s1 + $0x268] sm:$0xff]
  %v100 = vld [vmem:[%s1 + $0x270] sm:$0xff]
  %v101 = vld [vmem:[%s1 + $0x278] sm:$0xff]
  %v102 = vld [vmem:[%s1 + $0x280] sm:$0xff]
  %v103 = vld [vmem:[%s1 + $0x288] sm:$0xff]
  %v104 = vld [vmem:[%s1 + $0x290] sm:$0xff]
  %v105 = vld [vmem:[%s1 + $0x298] sm:$0xff]
  %v106 = vld [vmem:[%s1 + $0x2a0] sm:$0xff]
  %v107 = vld [vmem:[%s1 + $0x2a8] sm:$0xff]
  %v108 = vld [vmem:[%s1 + $0x2b0] sm:$0xff]
  %v109 = vld [vmem:[%s1 + $0x2b8] sm:$0xff]
  %v110 = vld [vmem:[%s1 + $0x2c0] sm:$0xff]
  %v111 = vld [vmem:[%s1 + $0x2c8] sm:$0xff]
  %v112 = vld [vmem:[%s1 + $0x2d0] sm:$0xff]
  %v113 = vld [vmem:[%s1 + $0x2d8] sm:$0xff]
  %v114 = vld [vmem:[%s1 + $0x2e0] sm:$0xff]
  %v115 = vld [vmem:[%s1 + $0x2e8] sm:$0xff]
  %v116 = vld [vmem:[%s1 + $0x2f0] sm:$0xff]
  %v117 = vld [vmem:[%s1 + $0x2f8] sm:$0xff]
  %v118 = vld [vmem:[%s1 + $0x300] sm:$0xff]
  %v119 = vld [vmem:[%s1 + $0x308] sm:$0xff]
  %v120 = vld [vmem:[%s1 + $0x310] sm:$0xff]
  %v121 = vld [vmem:[%s1 + $0x318] sm:$0xff]
  %v122 = vld [vmem:[%s1 + $0x320] sm:$0xff]
  %v123 = vld [vmem:[%s1 + $0x328] sm:$0xff]
  %v124 = vld [vmem:[%s1 + $0x330] sm:$0xff]
  %v125 = vld [vmem:[%s1 + $0x338] sm:$0xff]
  %v126 = vld [vmem:[%s1 + $0x340] sm:$0xff]
  %v127 = vld [vmem:[%s1 + $0x348] sm:$0xff]
  %v128 = vld [vmem:[%s1 + $0x350] sm:$0xff]
  %v129 = vld [vmem:[%s1 + $0x358] sm:$0xff]
  %v130 = vld [vmem:[%s1 + $0x360] sm:$0xff]
  %v131 = vld [vmem:[%s1 + $0x368] sm:$0xff]
  %v132 = vld [vmem:[%s1 + $0x370] sm:$0xff]
  %v133 = vld [vmem:[%s1 + $0x378] sm:$0xff]
  %v134 = vld [vmem:[%s1 + $0x380] sm:$0xff]
  %v135 = vld [vmem:[%s1 + $0x388] sm:$0xff]
  %v136 = vld [vmem:[%s1 + $0x390] sm:$0xff]
  %v137 = vld [vmem:[%s1 + $0x398] sm:$0xff]
  %v138 = vld [vmem:[%s1 + $0x3a0] sm:$0xff]
  %v139 = vld [vmem:[%s1 + $0x3a8] sm:$0xff]
  %v140 = vld [vmem:[%s1 + $0x3b0] sm:$0xff]
  %v141 = vld [vmem:[%s1 + $0x3b8] sm:$0xff]
  %v142 = vld [vmem:[%s1 + $0x3c0] sm:$0xff]
  %v143 = vld [vmem:[%s1 + $0x3c8] sm:$0xff]
  %v144 = vld [vmem:[%s1 + $0x3d0] sm:$0xff]
  %v145 = vld [vmem:[%s1 + $0x3d8] sm:$0xff]
  %v146 = vld [vmem:[%s1 + $0x3e0] sm:$0xff]
  %v147 = vld [vmem:[%s1 + $0x3e8] sm:$0xff]
  %v148 = vld [vmem:[%s1 + $0x3f0] sm:$0xff]
  %v149 = vld [vmem:[%s1 + $0x3f8] sm:$0xff]
  %v150 = vld [vmem:[%s1 + $0x400] sm:$0xff]
  %v151 = vld [vmem:[%s1 + $0x408] sm:$0xff]
  %v152 = vld [vmem:[%s1 + $0x410] sm:$0xff]
  %v153 = vld [vmem:[%s1 + $0x418] sm:$0xff]
  %v154 = vld [vmem:[%s1 + $0x420] sm:$0xff]
  %v155 = vld [vmem:[%s1 + $0x428] sm:$0xff]
  %v156 = vld [vmem:[%s1 + $0x430] sm:$0xff]
  %v157 = vld [vmem:[%s1 + $0x438] sm:$0xff]
  %v158 = vld [vmem:[%s1 + $0x440] sm:$0xff]
  %v159 = vld [vmem:[%s1 + $0x448] sm:$0xff]
  %v160 = vld [vmem:[%s1 + $0x450] sm:$0xff]
  %v161 = vld [vmem:[%s1 + $0x458] sm:$0xff]
  %v162 = vld [vmem:[%s1 + $0x460] sm:$0xff]
  %v163 = vld [vmem:[%s1 + $0x468] sm:$0xff]
  %v164 = vld [vmem:[%s1 + $0x470] sm:$0xff]
  %v165 = vld [vmem:[%s1 + $0x478] sm:$0xff]
  %v166 = vld [vmem:[%s1 + $0x480] sm:$0xff]
  %v167 = vld [vmem:[%s1 + $0x488] sm:$0xff]
  %v168 = vld [vmem:[%s1 + $0x490] sm:$0xff]
  %v169 = vld [vmem:[%s1 + $0x498] sm:$0xff]
  %v170 = vld [vmem:[%s1 + $0x4a0] sm:$0xff]
  %v171 = vld [vmem:[%s1 + $0x4a8] sm:$0xff]
  %v172 = vld [vmem:[%s1 + $0x4b0] sm:$0xff]
  %v173 = vld [vmem:[%s1 + $0x4b8] sm:$0xff]
  %v174 = vld [vmem:[%s1 + $0x4c0] sm:$0xff]
  %v175 = vld [vmem:[%s1 + $0x4c8] sm:$0xff]
  %v176 = vld [vmem:[%s1 + $0x4d0] sm:$0xff]
  %v177 = vld [vmem:[%s1 + $0x4d8] sm:$0xff]
  %v178 = vld [vmem:[%s1 + $0x4e0] sm:$0xff]
  %v179 = vld [vmem:[%s1 + $0x4e8] sm:$0xff]
  %v180 = vld [vmem:[%s1 + $0x4f0] sm:$0xff]
  %v181 = vld [vmem:[%s1 + $0x4f8] sm:$0xff]
  %v182 = vld [vmem:[%s1 + $0x500] sm:$0xff]
  %v183 = vld [vmem:[%s1 + $0x508] sm:$0xff]
  %v184 = vld [vmem:[%s1 + $0x510] sm:$0xff]
  %v185 = vld [vmem:[%s1 + $0x518] sm:$0xff]
  %v186 = vld [vmem:[%s1 + $0x520] sm:$0xff]
  %v187 = vld [vmem:[%s1 + $0x528] sm:$0xff]
  %v188 = vld [vmem:[%s1 + $0x530] sm:$0xff]
  %v189 = vld [vmem:[%s1 + $0x538] sm:$0xff]
  %v190 = vld [vmem:[%s1 + $0x540] sm:$0xff]
  %v191 = vld [vmem:[%s1 + $0x548] sm:$0xff]
  %v192 = vld [vmem:[%s1 + $0x550] sm:$0xff]
  %v193 = vld [vmem:[%s1 + $0x558] sm:$0xff]
  %v194 = vld [vmem:[%s1 + $0x560] sm:$0xff]
  %v195 = vld [vmem:[%s1 + $0x568] sm:$0xff]
  %v196 = vld [vmem:[%s1 + $0x570] sm:$0xff]
  %v197 = vld [vmem:[%s1 + $0x578] sm:$0xff]
  %v198 = vld [vmem:[%s1 + $0x580] sm:$0xff]
  %v199 = vld [vmem:[%s1 + $0x588] sm:$0xff]
  %v200 = vld [vmem:[%s1 + $0x590] sm:$0xff]
  %v201 = vld [vmem:[%s1 + $0x598] sm:$0xff]
  %v202 = vld [vmem:[%s1 + $0x5a0] sm:$0xff]
  %v203 = vld [vmem:[%s1 + $0x5a8] sm:$0xff]
  %v204 = vld [vmem:[%s1 + $0x5b0] sm:$0xff]
  %v205 = vld [vmem:[%s1 + $0x5b8] sm:$0xff]
  %v206 = vld [vmem:[%s1 + $0x5c0] sm:$0xff]
  %v207 = vld [vmem:[%s1 + $0x5c8] sm:$0xff]
  %v208 = vld [vmem:[%s1 + $0x5d0] sm:$0xff]
  %v209 = vld [vmem:[%s1 + $0x5d8] sm:$0xff]
  %v210 = vld [vmem:[%s1 + $0x5e0] sm:$0xff]
  %v211 = vld [vmem:[%s1 + $0x5e8] sm:$0xff]
  %v212 = vld [vmem:[%s1 + $0x5f0] sm:$0xff]
  %v213 = vld [vmem:[%s1 + $0x5f8] sm:$0xff]
  %v214 = vld [vmem:[%s1 + $0x600] sm:$0xff]
  %v215 = vld [vmem:[%s1 + $0x608] sm:$0xff]
  %v216 = vld [vmem:[%s1 + $0x610] sm:$0xff]
  %v217 = vld [vmem:[%s1 + $0x618] sm:$0xff]
  %v218 = vld [vmem:[%s1 + $0x620] sm:$0xff]
  %v219 = vld [vmem:[%s1 + $0x628] sm:$0xff]
  %v220 = vld [vmem:[%s1 + $0x630] sm:$0xff]
  %v221 = vld [vmem:[%s1 + $0x638] sm:$0xff]
  %v222 = vld [vmem:[%s1 + $0x640] sm:$0xff]
  %v223 = vld [vmem:[%s1 + $0x648] sm:$0xff]
  %v224 = vld [vmem:[%s1 + $0x650] sm:$0xff]
  %v225 = vld [vmem:[%s1 + $0x658] sm:$0xff]
  %v226 = vld [vmem:[%s1 + $0x660] sm:$0xff]
  %v227 = vld [vmem:[%s1 + $0x668] sm:$0xff]
  %v228 = vld [vmem:[%s1 + $0x670] sm:$0xff]
  %v229 = vld [vmem:[%s1 + $0x678] sm:$0xff]
  %v230 = vld [vmem:[%s1 + $0x680] sm:$0xff]
  %v231 = vld [vmem:[%s1 + $0x688] sm:$0xff]
  %v232 = vld [vmem:[%s1 + $0x690] sm:$0xff]
  %v233 = vld [vmem:[%s1 + $0x698] sm:$0xff]
  %v234 = vld [vmem:[%s1 + $0x6a0] sm:$0xff]
  %v235 = vld [vmem:[%s1 + $0x6a8] sm:$0xff]
  %v236 = vld [vmem:[%s1 + $0x6b0] sm:$0xff]
  %v237 = vld [vmem:[%s1 + $0x6b8] sm:$0xff]
  %v238 = vld [vmem:[%s1 + $0x6c0] sm:$0xff]
  %v239 = vld [vmem:[%s1 + $0x6c8] sm:$0xff]
  %v240 = vld [vmem:[%s1 + $0x6d0] sm:$0xff]
  %v241 = vld [vmem:[%s1 + $0x6d8] sm:$0xff]
  %v242 = vld [vmem:[%s1 + $0x6e0] sm:$0xff]
  %v243 = vld [vmem:[%s1 + $0x6e8] sm:$0xff]
  %v244 = vld [vmem:[%s1 + $0x6f0] sm:$0xff]
  %v245 = vld [vmem:[%s1 + $0x6f8] sm:$0xff]
  %v246 = vld [vmem:[%s1 + $0x700] sm:$0xff]
  %v247 = vld [vmem:[%s1 + $0x708] sm:$0xff]
  %v248 = vld [vmem:[%s1 + $0x710] sm:$0xff]
  %v249 = vld [vmem:[%s1 + $0x718] sm:$0xff]
  %v250 = vld [vmem:[%s1 + $0x720] sm:$0xff]
  %v251 = vld [vmem:[%s1 + $0x728] sm:$0xff]
  %v252 = vld [vmem:[%s1 + $0x730] sm:$0xff]
  %v253 = vld [vmem:[%s1 + $0x738] sm:$0xff]
  %v254 = vld [vmem:[%s1 + $0x740] sm:$0xff]
  %v255 = vld [vmem:[%s1 + $0x748] sm:$0xff]
  %v256 = vld [vmem:[%s1 + $0x750] sm:$0xff]
  %v257 = vld [vmem:[%s1 + $0x758] sm:$0xff]
  %v258 = vld [vmem:[%s1 + $0x760] sm:$0xff]
  %v259 = vld [vmem:[%s1 + $0x768] sm:$0xff]
  %v260 = vld [vmem:[%s1 + $0x770] sm:$0xff]
  %v261 = vld [vmem:[%s1 + $0x778] sm:$0xff]
  %v262 = vld [vmem:[%s1 + $0x780] sm:$0xff]
  %v263 = vld [vmem:[%s1 + $0x788] sm:$0xff]
  %v264 = vld [vmem:[%s1 + $0x790] sm:$0xff]
  %v265 = vld [vmem:[%s1 + $0x798] sm:$0xff]
  %v266 = vld [vmem:[%s1 + $0x7a0] sm:$0xff]
  %v267 = vld [vmem:[%s1 + $0x7a8] sm:$0xff]
  %v268 = vld [vmem:[%s1 + $0x7b0] sm:$0xff]
  %v269 = vld [vmem:[%s1 + $0x7b8] sm:$0xff]
  %v270 = vld [vmem:[%s1 + $0x7c0] sm:$0xff]
  %v271 = vld [vmem:[%s1 + $0x7c8] sm:$0xff]
  %v272 = vld [vmem:[%s1 + $0x7d0] sm:$0xff]
  %v273 = vld [vmem:[%s1 + $0x7d8] sm:$0xff]
  %v274 = vld [vmem:[%s1 + $0x7e0] sm:$0xff]
  %v275 = vld [vmem:[%s1 + $0x7e8] sm:$0xff]
  %v276 = vld [vmem:[%s1 + $0x7f0] sm:$0xff]
  %v277 = vld [vmem:[%s1 + $0x7f8] sm:$0xff]
  %v278 = vld [vmem:[%s1 + $0x800] sm:$0xff]
  %v279 = vld [vmem:[%s1 + $0x808] sm:$0xff]
  %v280 = vld [vmem:[%s1 + $0x810] sm:$0xff]
  %v281 = vld [vmem:[%s1 + $0x818] sm:$0xff]
  %v282 = vld [vmem:[%s1 + $0x820] sm:$0xff]
  %v283 = vld [vmem:[%s1 + $0x828] sm:$0xff]
  %v284 = vld [vmem:[%s1 + $0x830] sm:$0xff]
  %v285 = vld [vmem:[%s1 + $0x838] sm:$0xff]
  %v286 = vld [vmem:[%s1 + $0x840] sm:$0xff]
  %v287 = vld [vmem:[%s1 + $0x848] sm:$0xff]
  %v288 = vld [vmem:[%s1 + $0x850] sm:$0xff]
  %v289 = vld [vmem:[%s1 + $0x858] sm:$0xff]
  %v290 = vld [vmem:[%s1 + $0x860] sm:$0xff]
  %v291 = vld [vmem:[%s1 + $0x868] sm:$0xff]
  %v292 = vld [vmem:[%s1 + $0x870] sm:$0xff]
  %v293 = vld [vmem:[%s1 + $0x878] sm:$0xff]
  %v294 = vld [vmem:[%s1 + $0x880] sm:$0xff]
  %v295 = vld [vmem:[%s1 + $0x888] sm:$0xff]
  %v296 = vld [vmem:[%s1 + $0x890] sm:$0xff]
  %v297 = vld [vmem:[%s1 + $0x898] sm:$0xff]
  %v298 = vld [vmem:[%s1 + $0x8a0] sm:$0xff]
  %v299 = vld [vmem:[%s1 + $0x8a8] sm:$0xff]
  %v300 = vld [vmem:[%s1 + $0x8b0] sm:$0xff]
  %v301 = vld [vmem:[%s1 + $0x8b8] sm:$0xff]
  %v302 = vld [vmem:[%s1 + $0x8c0] sm:$0xff]
  %v303 = vld [vmem:[%s1 + $0x8c8] sm:$0xff]
  %v304 = vld [vmem:[%s1 + $0x8d0] sm:$0xff]
  %v305 = vld [vmem:[%s1 + $0x8d8] sm:$0xff]
  %v306 = vld [vmem:[%s1 + $0x8e0] sm:$0xff]
  %v307 = vld [vmem:[%s1 + $0x8e8] sm:$0xff]
  %v308 = vld [vmem:[%s1 + $0x8f0] sm:$0xff]
  %v309 = vld [vmem:[%s1 + $0x8f8] sm:$0xff]
  %v310 = vld [vmem:[%s1 + $0x900] sm:$0xff]
  %v311 = vld [vmem:[%s1 + $0x908] sm:$0xff]
  %v312 = vld [vmem:[%s1 + $0x910] sm:$0xff]
  %v313 = vld [vmem:[%s1 + $0x918] sm:$0xff]
  %v314 = vld [vmem:[%s1 + $0x920] sm:$0xff]
  %v315 = vld [vmem:[%s1 + $0x928] sm:$0xff]
  %v316 = vld [vmem:[%s1 + $0x930] sm:$0xff]
  %v317 = vld [vmem:[%s1 + $0x938] sm:$0xff]
  %v318 = vld [vmem:[%s1 + $0x940] sm:$0xff]
  %v319 = vld [vmem:[%s1 + $0x948] sm:$0xff]
  %v320 = vld [vmem:[%s1 + $0x950] sm:$0xff]
  %v321 = vld [vmem:[%s1 + $0x958] sm:$0xff]
  %v322 = vld [vmem:[%s1 + $0x960] sm:$0xff]
  %v323 = vld [vmem:[%s1 + $0x968] sm:$0xff]
  %v324 = vld [vmem:[%s1 + $0x970] sm:$0xff]
  %v325 = vld [vmem:[%s1 + $0x978] sm:$0xff]
  %v326 = vld [vmem:[%s1 + $0x980] sm:$0xff]
  %v327 = vld [vmem:[%s1 + $0x988] sm:$0xff]
  %v328 = vld [vmem:[%s1 + $0x990] sm:$0xff]
  %v329 = vld [vmem:[%s1 + $0x998] sm:$0xff]
  %v330 = vld [vmem:[%s1 + $0x9a0] sm:$0xff]
  %v331 = vld [vmem:[%s1 + $0x9a8] sm:$0xff]
  %v332 = vld [vmem:[%s1 + $0x9b0] sm:$0xff]
  %v333 = vld [vmem:[%s1 + $0x9b8] sm:$0xff]
  %v334 = vld [vmem:[%s1 + $0x9c0] sm:$0xff]
  %v335 = vld [vmem:[%s1 + $0x9c8] sm:$0xff]
  %v336 = vld [vmem:[%s1 + $0x9d0] sm:$0xff]
  %v337 = vld [vmem:[%s1 + $0x9d8] sm:$0xff]
  %v338 = vld [vmem:[%s1 + $0x9e0] sm:$0xff]
  %v339 = vld [vmem:[%s1 + $0x9e8] sm:$0xff]
  %v340 = vld [vmem:[%s1 + $0x9f0] sm:$0xff]
  %v341 = vld [vmem:[%s1 + $0x9f8] sm:$0xff]
  %v342 = vld [vmem:[%s1 + $0xa00] sm:$0xff]
  %v343 = vld [vmem:[%s1 + $0xa08] sm:$0xff]
  %v344 = vld [vmem:[%s1 + $0xa10] sm:$0xff]
  %v345 = vld [vmem:[%s1 + $0xa18] sm:$0xff]
  %v346 = vld [vmem:[%s1 + $0xa20] sm:$0xff]
  %v347 = vld [vmem:[%s1 + $0xa28] sm:$0xff]
  %v348 = vld [vmem:[%s1 + $0xa30] sm:$0xff]
  %v349 = vld [vmem:[%s1 + $0xa38] sm:$0xff]
  %v350 = vld [vmem:[%s1 + $0xa40] sm:$0xff]
  %v351 = vld [vmem:[%s1 + $0xa48] sm:$0xff]
  %v352 = vld [vmem:[%s1 + $0xa50] sm:$0xff]
  %v353 = vld [vmem:[%s1 + $0xa58] sm:$0xff]
  %v354 = vld [vmem:[%s1 + $0xa60] sm:$0xff]
  %v355 = vld [vmem:[%s1 + $0xa68] sm:$0xff]
  %v356 = vld [vmem:[%s1 + $0xa70] sm:$0xff]
  %v357 = vld [vmem:[%s1 + $0xa78] sm:$0xff]
  %v358 = vld [vmem:[%s1 + $0xa80] sm:$0xff]
  %v359 = vld [vmem:[%s1 + $0xa88] sm:$0xff]
  %v360 = vld [vmem:[%s1 + $0xa90] sm:$0xff]
  %v361 = vld [vmem:[%s1 + $0xa98] sm:$0xff]
  %v362 = vld [vmem:[%s1 + $0xaa0] sm:$0xff]
  %v363 = vld [vmem:[%s1 + $0xaa8] sm:$0xff]
  %v364 = vld [vmem:[%s1 + $0xab0] sm:$0xff]
  %v365 = vld [vmem:[%s1 + $0xab8] sm:$0xff]
  %v366 = vld [vmem:[%s1 + $0xac0] sm:$0xff]
  %v367 = vld [vmem:[%s1 + $0xac8] sm:$0xff]
  %v368 = vld [vmem:[%s1 + $0xad0] sm:$0xff]
  %v369 = vld [vmem:[%s1 + $0xad8] sm:$0xff]
  %v370 = vld [vmem:[%s1 + $0xae0] sm:$0xff]
  %v371 = vld [vmem:[%s1 + $0xae8] sm:$0xff]
  %v372 = vld [vmem:[%s1 + $0xaf0] sm:$0xff]
  %v373 = vld [vmem:[%s1 + $0xaf8] sm:$0xff]
  %v374 = vld [vmem:[%s1 + $0xb00] sm:$0xff]
  %v375 = vld [vmem:[%s1 + $0xb08] sm:$0xff]
  %v376 = vld [vmem:[%s1 + $0xb10] sm:$0xff]
  %v377 = vld [vmem:[%s1 + $0xb18] sm:$0xff]
  %v378 = vld [vmem:[%s1 + $0xb20] sm:$0xff]
  %v379 = vld [vmem:[%s1 + $0xb28] sm:$0xff]
  %v380 = vld [vmem:[%s1 + $0xb30] sm:$0xff]
  %v381 = vld [vmem:[%s1 + $0xb38] sm:$0xff]
  %v382 = vld [vmem:[%s1 + $0xb40] sm:$0xff]
  %v383 = vld [vmem:[%s1 + $0xb48] sm:$0xff]
  %v384 = vld [vmem:[%s1 + $0xb50] sm:$0xff]
  %v385 = vld [vmem:[%s1 + $0xb58] sm:$0xff]
  %v386 = vld [vmem:[%s1 + $0xb60] sm:$0xff]
  %v387 = vld [vmem:[%s1 + $0xb68] sm:$0xff]
  %v388 = vld [vmem:[%s1 + $0xb70] sm:$0xff]
  %v389 = vld [vmem:[%s1 + $0xb78] sm:$0xff]
  %v390 = vld [vmem:[%s1 + $0xb80] sm:$0xff]
  %v391 = vld [vmem:[%s1 + $0xb88] sm:$0xff]
  %v392 = vld [vmem:[%s1 + $0xb90] sm:$0xff]
  %v393 = vld [vmem:[%s1 + $0xb98] sm:$0xff]
  %v394 = vld [vmem:[%s1 + $0xba0] sm:$0xff]
  %v395 = vld [vmem:[%s1 + $0xba8] sm:$0xff]
  %v396 = vld [vmem:[%s1 + $0xbb0] sm:$0xff]
  %v397 = vld [vmem:[%s1 + $0xbb8] sm:$0xff]
  %v398 = vld [vmem:[%s1 + $0xbc0] sm:$0xff]
  %v399 = vld [vmem:[%s1 + $0xbc8] sm:$0xff]
  %v400 = vld [vmem:[%s1 + $0xbd0] sm:$0xff]
  %v401 = vld [vmem:[%s1 + $0xbd8] sm:$0xff]
  %v402 = vld [vmem:[%s1 + $0xbe0] sm:$0xff]
  %v403 = vld [vmem:[%s1 + $0xbe8] sm:$0xff]
  %v404 = vld [vmem:[%s1 + $0xbf0] sm:$0xff]
  %v405 = vld [vmem:[%s1 + $0xbf8] sm:$0xff]
  %v406 = vld [vmem:[%s2] sm:$0x3]
  %v408 = vlaneseq
  %v409 = vshrl.u32 %v408, 7
  %v410 = vsub.s32 0, %v409
  %v411 = vrot.slane %v406, %v410
  %v412 = vlaneseq
  %v413 = vshrl.u32 %v412, 7
  %v414 = vsub.s32 1, %v413
  %v415 = vrot.slane %v406, %v414
  %v424 = vcombine.high %v16, %v16
  %v426 = vunpack.c.l.s4 1983009808
  %v427 = vunpack.c.0.s8 %v426
  %v428 = vlaneseq
  %v429 = vshrl.u32 %v428, 7
  %v430 = vsub.s32 %v427, %v429
  %v431 = vrot.slane %v16, %v430
  %v433 = vunpack.c.l.s4 1983009808
  %v434 = vunpack.c.0.s8 %v433
  %v435 = vlaneseq
  %v436 = vshrl.u32 %v435, 7
  %v437 = vsub.s32 %v434, %v436
  %v438 = vrot.slane %v424, %v437
  %v439 = vcombine.high %v431, %v431
  %v440 = vcombine.high %v438, %v438
  %v441 = vcombine.high %v17, %v17
  %v443 = vunpack.c.l.s4 1983009808
  %v444 = vunpack.c.0.s8 %v443
  %v445 = vlaneseq
  %v446 = vshrl.u32 %v445, 7
  %v447 = vsub.s32 %v444, %v446
  %v448 = vrot.slane %v17, %v447
  %v450 = vunpack.c.l.s4 1983009808
  %v451 = vunpack.c.0.s8 %v450
  %v452 = vlaneseq
  %v453 = vshrl.u32 %v452, 7
  %v454 = vsub.s32 %v451, %v453
  %v455 = vrot.slane %v441, %v454
  %v456 = vcombine.high %v448, %v448
  %v457 = vcombine.high %v455, %v455
  %v458 = vcombine.high %v18, %v18
  %v460 = vunpack.c.l.s4 1983009808
  %v461 = vunpack.c.0.s8 %v460
  %v462 = vlaneseq
  %v463 = vshrl.u32 %v462, 7
  %v464 = vsub.s32 %v461, %v463
  %v465 = vrot.slane %v18, %v464
  %v467 = vunpack.c.l.s4 1983009808
  %v468 = vunpack.c.0.s8 %v467
  %v469 = vlaneseq
  %v470 = vshrl.u32 %v469, 7
  %v471 = vsub.s32 %v468, %v470
  %v472 = vrot.slane %v458, %v471
  %v473 = vcombine.high %v465, %v465
  %v474 = vcombine.high %v472, %v472
  %v475 = vcombine.high %v19, %v19
  %v477 = vunpack.c.l.s4 1983009808
  %v478 = vunpack.c.0.s8 %v477
  %v479 = vlaneseq
  %v480 = vshrl.u32 %v479, 7
  %v481 = vsub.s32 %v478, %v480
  %v482 = vrot.slane %v19, %v481
  %v484 = vunpack.c.l.s4 1983009808
  %v485 = vunpack.c.0.s8 %v484
  %v486 = vlaneseq
  %v487 = vshrl.u32 %v486, 7
  %v488 = vsub.s32 %v485, %v487
  %v489 = vrot.slane %v475, %v488
  %v490 = vcombine.high %v482, %v482
  %v491 = vcombine.high %v489, %v489
  %v492 = vcombine.high %v20, %v20
  %v494 = vunpack.c.l.s4 1983009808
  %v495 = vunpack.c.0.s8 %v494
  %v496 = vlaneseq
  %v497 = vshrl.u32 %v496, 7
  %v498 = vsub.s32 %v495, %v497
  %v499 = vrot.slane %v20, %v498
  %v501 = vunpack.c.l.s4 1983009808
  %v502 = vunpack.c.0.s8 %v501
  %v503 = vlaneseq
  %v504 = vshrl.u32 %v503, 7
  %v505 = vsub.s32 %v502, %v504
  %v506 = vrot.slane %v492, %v505
  %v507 = vcombine.high %v499, %v499
  %v508 = vcombine.high %v506, %v506
  %v509 = vcombine.high %v21, %v21
  %v511 = vunpack.c.l.s4 1983009808
  %v512 = vunpack.c.0.s8 %v511
  %v513 = vlaneseq
  %v514 = vshrl.u32 %v513, 7
  %v515 = vsub.s32 %v512, %v514
  %v516 = vrot.slane %v21, %v515
  %v518 = vunpack.c.l.s4 1983009808
  %v519 = vunpack.c.0.s8 %v518
  %v520 = vlaneseq
  %v521 = vshrl.u32 %v520, 7
  %v522 = vsub.s32 %v519, %v521
  %v523 = vrot.slane %v509, %v522
  %v524 = vcombine.high %v516, %v516
  %v525 = vcombine.high %v523, %v523
  %v934 = vunpack.c.l.b16 %v22
  %v935 = vunpack.c.h.b16 %v22
  %v936 = vunpack.c.l.b16 %v23
  %v937 = vunpack.c.h.b16 %v23
  %v938 = vunpack.c.l.b16 %v24
  %v939 = vunpack.c.h.b16 %v24
  %v940 = vunpack.c.l.b16 %v25
  %v941 = vunpack.c.h.b16 %v25
  %v942 = vunpack.c.l.b16 %v26
  %v943 = vunpack.c.h.b16 %v26
  %v944 = vunpack.c.l.b16 %v27
  %v945 = vunpack.c.h.b16 %v27
  %v946 = vunpack.c.l.b16 %v28
  %v947 = vunpack.c.h.b16 %v28
  %v948 = vunpack.c.l.b16 %v29
  %v949 = vunpack.c.h.b16 %v29
  %v950 = vunpack.c.l.b16 %v30
  %v951 = vunpack.c.h.b16 %v30
  %v952 = vunpack.c.l.b16 %v31
  %v953 = vunpack.c.h.b16 %v31
  %v954 = vunpack.c.l.b16 %v32
  %v955 = vunpack.c.h.b16 %v32
  %v956 = vunpack.c.l.b16 %v33
  %v957 = vunpack.c.h.b16 %v33
  %v958 = vunpack.c.l.b16 %v34
  %v959 = vunpack.c.h.b16 %v34
  %v960 = vunpack.c.l.b16 %v35
  %v961 = vunpack.c.h.b16 %v35
  %v962 = vunpack.c.l.b16 %v36
  %v963 = vunpack.c.h.b16 %v36
  %v964 = vunpack.c.l.b16 %v37
  %v965 = vunpack.c.h.b16 %v37
  %v966 = vunpack.c.l.b16 %v38
  %v967 = vunpack.c.h.b16 %v38
  %v968 = vunpack.c.l.b16 %v39
  %v969 = vunpack.c.h.b16 %v39
  %v970 = vunpack.c.l.b16 %v40
  %v971 = vunpack.c.h.b16 %v40
  %v972 = vunpack.c.l.b16 %v41
  %v973 = vunpack.c.h.b16 %v41
  %v974 = vunpack.c.l.b16 %v42
  %v975 = vunpack.c.h.b16 %v42
  %v976 = vunpack.c.l.b16 %v43
  %v977 = vunpack.c.h.b16 %v43
  %v978 = vunpack.c.l.b16 %v44
  %v979 = vunpack.c.h.b16 %v44
  %v980 = vunpack.c.l.b16 %v45
  %v981 = vunpack.c.h.b16 %v45
  %v982 = vunpack.c.l.b16 %v46
  %v983 = vunpack.c.h.b16 %v46
  %v984 = vunpack.c.l.b16 %v47
  %v985 = vunpack.c.h.b16 %v47
  %v986 = vunpack.c.l.b16 %v48
  %v987 = vunpack.c.h.b16 %v48
  %v988 = vunpack.c.l.b16 %v49
  %v989 = vunpack.c.h.b16 %v49
  %v990 = vunpack.c.l.b16 %v50
  %v991 = vunpack.c.h.b16 %v50
  %v992 = vunpack.c.l.b16 %v51
  %v993 = vunpack.c.h.b16 %v51
  %v994 = vunpack.c.l.b16 %v52
  %v995 = vunpack.c.h.b16 %v52
  %v996 = vunpack.c.l.b16 %v53
  %v997 = vunpack.c.h.b16 %v53
  %v998 = vunpack.c.l.b16 %v54
  %v999 = vunpack.c.h.b16 %v54
  %v1000 = vunpack.c.l.b16 %v55
  %v1001 = vunpack.c.h.b16 %v55
  %v1002 = vunpack.c.l.b16 %v56
  %v1003 = vunpack.c.h.b16 %v56
  %v1004 = vunpack.c.l.b16 %v57
  %v1005 = vunpack.c.h.b16 %v57
  %v1006 = vunpack.c.l.b16 %v58
  %v1007 = vunpack.c.h.b16 %v58
  %v1008 = vunpack.c.l.b16 %v59
  %v1009 = vunpack.c.h.b16 %v59
  %v1010 = vunpack.c.l.b16 %v60
  %v1011 = vunpack.c.h.b16 %v60
  %v1012 = vunpack.c.l.b16 %v61
  %v1013 = vunpack.c.h.b16 %v61
  %v1014 = vunpack.c.l.b16 %v62
  %v1015 = vunpack.c.h.b16 %v62
  %v1016 = vunpack.c.l.b16 %v63
  %v1017 = vunpack.c.h.b16 %v63
  %v1018 = vunpack.c.l.b16 %v64
  %v1019 = vunpack.c.h.b16 %v64
  %v1020 = vunpack.c.l.b16 %v65
  %v1021 = vunpack.c.h.b16 %v65
  %v1022 = vunpack.c.l.b16 %v66
  %v1023 = vunpack.c.h.b16 %v66
  %v1024 = vunpack.c.l.b16 %v67
  %v1025 = vunpack.c.h.b16 %v67
  %v1026 = vunpack.c.l.b16 %v68
  %v1027 = vunpack.c.h.b16 %v68
  %v1028 = vunpack.c.l.b16 %v69
  %v1029 = vunpack.c.h.b16 %v69
  %v1030 = vunpack.c.l.b16 %v70
  %v1031 = vunpack.c.h.b16 %v70
  %v1032 = vunpack.c.l.b16 %v71
  %v1033 = vunpack.c.h.b16 %v71
  %v1034 = vunpack.c.l.b16 %v72
  %v1035 = vunpack.c.h.b16 %v72
  %v1036 = vunpack.c.l.b16 %v73
  %v1037 = vunpack.c.h.b16 %v73
  %v1038 = vunpack.c.l.b16 %v74
  %v1039 = vunpack.c.h.b16 %v74
  %v1040 = vunpack.c.l.b16 %v75
  %v1041 = vunpack.c.h.b16 %v75
  %v1042 = vunpack.c.l.b16 %v76
  %v1043 = vunpack.c.h.b16 %v76
  %v1044 = vunpack.c.l.b16 %v77
  %v1045 = vunpack.c.h.b16 %v77
  %v1046 = vunpack.c.l.b16 %v78
  %v1047 = vunpack.c.h.b16 %v78
  %v1048 = vunpack.c.l.b16 %v79
  %v1049 = vunpack.c.h.b16 %v79
  %v1050 = vunpack.c.l.b16 %v80
  %v1051 = vunpack.c.h.b16 %v80
  %v1052 = vunpack.c.l.b16 %v81
  %v1053 = vunpack.c.h.b16 %v81
  %v1054 = vunpack.c.l.b16 %v82
  %v1055 = vunpack.c.h.b16 %v82
  %v1056 = vunpack.c.l.b16 %v83
  %v1057 = vunpack.c.h.b16 %v83
  %v1058 = vunpack.c.l.b16 %v84
  %v1059 = vunpack.c.h.b16 %v84
  %v1060 = vunpack.c.l.b16 %v85
  %v1061 = vunpack.c.h.b16 %v85
  %v1062 = vunpack.c.l.b16 %v86
  %v1063 = vunpack.c.h.b16 %v86
  %v1064 = vunpack.c.l.b16 %v87
  %v1065 = vunpack.c.h.b16 %v87
  %v1066 = vunpack.c.l.b16 %v88
  %v1067 = vunpack.c.h.b16 %v88
  %v1068 = vunpack.c.l.b16 %v89
  %v1069 = vunpack.c.h.b16 %v89
  %v1070 = vunpack.c.l.b16 %v90
  %v1071 = vunpack.c.h.b16 %v90
  %v1072 = vunpack.c.l.b16 %v91
  %v1073 = vunpack.c.h.b16 %v91
  %v1074 = vunpack.c.l.b16 %v92
  %v1075 = vunpack.c.h.b16 %v92
  %v1076 = vunpack.c.l.b16 %v93
  %v1077 = vunpack.c.h.b16 %v93
  %v1078 = vunpack.c.l.b16 %v94
  %v1079 = vunpack.c.h.b16 %v94
  %v1080 = vunpack.c.l.b16 %v95
  %v1081 = vunpack.c.h.b16 %v95
  %v1082 = vunpack.c.l.b16 %v96
  %v1083 = vunpack.c.h.b16 %v96
  %v1084 = vunpack.c.l.b16 %v97
  %v1085 = vunpack.c.h.b16 %v97
  %v1086 = vunpack.c.l.b16 %v98
  %v1087 = vunpack.c.h.b16 %v98
  %v1088 = vunpack.c.l.b16 %v99
  %v1089 = vunpack.c.h.b16 %v99
  %v1090 = vunpack.c.l.b16 %v100
  %v1091 = vunpack.c.h.b16 %v100
  %v1092 = vunpack.c.l.b16 %v101
  %v1093 = vunpack.c.h.b16 %v101
  %v1094 = vunpack.c.l.b16 %v102
  %v1095 = vunpack.c.h.b16 %v102
  %v1096 = vunpack.c.l.b16 %v103
  %v1097 = vunpack.c.h.b16 %v103
  %v1098 = vunpack.c.l.b16 %v104
  %v1099 = vunpack.c.h.b16 %v104
  %v1100 = vunpack.c.l.b16 %v105
  %v1101 = vunpack.c.h.b16 %v105
  %v1102 = vunpack.c.l.b16 %v106
  %v1103 = vunpack.c.h.b16 %v106
  %v1104 = vunpack.c.l.b16 %v107
  %v1105 = vunpack.c.h.b16 %v107
  %v1106 = vunpack.c.l.b16 %v108
  %v1107 = vunpack.c.h.b16 %v108
  %v1108 = vunpack.c.l.b16 %v109
  %v1109 = vunpack.c.h.b16 %v109
  %v1110 = vunpack.c.l.b16 %v110
  %v1111 = vunpack.c.h.b16 %v110
  %v1112 = vunpack.c.l.b16 %v111
  %v1113 = vunpack.c.h.b16 %v111
  %v1114 = vunpack.c.l.b16 %v112
  %v1115 = vunpack.c.h.b16 %v112
  %v1116 = vunpack.c.l.b16 %v113
  %v1117 = vunpack.c.h.b16 %v113
  %v1118 = vunpack.c.l.b16 %v114
  %v1119 = vunpack.c.h.b16 %v114
  %v1120 = vunpack.c.l.b16 %v115
  %v1121 = vunpack.c.h.b16 %v115
  %v1122 = vunpack.c.l.b16 %v116
  %v1123 = vunpack.c.h.b16 %v116
  %v1124 = vunpack.c.l.b16 %v117
  %v1125 = vunpack.c.h.b16 %v117
  %v1126 = vunpack.c.l.b16 %v118
  %v1127 = vunpack.c.h.b16 %v118
  %v1128 = vunpack.c.l.b16 %v119
  %v1129 = vunpack.c.h.b16 %v119
  %v1130 = vunpack.c.l.b16 %v120
  %v1131 = vunpack.c.h.b16 %v120
  %v1132 = vunpack.c.l.b16 %v121
  %v1133 = vunpack.c.h.b16 %v121
  %v1134 = vunpack.c.l.b16 %v122
  %v1135 = vunpack.c.h.b16 %v122
  %v1136 = vunpack.c.l.b16 %v123
  %v1137 = vunpack.c.h.b16 %v123
  %v1138 = vunpack.c.l.b16 %v124
  %v1139 = vunpack.c.h.b16 %v124
  %v1140 = vunpack.c.l.b16 %v125
  %v1141 = vunpack.c.h.b16 %v125
  %v1142 = vunpack.c.l.b16 %v126
  %v1143 = vunpack.c.h.b16 %v126
  %v1144 = vunpack.c.l.b16 %v127
  %v1145 = vunpack.c.h.b16 %v127
  %v1146 = vunpack.c.l.b16 %v128
  %v1147 = vunpack.c.h.b16 %v128
  %v1148 = vunpack.c.l.b16 %v129
  %v1149 = vunpack.c.h.b16 %v129
  %v1150 = vunpack.c.l.b16 %v130
  %v1151 = vunpack.c.h.b16 %v130
  %v1152 = vunpack.c.l.b16 %v131
  %v1153 = vunpack.c.h.b16 %v131
  %v1154 = vunpack.c.l.b16 %v132
  %v1155 = vunpack.c.h.b16 %v132
  %v1156 = vunpack.c.l.b16 %v133
  %v1157 = vunpack.c.h.b16 %v133
  %v1158 = vunpack.c.l.b16 %v134
  %v1159 = vunpack.c.h.b16 %v134
  %v1160 = vunpack.c.l.b16 %v135
  %v1161 = vunpack.c.h.b16 %v135
  %v1162 = vunpack.c.l.b16 %v136
  %v1163 = vunpack.c.h.b16 %v136
  %v1164 = vunpack.c.l.b16 %v137
  %v1165 = vunpack.c.h.b16 %v137
  %v1166 = vunpack.c.l.b16 %v138
  %v1167 = vunpack.c.h.b16 %v138
  %v1168 = vunpack.c.l.b16 %v139
  %v1169 = vunpack.c.h.b16 %v139
  %v1170 = vunpack.c.l.b16 %v140
  %v1171 = vunpack.c.h.b16 %v140
  %v1172 = vunpack.c.l.b16 %v141
  %v1173 = vunpack.c.h.b16 %v141
  %v1174 = vunpack.c.l.b16 %v142
  %v1175 = vunpack.c.h.b16 %v142
  %v1176 = vunpack.c.l.b16 %v143
  %v1177 = vunpack.c.h.b16 %v143
  %v1178 = vunpack.c.l.b16 %v144
  %v1179 = vunpack.c.h.b16 %v144
  %v1180 = vunpack.c.l.b16 %v145
  %v1181 = vunpack.c.h.b16 %v145
  %v1182 = vunpack.c.l.b16 %v146
  %v1183 = vunpack.c.h.b16 %v146
  %v1184 = vunpack.c.l.b16 %v147
  %v1185 = vunpack.c.h.b16 %v147
  %v1186 = vunpack.c.l.b16 %v148
  %v1187 = vunpack.c.h.b16 %v148
  %v1188 = vunpack.c.l.b16 %v149
  %v1189 = vunpack.c.h.b16 %v149
  %v1190 = vunpack.c.l.b16 %v150
  %v1191 = vunpack.c.h.b16 %v150
  %v1192 = vunpack.c.l.b16 %v151
  %v1193 = vunpack.c.h.b16 %v151
  %v1194 = vunpack.c.l.b16 %v152
  %v1195 = vunpack.c.h.b16 %v152
  %v1196 = vunpack.c.l.b16 %v153
  %v1197 = vunpack.c.h.b16 %v153
  %v1198 = vunpack.c.l.b16 %v154
  %v1199 = vunpack.c.h.b16 %v154
  %v1200 = vunpack.c.l.b16 %v155
  %v1201 = vunpack.c.h.b16 %v155
  %v1202 = vunpack.c.l.b16 %v156
  %v1203 = vunpack.c.h.b16 %v156
  %v1204 = vunpack.c.l.b16 %v157
  %v1205 = vunpack.c.h.b16 %v157
  %v1206 = vunpack.c.l.b16 %v158
  %v1207 = vunpack.c.h.b16 %v158
  %v1208 = vunpack.c.l.b16 %v159
  %v1209 = vunpack.c.h.b16 %v159
  %v1210 = vunpack.c.l.b16 %v160
  %v1211 = vunpack.c.h.b16 %v160
  %v1212 = vunpack.c.l.b16 %v161
  %v1213 = vunpack.c.h.b16 %v161
  %v1214 = vunpack.c.l.b16 %v162
  %v1215 = vunpack.c.h.b16 %v162
  %v1216 = vunpack.c.l.b16 %v163
  %v1217 = vunpack.c.h.b16 %v163
  %v1218 = vunpack.c.l.b16 %v164
  %v1219 = vunpack.c.h.b16 %v164
  %v1220 = vunpack.c.l.b16 %v165
  %v1221 = vunpack.c.h.b16 %v165
  %v1222 = vunpack.c.l.b16 %v166
  %v1223 = vunpack.c.h.b16 %v166
  %v1224 = vunpack.c.l.b16 %v167
  %v1225 = vunpack.c.h.b16 %v167
  %v1226 = vunpack.c.l.b16 %v168
  %v1227 = vunpack.c.h.b16 %v168
  %v1228 = vunpack.c.l.b16 %v169
  %v1229 = vunpack.c.h.b16 %v169
  %v1230 = vunpack.c.l.b16 %v170
  %v1231 = vunpack.c.h.b16 %v170
  %v1232 = vunpack.c.l.b16 %v171
  %v1233 = vunpack.c.h.b16 %v171
  %v1234 = vunpack.c.l.b16 %v172
  %v1235 = vunpack.c.h.b16 %v172
  %v1236 = vunpack.c.l.b16 %v173
  %v1237 = vunpack.c.h.b16 %v173
  %v1238 = vunpack.c.l.b16 %v174
  %v1239 = vunpack.c.h.b16 %v174
  %v1240 = vunpack.c.l.b16 %v175
  %v1241 = vunpack.c.h.b16 %v175
  %v1242 = vunpack.c.l.b16 %v176
  %v1243 = vunpack.c.h.b16 %v176
  %v1244 = vunpack.c.l.b16 %v177
  %v1245 = vunpack.c.h.b16 %v177
  %v1246 = vunpack.c.l.b16 %v178
  %v1247 = vunpack.c.h.b16 %v178
  %v1248 = vunpack.c.l.b16 %v179
  %v1249 = vunpack.c.h.b16 %v179
  %v1250 = vunpack.c.l.b16 %v180
  %v1251 = vunpack.c.h.b16 %v180
  %v1252 = vunpack.c.l.b16 %v181
  %v1253 = vunpack.c.h.b16 %v181
  %v1254 = vunpack.c.l.b16 %v182
  %v1255 = vunpack.c.h.b16 %v182
  %v1256 = vunpack.c.l.b16 %v183
  %v1257 = vunpack.c.h.b16 %v183
  %v1258 = vunpack.c.l.b16 %v184
  %v1259 = vunpack.c.h.b16 %v184
  %v1260 = vunpack.c.l.b16 %v185
  %v1261 = vunpack.c.h.b16 %v185
  %v1262 = vunpack.c.l.b16 %v186
  %v1263 = vunpack.c.h.b16 %v186
  %v1264 = vunpack.c.l.b16 %v187
  %v1265 = vunpack.c.h.b16 %v187
  %v1266 = vunpack.c.l.b16 %v188
  %v1267 = vunpack.c.h.b16 %v188
  %v1268 = vunpack.c.l.b16 %v189
  %v1269 = vunpack.c.h.b16 %v189
  %v1270 = vunpack.c.l.b16 %v190
  %v1271 = vunpack.c.h.b16 %v190
  %v1272 = vunpack.c.l.b16 %v191
  %v1273 = vunpack.c.h.b16 %v191
  %v1274 = vunpack.c.l.b16 %v192
  %v1275 = vunpack.c.h.b16 %v192
  %v1276 = vunpack.c.l.b16 %v193
  %v1277 = vunpack.c.h.b16 %v193
  %v1278 = vunpack.c.l.b16 %v194
  %v1279 = vunpack.c.h.b16 %v194
  %v1280 = vunpack.c.l.b16 %v195
  %v1281 = vunpack.c.h.b16 %v195
  %v1282 = vunpack.c.l.b16 %v196
  %v1283 = vunpack.c.h.b16 %v196
  %v1284 = vunpack.c.l.b16 %v197
  %v1285 = vunpack.c.h.b16 %v197
  %v1286 = vunpack.c.l.b16 %v198
  %v1287 = vunpack.c.h.b16 %v198
  %v1288 = vunpack.c.l.b16 %v199
  %v1289 = vunpack.c.h.b16 %v199
  %v1290 = vunpack.c.l.b16 %v200
  %v1291 = vunpack.c.h.b16 %v200
  %v1292 = vunpack.c.l.b16 %v201
  %v1293 = vunpack.c.h.b16 %v201
  %v1294 = vunpack.c.l.b16 %v202
  %v1295 = vunpack.c.h.b16 %v202
  %v1296 = vunpack.c.l.b16 %v203
  %v1297 = vunpack.c.h.b16 %v203
  %v1298 = vunpack.c.l.b16 %v204
  %v1299 = vunpack.c.h.b16 %v204
  %v1300 = vunpack.c.l.b16 %v205
  %v1301 = vunpack.c.h.b16 %v205
  %v1302 = vunpack.c.l.b16 %v206
  %v1303 = vunpack.c.h.b16 %v206
  %v1304 = vunpack.c.l.b16 %v207
  %v1305 = vunpack.c.h.b16 %v207
  %v1306 = vunpack.c.l.b16 %v208
  %v1307 = vunpack.c.h.b16 %v208
  %v1308 = vunpack.c.l.b16 %v209
  %v1309 = vunpack.c.h.b16 %v209
  %v1310 = vunpack.c.l.b16 %v210
  %v1311 = vunpack.c.h.b16 %v210
  %v1312 = vunpack.c.l.b16 %v211
  %v1313 = vunpack.c.h.b16 %v211
  %v1314 = vunpack.c.l.b16 %v212
  %v1315 = vunpack.c.h.b16 %v212
  %v1316 = vunpack.c.l.b16 %v213
  %v1317 = vunpack.c.h.b16 %v213
  %v1318 = vunpack.c.l.b16 %v214
  %v1319 = vunpack.c.h.b16 %v214
  %v1320 = vunpack.c.l.b16 %v215
  %v1321 = vunpack.c.h.b16 %v215
  %v1322 = vunpack.c.l.b16 %v216
  %v1323 = vunpack.c.h.b16 %v216
  %v1324 = vunpack.c.l.b16 %v217
  %v1325 = vunpack.c.h.b16 %v217
  %v1326 = vunpack.c.l.b16 %v218
  %v1327 = vunpack.c.h.b16 %v218
  %v1328 = vunpack.c.l.b16 %v219
  %v1329 = vunpack.c.h.b16 %v219
  %v1330 = vunpack.c.l.b16 %v220
  %v1331 = vunpack.c.h.b16 %v220
  %v1332 = vunpack.c.l.b16 %v221
  %v1333 = vunpack.c.h.b16 %v221
  %v1334 = vunpack.c.l.b16 %v222
  %v1335 = vunpack.c.h.b16 %v222
  %v1336 = vunpack.c.l.b16 %v223
  %v1337 = vunpack.c.h.b16 %v223
  %v1338 = vunpack.c.l.b16 %v224
  %v1339 = vunpack.c.h.b16 %v224
  %v1340 = vunpack.c.l.b16 %v225
  %v1341 = vunpack.c.h.b16 %v225
  %v1342 = vunpack.c.l.b16 %v226
  %v1343 = vunpack.c.h.b16 %v226
  %v1344 = vunpack.c.l.b16 %v227
  %v1345 = vunpack.c.h.b16 %v227
  %v1346 = vunpack.c.l.b16 %v228
  %v1347 = vunpack.c.h.b16 %v228
  %v1348 = vunpack.c.l.b16 %v229
  %v1349 = vunpack.c.h.b16 %v229
  %v1350 = vunpack.c.l.b16 %v230
  %v1351 = vunpack.c.h.b16 %v230
  %v1352 = vunpack.c.l.b16 %v231
  %v1353 = vunpack.c.h.b16 %v231
  %v1354 = vunpack.c.l.b16 %v232
  %v1355 = vunpack.c.h.b16 %v232
  %v1356 = vunpack.c.l.b16 %v233
  %v1357 = vunpack.c.h.b16 %v233
  %v1358 = vunpack.c.l.b16 %v234
  %v1359 = vunpack.c.h.b16 %v234
  %v1360 = vunpack.c.l.b16 %v235
  %v1361 = vunpack.c.h.b16 %v235
  %v1362 = vunpack.c.l.b16 %v236
  %v1363 = vunpack.c.h.b16 %v236
  %v1364 = vunpack.c.l.b16 %v237
  %v1365 = vunpack.c.h.b16 %v237
  %v1366 = vunpack.c.l.b16 %v238
  %v1367 = vunpack.c.h.b16 %v238
  %v1368 = vunpack.c.l.b16 %v239
  %v1369 = vunpack.c.h.b16 %v239
  %v1370 = vunpack.c.l.b16 %v240
  %v1371 = vunpack.c.h.b16 %v240
  %v1372 = vunpack.c.l.b16 %v241
  %v1373 = vunpack.c.h.b16 %v241
  %v1374 = vunpack.c.l.b16 %v242
  %v1375 = vunpack.c.h.b16 %v242
  %v1376 = vunpack.c.l.b16 %v243
  %v1377 = vunpack.c.h.b16 %v243
  %v1378 = vunpack.c.l.b16 %v244
  %v1379 = vunpack.c.h.b16 %v244
  %v1380 = vunpack.c.l.b16 %v245
  %v1381 = vunpack.c.h.b16 %v245
  %v1382 = vunpack.c.l.b16 %v246
  %v1383 = vunpack.c.h.b16 %v246
  %v1384 = vunpack.c.l.b16 %v247
  %v1385 = vunpack.c.h.b16 %v247
  %v1386 = vunpack.c.l.b16 %v248
  %v1387 = vunpack.c.h.b16 %v248
  %v1388 = vunpack.c.l.b16 %v249
  %v1389 = vunpack.c.h.b16 %v249
  %v1390 = vunpack.c.l.b16 %v250
  %v1391 = vunpack.c.h.b16 %v250
  %v1392 = vunpack.c.l.b16 %v251
  %v1393 = vunpack.c.h.b16 %v251
  %v1394 = vunpack.c.l.b16 %v252
  %v1395 = vunpack.c.h.b16 %v252
  %v1396 = vunpack.c.l.b16 %v253
  %v1397 = vunpack.c.h.b16 %v253
  %v1398 = vunpack.c.l.b16 %v254
  %v1399 = vunpack.c.h.b16 %v254
  %v1400 = vunpack.c.l.b16 %v255
  %v1401 = vunpack.c.h.b16 %v255
  %v1402 = vunpack.c.l.b16 %v256
  %v1403 = vunpack.c.h.b16 %v256
  %v1404 = vunpack.c.l.b16 %v257
  %v1405 = vunpack.c.h.b16 %v257
  %v1406 = vunpack.c.l.b16 %v258
  %v1407 = vunpack.c.h.b16 %v258
  %v1408 = vunpack.c.l.b16 %v259
  %v1409 = vunpack.c.h.b16 %v259
  %v1410 = vunpack.c.l.b16 %v260
  %v1411 = vunpack.c.h.b16 %v260
  %v1412 = vunpack.c.l.b16 %v261
  %v1413 = vunpack.c.h.b16 %v261
  %v1414 = vunpack.c.l.b16 %v262
  %v1415 = vunpack.c.h.b16 %v262
  %v1416 = vunpack.c.l.b16 %v263
  %v1417 = vunpack.c.h.b16 %v263
  %v1418 = vunpack.c.l.b16 %v264
  %v1419 = vunpack.c.h.b16 %v264
  %v1420 = vunpack.c.l.b16 %v265
  %v1421 = vunpack.c.h.b16 %v265
  %v1422 = vunpack.c.l.b16 %v266
  %v1423 = vunpack.c.h.b16 %v266
  %v1424 = vunpack.c.l.b16 %v267
  %v1425 = vunpack.c.h.b16 %v267
  %v1426 = vunpack.c.l.b16 %v268
  %v1427 = vunpack.c.h.b16 %v268
  %v1428 = vunpack.c.l.b16 %v269
  %v1429 = vunpack.c.h.b16 %v269
  %v1430 = vunpack.c.l.b16 %v270
  %v1431 = vunpack.c.h.b16 %v270
  %v1432 = vunpack.c.l.b16 %v271
  %v1433 = vunpack.c.h.b16 %v271
  %v1434 = vunpack.c.l.b16 %v272
  %v1435 = vunpack.c.h.b16 %v272
  %v1436 = vunpack.c.l.b16 %v273
  %v1437 = vunpack.c.h.b16 %v273
  %v1438 = vunpack.c.l.b16 %v274
  %v1439 = vunpack.c.h.b16 %v274
  %v1440 = vunpack.c.l.b16 %v275
  %v1441 = vunpack.c.h.b16 %v275
  %v1442 = vunpack.c.l.b16 %v276
  %v1443 = vunpack.c.h.b16 %v276
  %v1444 = vunpack.c.l.b16 %v277
  %v1445 = vunpack.c.h.b16 %v277
  %v1446 = vunpack.c.l.b16 %v278
  %v1447 = vunpack.c.h.b16 %v278
  %v1448 = vunpack.c.l.b16 %v279
  %v1449 = vunpack.c.h.b16 %v279
  %v1450 = vunpack.c.l.b16 %v280
  %v1451 = vunpack.c.h.b16 %v280
  %v1452 = vunpack.c.l.b16 %v281
  %v1453 = vunpack.c.h.b16 %v281
  %v1454 = vunpack.c.l.b16 %v282
  %v1455 = vunpack.c.h.b16 %v282
  %v1456 = vunpack.c.l.b16 %v283
  %v1457 = vunpack.c.h.b16 %v283
  %v1458 = vunpack.c.l.b16 %v284
  %v1459 = vunpack.c.h.b16 %v284
  %v1460 = vunpack.c.l.b16 %v285
  %v1461 = vunpack.c.h.b16 %v285
  %v1462 = vunpack.c.l.b16 %v286
  %v1463 = vunpack.c.h.b16 %v286
  %v1464 = vunpack.c.l.b16 %v287
  %v1465 = vunpack.c.h.b16 %v287
  %v1466 = vunpack.c.l.b16 %v288
  %v1467 = vunpack.c.h.b16 %v288
  %v1468 = vunpack.c.l.b16 %v289
  %v1469 = vunpack.c.h.b16 %v289
  %v1470 = vunpack.c.l.b16 %v290
  %v1471 = vunpack.c.h.b16 %v290
  %v1472 = vunpack.c.l.b16 %v291
  %v1473 = vunpack.c.h.b16 %v291
  %v1474 = vunpack.c.l.b16 %v292
  %v1475 = vunpack.c.h.b16 %v292
  %v1476 = vunpack.c.l.b16 %v293
  %v1477 = vunpack.c.h.b16 %v293
  %v1478 = vunpack.c.l.b16 %v294
  %v1479 = vunpack.c.h.b16 %v294
  %v1480 = vunpack.c.l.b16 %v295
  %v1481 = vunpack.c.h.b16 %v295
  %v1482 = vunpack.c.l.b16 %v296
  %v1483 = vunpack.c.h.b16 %v296
  %v1484 = vunpack.c.l.b16 %v297
  %v1485 = vunpack.c.h.b16 %v297
  %v1486 = vunpack.c.l.b16 %v298
  %v1487 = vunpack.c.h.b16 %v298
  %v1488 = vunpack.c.l.b16 %v299
  %v1489 = vunpack.c.h.b16 %v299
  %v1490 = vunpack.c.l.b16 %v300
  %v1491 = vunpack.c.h.b16 %v300
  %v1492 = vunpack.c.l.b16 %v301
  %v1493 = vunpack.c.h.b16 %v301
  %v1494 = vunpack.c.l.b16 %v302
  %v1495 = vunpack.c.h.b16 %v302
  %v1496 = vunpack.c.l.b16 %v303
  %v1497 = vunpack.c.h.b16 %v303
  %v1498 = vunpack.c.l.b16 %v304
  %v1499 = vunpack.c.h.b16 %v304
  %v1500 = vunpack.c.l.b16 %v305
  %v1501 = vunpack.c.h.b16 %v305
  %v1502 = vunpack.c.l.b16 %v306
  %v1503 = vunpack.c.h.b16 %v306
  %v1504 = vunpack.c.l.b16 %v307
  %v1505 = vunpack.c.h.b16 %v307
  %v1506 = vunpack.c.l.b16 %v308
  %v1507 = vunpack.c.h.b16 %v308
  %v1508 = vunpack.c.l.b16 %v309
  %v1509 = vunpack.c.h.b16 %v309
  %v1510 = vunpack.c.l.b16 %v310
  %v1511 = vunpack.c.h.b16 %v310
  %v1512 = vunpack.c.l.b16 %v311
  %v1513 = vunpack.c.h.b16 %v311
  %v1514 = vunpack.c.l.b16 %v312
  %v1515 = vunpack.c.h.b16 %v312
  %v1516 = vunpack.c.l.b16 %v313
  %v1517 = vunpack.c.h.b16 %v313
  %v1518 = vunpack.c.l.b16 %v314
  %v1519 = vunpack.c.h.b16 %v314
  %v1520 = vunpack.c.l.b16 %v315
  %v1521 = vunpack.c.h.b16 %v315
  %v1522 = vunpack.c.l.b16 %v316
  %v1523 = vunpack.c.h.b16 %v316
  %v1524 = vunpack.c.l.b16 %v317
  %v1525 = vunpack.c.h.b16 %v317
  %v1526 = vunpack.c.l.b16 %v318
  %v1527 = vunpack.c.h.b16 %v318
  %v1528 = vunpack.c.l.b16 %v319
  %v1529 = vunpack.c.h.b16 %v319
  %v1530 = vunpack.c.l.b16 %v320
  %v1531 = vunpack.c.h.b16 %v320
  %v1532 = vunpack.c.l.b16 %v321
  %v1533 = vunpack.c.h.b16 %v321
  %v1534 = vunpack.c.l.b16 %v322
  %v1535 = vunpack.c.h.b16 %v322
  %v1536 = vunpack.c.l.b16 %v323
  %v1537 = vunpack.c.h.b16 %v323
  %v1538 = vunpack.c.l.b16 %v324
  %v1539 = vunpack.c.h.b16 %v324
  %v1540 = vunpack.c.l.b16 %v325
  %v1541 = vunpack.c.h.b16 %v325
  %v1542 = vunpack.c.l.b16 %v326
  %v1543 = vunpack.c.h.b16 %v326
  %v1544 = vunpack.c.l.b16 %v327
  %v1545 = vunpack.c.h.b16 %v327
  %v1546 = vunpack.c.l.b16 %v328
  %v1547 = vunpack.c.h.b16 %v328
  %v1548 = vunpack.c.l.b16 %v329
  %v1549 = vunpack.c.h.b16 %v329
  %v1550 = vunpack.c.l.b16 %v330
  %v1551 = vunpack.c.h.b16 %v330
  %v1552 = vunpack.c.l.b16 %v331
  %v1553 = vunpack.c.h.b16 %v331
  %v1554 = vunpack.c.l.b16 %v332
  %v1555 = vunpack.c.h.b16 %v332
  %v1556 = vunpack.c.l.b16 %v333
  %v1557 = vunpack.c.h.b16 %v333
  %v1558 = vunpack.c.l.b16 %v334
  %v1559 = vunpack.c.h.b16 %v334
  %v1560 = vunpack.c.l.b16 %v335
  %v1561 = vunpack.c.h.b16 %v335
  %v1562 = vunpack.c.l.b16 %v336
  %v1563 = vunpack.c.h.b16 %v336
  %v1564 = vunpack.c.l.b16 %v337
  %v1565 = vunpack.c.h.b16 %v337
  %v1566 = vunpack.c.l.b16 %v338
  %v1567 = vunpack.c.h.b16 %v338
  %v1568 = vunpack.c.l.b16 %v339
  %v1569 = vunpack.c.h.b16 %v339
  %v1570 = vunpack.c.l.b16 %v340
  %v1571 = vunpack.c.h.b16 %v340
  %v1572 = vunpack.c.l.b16 %v341
  %v1573 = vunpack.c.h.b16 %v341
  %v1574 = vunpack.c.l.b16 %v342
  %v1575 = vunpack.c.h.b16 %v342
  %v1576 = vunpack.c.l.b16 %v343
  %v1577 = vunpack.c.h.b16 %v343
  %v1578 = vunpack.c.l.b16 %v344
  %v1579 = vunpack.c.h.b16 %v344
  %v1580 = vunpack.c.l.b16 %v345
  %v1581 = vunpack.c.h.b16 %v345
  %v1582 = vunpack.c.l.b16 %v346
  %v1583 = vunpack.c.h.b16 %v346
  %v1584 = vunpack.c.l.b16 %v347
  %v1585 = vunpack.c.h.b16 %v347
  %v1586 = vunpack.c.l.b16 %v348
  %v1587 = vunpack.c.h.b16 %v348
  %v1588 = vunpack.c.l.b16 %v349
  %v1589 = vunpack.c.h.b16 %v349
  %v1590 = vunpack.c.l.b16 %v350
  %v1591 = vunpack.c.h.b16 %v350
  %v1592 = vunpack.c.l.b16 %v351
  %v1593 = vunpack.c.h.b16 %v351
  %v1594 = vunpack.c.l.b16 %v352
  %v1595 = vunpack.c.h.b16 %v352
  %v1596 = vunpack.c.l.b16 %v353
  %v1597 = vunpack.c.h.b16 %v353
  %v1598 = vunpack.c.l.b16 %v354
  %v1599 = vunpack.c.h.b16 %v354
  %v1600 = vunpack.c.l.b16 %v355
  %v1601 = vunpack.c.h.b16 %v355
  %v1602 = vunpack.c.l.b16 %v356
  %v1603 = vunpack.c.h.b16 %v356
  %v1604 = vunpack.c.l.b16 %v357
  %v1605 = vunpack.c.h.b16 %v357
  %v1606 = vunpack.c.l.b16 %v358
  %v1607 = vunpack.c.h.b16 %v358
  %v1608 = vunpack.c.l.b16 %v359
  %v1609 = vunpack.c.h.b16 %v359
  %v1610 = vunpack.c.l.b16 %v360
  %v1611 = vunpack.c.h.b16 %v360
  %v1612 = vunpack.c.l.b16 %v361
  %v1613 = vunpack.c.h.b16 %v361
  %v1614 = vunpack.c.l.b16 %v362
  %v1615 = vunpack.c.h.b16 %v362
  %v1616 = vunpack.c.l.b16 %v363
  %v1617 = vunpack.c.h.b16 %v363
  %v1618 = vunpack.c.l.b16 %v364
  %v1619 = vunpack.c.h.b16 %v364
  %v1620 = vunpack.c.l.b16 %v365
  %v1621 = vunpack.c.h.b16 %v365
  %v1622 = vunpack.c.l.b16 %v366
  %v1623 = vunpack.c.h.b16 %v366
  %v1624 = vunpack.c.l.b16 %v367
  %v1625 = vunpack.c.h.b16 %v367
  %v1626 = vunpack.c.l.b16 %v368
  %v1627 = vunpack.c.h.b16 %v368
  %v1628 = vunpack.c.l.b16 %v369
  %v1629 = vunpack.c.h.b16 %v369
  %v1630 = vunpack.c.l.b16 %v370
  %v1631 = vunpack.c.h.b16 %v370
  %v1632 = vunpack.c.l.b16 %v371
  %v1633 = vunpack.c.h.b16 %v371
  %v1634 = vunpack.c.l.b16 %v372
  %v1635 = vunpack.c.h.b16 %v372
  %v1636 = vunpack.c.l.b16 %v373
  %v1637 = vunpack.c.h.b16 %v373
  %v1638 = vunpack.c.l.b16 %v374
  %v1639 = vunpack.c.h.b16 %v374
  %v1640 = vunpack.c.l.b16 %v375
  %v1641 = vunpack.c.h.b16 %v375
  %v1642 = vunpack.c.l.b16 %v376
  %v1643 = vunpack.c.h.b16 %v376
  %v1644 = vunpack.c.l.b16 %v377
  %v1645 = vunpack.c.h.b16 %v377
  %v1646 = vunpack.c.l.b16 %v378
  %v1647 = vunpack.c.h.b16 %v378
  %v1648 = vunpack.c.l.b16 %v379
  %v1649 = vunpack.c.h.b16 %v379
  %v1650 = vunpack.c.l.b16 %v380
  %v1651 = vunpack.c.h.b16 %v380
  %v1652 = vunpack.c.l.b16 %v381
  %v1653 = vunpack.c.h.b16 %v381
  %v1654 = vunpack.c.l.b16 %v382
  %v1655 = vunpack.c.h.b16 %v382
  %v1656 = vunpack.c.l.b16 %v383
  %v1657 = vunpack.c.h.b16 %v383
  %v1658 = vunpack.c.l.b16 %v384
  %v1659 = vunpack.c.h.b16 %v384
  %v1660 = vunpack.c.l.b16 %v385
  %v1661 = vunpack.c.h.b16 %v385
  %v1662 = vunpack.c.l.b16 %v386
  %v1663 = vunpack.c.h.b16 %v386
  %v1664 = vunpack.c.l.b16 %v387
  %v1665 = vunpack.c.h.b16 %v387
  %v1666 = vunpack.c.l.b16 %v388
  %v1667 = vunpack.c.h.b16 %v388
  %v1668 = vunpack.c.l.b16 %v389
  %v1669 = vunpack.c.h.b16 %v389
  %v1670 = vunpack.c.l.b16 %v390
  %v1671 = vunpack.c.h.b16 %v390
  %v1672 = vunpack.c.l.b16 %v391
  %v1673 = vunpack.c.h.b16 %v391
  %v1674 = vunpack.c.l.b16 %v392
  %v1675 = vunpack.c.h.b16 %v392
  %v1676 = vunpack.c.l.b16 %v393
  %v1677 = vunpack.c.h.b16 %v393
  %v1678 = vunpack.c.l.b16 %v394
  %v1679 = vunpack.c.h.b16 %v394
  %v1680 = vunpack.c.l.b16 %v395
  %v1681 = vunpack.c.h.b16 %v395
  %v1682 = vunpack.c.l.b16 %v396
  %v1683 = vunpack.c.h.b16 %v396
  %v1684 = vunpack.c.l.b16 %v397
  %v1685 = vunpack.c.h.b16 %v397
  %v1686 = vunpack.c.l.b16 %v398
  %v1687 = vunpack.c.h.b16 %v398
  %v1688 = vunpack.c.l.b16 %v399
  %v1689 = vunpack.c.h.b16 %v399
  %v1690 = vunpack.c.l.b16 %v400
  %v1691 = vunpack.c.h.b16 %v400
  %v1692 = vunpack.c.l.b16 %v401
  %v1693 = vunpack.c.h.b16 %v401
  %v1694 = vunpack.c.l.b16 %v402
  %v1695 = vunpack.c.h.b16 %v402
  %v1696 = vunpack.c.l.b16 %v403
  %v1697 = vunpack.c.h.b16 %v403
  %v1698 = vunpack.c.l.b16 %v404
  %v1699 = vunpack.c.h.b16 %v404
  %v1700 = vunpack.c.l.b16 %v405
  %v1701 = vunpack.c.h.b16 %v405
  %v1702 = vpack.c.b16 %v936, %v934
  %v1703 = vpack.c.b16 %v937, %v935
  %v1704 = vpack.c.b16 %v940, %v938
  %v1705 = vpack.c.b16 %v941, %v939
  %v1706 = vpack.c.b16 %v944, %v942
  %v1707 = vpack.c.b16 %v945, %v943
  %v1708 = vpack.c.b16 %v948, %v946
  %v1709 = vpack.c.b16 %v949, %v947
  %v1710 = vpack.c.b16 %v952, %v950
  %v1711 = vpack.c.b16 %v953, %v951
  %v1712 = vpack.c.b16 %v956, %v954
  %v1713 = vpack.c.b16 %v957, %v955
  %v1714 = vpack.c.b16 %v960, %v958
  %v1715 = vpack.c.b16 %v961, %v959
  %v1716 = vpack.c.b16 %v964, %v962
  %v1717 = vpack.c.b16 %v965, %v963
  %v1718 = vpack.c.b16 %v968, %v966
  %v1719 = vpack.c.b16 %v969, %v967
  %v1720 = vpack.c.b16 %v972, %v970
  %v1721 = vpack.c.b16 %v973, %v971
  %v1722 = vpack.c.b16 %v976, %v974
  %v1723 = vpack.c.b16 %v977, %v975
  %v1724 = vpack.c.b16 %v980, %v978
  %v1725 = vpack.c.b16 %v981, %v979
  %v1726 = vpack.c.b16 %v984, %v982
  %v1727 = vpack.c.b16 %v985, %v983
  %v1728 = vpack.c.b16 %v988, %v986
  %v1729 = vpack.c.b16 %v989, %v987
  %v1730 = vpack.c.b16 %v992, %v990
  %v1731 = vpack.c.b16 %v993, %v991
  %v1732 = vpack.c.b16 %v996, %v994
  %v1733 = vpack.c.b16 %v997, %v995
  %v1734 = vpack.c.b16 %v1000, %v998
  %v1735 = vpack.c.b16 %v1001, %v999
  %v1736 = vpack.c.b16 %v1004, %v1002
  %v1737 = vpack.c.b16 %v1005, %v1003
  %v1738 = vpack.c.b16 %v1008, %v1006
  %v1739 = vpack.c.b16 %v1009, %v1007
  %v1740 = vpack.c.b16 %v1012, %v1010
  %v1741 = vpack.c.b16 %v1013, %v1011
  %v1742 = vpack.c.b16 %v1016, %v1014
  %v1743 = vpack.c.b16 %v1017, %v1015
  %v1744 = vpack.c.b16 %v1020, %v1018
  %v1745 = vpack.c.b16 %v1021, %v1019
  %v1746 = vpack.c.b16 %v1024, %v1022
  %v1747 = vpack.c.b16 %v1025, %v1023
  %v1748 = vpack.c.b16 %v1028, %v1026
  %v1749 = vpack.c.b16 %v1029, %v1027
  %v1750 = vpack.c.b16 %v1032, %v1030
  %v1751 = vpack.c.b16 %v1033, %v1031
  %v1752 = vpack.c.b16 %v1036, %v1034
  %v1753 = vpack.c.b16 %v1037, %v1035
  %v1754 = vpack.c.b16 %v1040, %v1038
  %v1755 = vpack.c.b16 %v1041, %v1039
  %v1756 = vpack.c.b16 %v1044, %v1042
  %v1757 = vpack.c.b16 %v1045, %v1043
  %v1758 = vpack.c.b16 %v1048, %v1046
  %v1759 = vpack.c.b16 %v1049, %v1047
  %v1760 = vpack.c.b16 %v1052, %v1050
  %v1761 = vpack.c.b16 %v1053, %v1051
  %v1762 = vpack.c.b16 %v1056, %v1054
  %v1763 = vpack.c.b16 %v1057, %v1055
  %v1764 = vpack.c.b16 %v1060, %v1058
  %v1765 = vpack.c.b16 %v1061, %v1059
  %v1766 = vpack.c.b16 %v1064, %v1062
  %v1767 = vpack.c.b16 %v1065, %v1063
  %v1768 = vpack.c.b16 %v1068, %v1066
  %v1769 = vpack.c.b16 %v1069, %v1067
  %v1770 = vpack.c.b16 %v1072, %v1070
  %v1771 = vpack.c.b16 %v1073, %v1071
  %v1772 = vpack.c.b16 %v1076, %v1074
  %v1773 = vpack.c.b16 %v1077, %v1075
  %v1774 = vpack.c.b16 %v1080, %v1078
  %v1775 = vpack.c.b16 %v1081, %v1079
  %v1776 = vpack.c.b16 %v1084, %v1082
  %v1777 = vpack.c.b16 %v1085, %v1083
  %v1778 = vpack.c.b16 %v1088, %v1086
  %v1779 = vpack.c.b16 %v1089, %v1087
  %v1780 = vpack.c.b16 %v1092, %v1090
  %v1781 = vpack.c.b16 %v1093, %v1091
  %v1782 = vpack.c.b16 %v1096, %v1094
  %v1783 = vpack.c.b16 %v1097, %v1095
  %v1784 = vpack.c.b16 %v1100, %v1098
  %v1785 = vpack.c.b16 %v1101, %v1099
  %v1786 = vpack.c.b16 %v1104, %v1102
  %v1787 = vpack.c.b16 %v1105, %v1103
  %v1788 = vpack.c.b16 %v1108, %v1106
  %v1789 = vpack.c.b16 %v1109, %v1107
  %v1790 = vpack.c.b16 %v1112, %v1110
  %v1791 = vpack.c.b16 %v1113, %v1111
  %v1792 = vpack.c.b16 %v1116, %v1114
  %v1793 = vpack.c.b16 %v1117, %v1115
  %v1794 = vpack.c.b16 %v1120, %v1118
  %v1795 = vpack.c.b16 %v1121, %v1119
  %v1796 = vpack.c.b16 %v1124, %v1122
  %v1797 = vpack.c.b16 %v1125, %v1123
  %v1798 = vpack.c.b16 %v1128, %v1126
  %v1799 = vpack.c.b16 %v1129, %v1127
  %v1800 = vpack.c.b16 %v1132, %v1130
  %v1801 = vpack.c.b16 %v1133, %v1131
  %v1802 = vpack.c.b16 %v1136, %v1134
  %v1803 = vpack.c.b16 %v1137, %v1135
  %v1804 = vpack.c.b16 %v1140, %v1138
  %v1805 = vpack.c.b16 %v1141, %v1139
  %v1806 = vpack.c.b16 %v1144, %v1142
  %v1807 = vpack.c.b16 %v1145, %v1143
  %v1808 = vpack.c.b16 %v1148, %v1146
  %v1809 = vpack.c.b16 %v1149, %v1147
  %v1810 = vpack.c.b16 %v1152, %v1150
  %v1811 = vpack.c.b16 %v1153, %v1151
  %v1812 = vpack.c.b16 %v1156, %v1154
  %v1813 = vpack.c.b16 %v1157, %v1155
  %v1814 = vpack.c.b16 %v1160, %v1158
  %v1815 = vpack.c.b16 %v1161, %v1159
  %v1816 = vpack.c.b16 %v1164, %v1162
  %v1817 = vpack.c.b16 %v1165, %v1163
  %v1818 = vpack.c.b16 %v1168, %v1166
  %v1819 = vpack.c.b16 %v1169, %v1167
  %v1820 = vpack.c.b16 %v1172, %v1170
  %v1821 = vpack.c.b16 %v1173, %v1171
  %v1822 = vpack.c.b16 %v1176, %v1174
  %v1823 = vpack.c.b16 %v1177, %v1175
  %v1824 = vpack.c.b16 %v1180, %v1178
  %v1825 = vpack.c.b16 %v1181, %v1179
  %v1826 = vpack.c.b16 %v1184, %v1182
  %v1827 = vpack.c.b16 %v1185, %v1183
  %v1828 = vpack.c.b16 %v1188, %v1186
  %v1829 = vpack.c.b16 %v1189, %v1187
  %v1830 = vpack.c.b16 %v1192, %v1190
  %v1831 = vpack.c.b16 %v1193, %v1191
  %v1832 = vpack.c.b16 %v1196, %v1194
  %v1833 = vpack.c.b16 %v1197, %v1195
  %v1834 = vpack.c.b16 %v1200, %v1198
  %v1835 = vpack.c.b16 %v1201, %v1199
  %v1836 = vpack.c.b16 %v1204, %v1202
  %v1837 = vpack.c.b16 %v1205, %v1203
  %v1838 = vpack.c.b16 %v1208, %v1206
  %v1839 = vpack.c.b16 %v1209, %v1207
  %v1840 = vpack.c.b16 %v1212, %v1210
  %v1841 = vpack.c.b16 %v1213, %v1211
  %v1842 = vpack.c.b16 %v1216, %v1214
  %v1843 = vpack.c.b16 %v1217, %v1215
  %v1844 = vpack.c.b16 %v1220, %v1218
  %v1845 = vpack.c.b16 %v1221, %v1219
  %v1846 = vpack.c.b16 %v1224, %v1222
  %v1847 = vpack.c.b16 %v1225, %v1223
  %v1848 = vpack.c.b16 %v1228, %v1226
  %v1849 = vpack.c.b16 %v1229, %v1227
  %v1850 = vpack.c.b16 %v1232, %v1230
  %v1851 = vpack.c.b16 %v1233, %v1231
  %v1852 = vpack.c.b16 %v1236, %v1234
  %v1853 = vpack.c.b16 %v1237, %v1235
  %v1854 = vpack.c.b16 %v1240, %v1238
  %v1855 = vpack.c.b16 %v1241, %v1239
  %v1856 = vpack.c.b16 %v1244, %v1242
  %v1857 = vpack.c.b16 %v1245, %v1243
  %v1858 = vpack.c.b16 %v1248, %v1246
  %v1859 = vpack.c.b16 %v1249, %v1247
  %v1860 = vpack.c.b16 %v1252, %v1250
  %v1861 = vpack.c.b16 %v1253, %v1251
  %v1862 = vpack.c.b16 %v1256, %v1254
  %v1863 = vpack.c.b16 %v1257, %v1255
  %v1864 = vpack.c.b16 %v1260, %v1258
  %v1865 = vpack.c.b16 %v1261, %v1259
  %v1866 = vpack.c.b16 %v1264, %v1262
  %v1867 = vpack.c.b16 %v1265, %v1263
  %v1868 = vpack.c.b16 %v1268, %v1266
  %v1869 = vpack.c.b16 %v1269, %v1267
  %v1870 = vpack.c.b16 %v1272, %v1270
  %v1871 = vpack.c.b16 %v1273, %v1271
  %v1872 = vpack.c.b16 %v1276, %v1274
  %v1873 = vpack.c.b16 %v1277, %v1275
  %v1874 = vpack.c.b16 %v1280, %v1278
  %v1875 = vpack.c.b16 %v1281, %v1279
  %v1876 = vpack.c.b16 %v1284, %v1282
  %v1877 = vpack.c.b16 %v1285, %v1283
  %v1878 = vpack.c.b16 %v1288, %v1286
  %v1879 = vpack.c.b16 %v1289, %v1287
  %v1880 = vpack.c.b16 %v1292, %v1290
  %v1881 = vpack.c.b16 %v1293, %v1291
  %v1882 = vpack.c.b16 %v1296, %v1294
  %v1883 = vpack.c.b16 %v1297, %v1295
  %v1884 = vpack.c.b16 %v1300, %v1298
  %v1885 = vpack.c.b16 %v1301, %v1299
  %v1886 = vpack.c.b16 %v1304, %v1302
  %v1887 = vpack.c.b16 %v1305, %v1303
  %v1888 = vpack.c.b16 %v1308, %v1306
  %v1889 = vpack.c.b16 %v1309, %v1307
  %v1890 = vpack.c.b16 %v1312, %v1310
  %v1891 = vpack.c.b16 %v1313, %v1311
  %v1892 = vpack.c.b16 %v1316, %v1314
  %v1893 = vpack.c.b16 %v1317, %v1315
  %v1894 = vpack.c.b16 %v1320, %v1318
  %v1895 = vpack.c.b16 %v1321, %v1319
  %v1896 = vpack.c.b16 %v1324, %v1322
  %v1897 = vpack.c.b16 %v1325, %v1323
  %v1898 = vpack.c.b16 %v1328, %v1326
  %v1899 = vpack.c.b16 %v1329, %v1327
  %v1900 = vpack.c.b16 %v1332, %v1330
  %v1901 = vpack.c.b16 %v1333, %v1331
  %v1902 = vpack.c.b16 %v1336, %v1334
  %v1903 = vpack.c.b16 %v1337, %v1335
  %v1904 = vpack.c.b16 %v1340, %v1338
  %v1905 = vpack.c.b16 %v1341, %v1339
  %v1906 = vpack.c.b16 %v1344, %v1342
  %v1907 = vpack.c.b16 %v1345, %v1343
  %v1908 = vpack.c.b16 %v1348, %v1346
  %v1909 = vpack.c.b16 %v1349, %v1347
  %v1910 = vpack.c.b16 %v1352, %v1350
  %v1911 = vpack.c.b16 %v1353, %v1351
  %v1912 = vpack.c.b16 %v1356, %v1354
  %v1913 = vpack.c.b16 %v1357, %v1355
  %v1914 = vpack.c.b16 %v1360, %v1358
  %v1915 = vpack.c.b16 %v1361, %v1359
  %v1916 = vpack.c.b16 %v1364, %v1362
  %v1917 = vpack.c.b16 %v1365, %v1363
  %v1918 = vpack.c.b16 %v1368, %v1366
  %v1919 = vpack.c.b16 %v1369, %v1367
  %v1920 = vpack.c.b16 %v1372, %v1370
  %v1921 = vpack.c.b16 %v1373, %v1371
  %v1922 = vpack.c.b16 %v1376, %v1374
  %v1923 = vpack.c.b16 %v1377, %v1375
  %v1924 = vpack.c.b16 %v1380, %v1378
  %v1925 = vpack.c.b16 %v1381, %v1379
  %v1926 = vpack.c.b16 %v1384, %v1382
  %v1927 = vpack.c.b16 %v1385, %v1383
  %v1928 = vpack.c.b16 %v1388, %v1386
  %v1929 = vpack.c.b16 %v1389, %v1387
  %v1930 = vpack.c.b16 %v1392, %v1390
  %v1931 = vpack.c.b16 %v1393, %v1391
  %v1932 = vpack.c.b16 %v1396, %v1394
  %v1933 = vpack.c.b16 %v1397, %v1395
  %v1934 = vpack.c.b16 %v1400, %v1398
  %v1935 = vpack.c.b16 %v1401, %v1399
  %v1936 = vpack.c.b16 %v1404, %v1402
  %v1937 = vpack.c.b16 %v1405, %v1403
  %v1938 = vpack.c.b16 %v1408, %v1406
  %v1939 = vpack.c.b16 %v1409, %v1407
  %v1940 = vpack.c.b16 %v1412, %v1410
  %v1941 = vpack.c.b16 %v1413, %v1411
  %v1942 = vpack.c.b16 %v1416, %v1414
  %v1943 = vpack.c.b16 %v1417, %v1415
  %v1944 = vpack.c.b16 %v1420, %v1418
  %v1945 = vpack.c.b16 %v1421, %v1419
  %v1946 = vpack.c.b16 %v1424, %v1422
  %v1947 = vpack.c.b16 %v1425, %v1423
  %v1948 = vpack.c.b16 %v1428, %v1426
  %v1949 = vpack.c.b16 %v1429, %v1427
  %v1950 = vpack.c.b16 %v1432, %v1430
  %v1951 = vpack.c.b16 %v1433, %v1431
  %v1952 = vpack.c.b16 %v1436, %v1434
  %v1953 = vpack.c.b16 %v1437, %v1435
  %v1954 = vpack.c.b16 %v1440, %v1438
  %v1955 = vpack.c.b16 %v1441, %v1439
  %v1956 = vpack.c.b16 %v1444, %v1442
  %v1957 = vpack.c.b16 %v1445, %v1443
  %v1958 = vpack.c.b16 %v1448, %v1446
  %v1959 = vpack.c.b16 %v1449, %v1447
  %v1960 = vpack.c.b16 %v1452, %v1450
  %v1961 = vpack.c.b16 %v1453, %v1451
  %v1962 = vpack.c.b16 %v1456, %v1454
  %v1963 = vpack.c.b16 %v1457, %v1455
  %v1964 = vpack.c.b16 %v1460, %v1458
  %v1965 = vpack.c.b16 %v1461, %v1459
  %v1966 = vpack.c.b16 %v1464, %v1462
  %v1967 = vpack.c.b16 %v1465, %v1463
  %v1968 = vpack.c.b16 %v1468, %v1466
  %v1969 = vpack.c.b16 %v1469, %v1467
  %v1970 = vpack.c.b16 %v1472, %v1470
  %v1971 = vpack.c.b16 %v1473, %v1471
  %v1972 = vpack.c.b16 %v1476, %v1474
  %v1973 = vpack.c.b16 %v1477, %v1475
  %v1974 = vpack.c.b16 %v1480, %v1478
  %v1975 = vpack.c.b16 %v1481, %v1479
  %v1976 = vpack.c.b16 %v1484, %v1482
  %v1977 = vpack.c.b16 %v1485, %v1483
  %v1978 = vpack.c.b16 %v1488, %v1486
  %v1979 = vpack.c.b16 %v1489, %v1487
  %v1980 = vpack.c.b16 %v1492, %v1490
  %v1981 = vpack.c.b16 %v1493, %v1491
  %v1982 = vpack.c.b16 %v1496, %v1494
  %v1983 = vpack.c.b16 %v1497, %v1495
  %v1984 = vpack.c.b16 %v1500, %v1498
  %v1985 = vpack.c.b16 %v1501, %v1499
  %v1986 = vpack.c.b16 %v1504, %v1502
  %v1987 = vpack.c.b16 %v1505, %v1503
  %v1988 = vpack.c.b16 %v1508, %v1506
  %v1989 = vpack.c.b16 %v1509, %v1507
  %v1990 = vpack.c.b16 %v1512, %v1510
  %v1991 = vpack.c.b16 %v1513, %v1511
  %v1992 = vpack.c.b16 %v1516, %v1514
  %v1993 = vpack.c.b16 %v1517, %v1515
  %v1994 = vpack.c.b16 %v1520, %v1518
  %v1995 = vpack.c.b16 %v1521, %v1519
  %v1996 = vpack.c.b16 %v1524, %v1522
  %v1997 = vpack.c.b16 %v1525, %v1523
  %v1998 = vpack.c.b16 %v1528, %v1526
  %v1999 = vpack.c.b16 %v1529, %v1527
  %v2000 = vpack.c.b16 %v1532, %v1530
  %v2001 = vpack.c.b16 %v1533, %v1531
  %v2002 = vpack.c.b16 %v1536, %v1534
  %v2003 = vpack.c.b16 %v1537, %v1535
  %v2004 = vpack.c.b16 %v1540, %v1538
  %v2005 = vpack.c.b16 %v1541, %v1539
  %v2006 = vpack.c.b16 %v1544, %v1542
  %v2007 = vpack.c.b16 %v1545, %v1543
  %v2008 = vpack.c.b16 %v1548, %v1546
  %v2009 = vpack.c.b16 %v1549, %v1547
  %v2010 = vpack.c.b16 %v1552, %v1550
  %v2011 = vpack.c.b16 %v1553, %v1551
  %v2012 = vpack.c.b16 %v1556, %v1554
  %v2013 = vpack.c.b16 %v1557, %v1555
  %v2014 = vpack.c.b16 %v1560, %v1558
  %v2015 = vpack.c.b16 %v1561, %v1559
  %v2016 = vpack.c.b16 %v1564, %v1562
  %v2017 = vpack.c.b16 %v1565, %v1563
  %v2018 = vpack.c.b16 %v1568, %v1566
  %v2019 = vpack.c.b16 %v1569, %v1567
  %v2020 = vpack.c.b16 %v1572, %v1570
  %v2021 = vpack.c.b16 %v1573, %v1571
  %v2022 = vpack.c.b16 %v1576, %v1574
  %v2023 = vpack.c.b16 %v1577, %v1575
  %v2024 = vpack.c.b16 %v1580, %v1578
  %v2025 = vpack.c.b16 %v1581, %v1579
  %v2026 = vpack.c.b16 %v1584, %v1582
  %v2027 = vpack.c.b16 %v1585, %v1583
  %v2028 = vpack.c.b16 %v1588, %v1586
  %v2029 = vpack.c.b16 %v1589, %v1587
  %v2030 = vpack.c.b16 %v1592, %v1590
  %v2031 = vpack.c.b16 %v1593, %v1591
  %v2032 = vpack.c.b16 %v1596, %v1594
  %v2033 = vpack.c.b16 %v1597, %v1595
  %v2034 = vpack.c.b16 %v1600, %v1598
  %v2035 = vpack.c.b16 %v1601, %v1599
  %v2036 = vpack.c.b16 %v1604, %v1602
  %v2037 = vpack.c.b16 %v1605, %v1603
  %v2038 = vpack.c.b16 %v1608, %v1606
  %v2039 = vpack.c.b16 %v1609, %v1607
  %v2040 = vpack.c.b16 %v1612, %v1610
  %v2041 = vpack.c.b16 %v1613, %v1611
  %v2042 = vpack.c.b16 %v1616, %v1614
  %v2043 = vpack.c.b16 %v1617, %v1615
  %v2044 = vpack.c.b16 %v1620, %v1618
  %v2045 = vpack.c.b16 %v1621, %v1619
  %v2046 = vpack.c.b16 %v1624, %v1622
  %v2047 = vpack.c.b16 %v1625, %v1623
  %v2048 = vpack.c.b16 %v1628, %v1626
  %v2049 = vpack.c.b16 %v1629, %v1627
  %v2050 = vpack.c.b16 %v1632, %v1630
  %v2051 = vpack.c.b16 %v1633, %v1631
  %v2052 = vpack.c.b16 %v1636, %v1634
  %v2053 = vpack.c.b16 %v1637, %v1635
  %v2054 = vpack.c.b16 %v1640, %v1638
  %v2055 = vpack.c.b16 %v1641, %v1639
  %v2056 = vpack.c.b16 %v1644, %v1642
  %v2057 = vpack.c.b16 %v1645, %v1643
  %v2058 = vpack.c.b16 %v1648, %v1646
  %v2059 = vpack.c.b16 %v1649, %v1647
  %v2060 = vpack.c.b16 %v1652, %v1650
  %v2061 = vpack.c.b16 %v1653, %v1651
  %v2062 = vpack.c.b16 %v1656, %v1654
  %v2063 = vpack.c.b16 %v1657, %v1655
  %v2064 = vpack.c.b16 %v1660, %v1658
  %v2065 = vpack.c.b16 %v1661, %v1659
  %v2066 = vpack.c.b16 %v1664, %v1662
  %v2067 = vpack.c.b16 %v1665, %v1663
  %v2068 = vpack.c.b16 %v1668, %v1666
  %v2069 = vpack.c.b16 %v1669, %v1667
  %v2070 = vpack.c.b16 %v1672, %v1670
  %v2071 = vpack.c.b16 %v1673, %v1671
  %v2072 = vpack.c.b16 %v1676, %v1674
  %v2073 = vpack.c.b16 %v1677, %v1675
  %v2074 = vpack.c.b16 %v1680, %v1678
  %v2075 = vpack.c.b16 %v1681, %v1679
  %v2076 = vpack.c.b16 %v1684, %v1682
  %v2077 = vpack.c.b16 %v1685, %v1683
  %v2078 = vpack.c.b16 %v1688, %v1686
  %v2079 = vpack.c.b16 %v1689, %v1687
  %v2080 = vpack.c.b16 %v1692, %v1690
  %v2081 = vpack.c.b16 %v1693, %v1691
  %v2082 = vpack.c.b16 %v1696, %v1694
  %v2083 = vpack.c.b16 %v1697, %v1695
  %v2084 = vpack.c.b16 %v1700, %v1698
  %v2085 = vpack.c.b16 %v1701, %v1699
  %2470 = vmatprep.subr.bf16.mxu0 %v1703
  %2471 = vmatpush1.bf16.msra.mxu0 %v1702
  %2472 = vmatprep.subr.bf16.mxu0 %v1705
  %2473 = vmatpush1.bf16.msra.mxu0 %v1704
  %2474 = vmatprep.subr.bf16.mxu0 %v1707
  %2475 = vmatpush1.bf16.msra.mxu0 %v1706
  %2476 = vmatprep.subr.bf16.mxu0 %v1709
  %2477 = vmatpush1.bf16.msra.mxu0 %v1708
  %2478 = vmatprep.subr.bf16.mxu0 %v1711
  %2479 = vmatpush1.bf16.msra.mxu0 %v1710
  %2480 = vmatprep.subr.bf16.mxu0 %v1713
  %2481 = vmatpush1.bf16.msra.mxu0 %v1712
  %2482 = vmatprep.subr.bf16.mxu0 %v1715
  %2483 = vmatpush1.bf16.msra.mxu0 %v1714
  %2484 = vmatprep.subr.bf16.mxu0 %v1717
  %2485 = vmatpush1.bf16.msra.mxu0 %v1716
  %2486 = vmatprep.subr.bf16.mxu0 %v1719
  %2487 = vmatpush1.bf16.msra.mxu0 %v1718
  %2488 = vmatprep.subr.bf16.mxu0 %v1721
  %2489 = vmatpush1.bf16.msra.mxu0 %v1720
  %2490 = vmatprep.subr.bf16.mxu0 %v1723
  %2491 = vmatpush1.bf16.msra.mxu0 %v1722
  %2492 = vmatprep.subr.bf16.mxu0 %v1725
  %2493 = vmatpush1.bf16.msra.mxu0 %v1724
  %2494 = vmatprep.subr.bf16.mxu0 %v1727
  %2495 = vmatpush1.bf16.msra.mxu0 %v1726
  %2496 = vmatprep.subr.bf16.mxu0 %v1729
  %2497 = vmatpush1.bf16.msra.mxu0 %v1728
  %2498 = vmatprep.subr.bf16.mxu0 %v1731
  %2499 = vmatpush1.bf16.msra.mxu0 %v1730
  %2500 = vmatprep.subr.bf16.mxu0 %v1733
  %2501 = vmatpush1.bf16.msra.mxu0 %v1732
  %2502 = vmatprep.mubr.bf16.mxu0 %v439
  %2503 = vmatmul.mubr.bf16.gmra.mrb[0].mxu0 %v431
  %v2504 = vpop.f32.mrb[0].mxu0
  %v2505 = vadd.f32 %v411, %v2504
  %v2506 = vpop.f32.mrb[0].mxu0
  %v2507 = vadd.f32 %v415, %v2506
  %v2508 = vpop.f32.mrb[0].mxu0
  %v2509 = vpop.f32.mrb[0].mxu0
  %2510 = vdwg.mxu0
  %2511 = vmatprep.subr.bf16.mxu0 %v1735
  %2512 = vmatpush1.bf16.msra.mxu0 %v1734
  %2513 = vmatprep.subr.bf16.mxu0 %v1737
  %2514 = vmatpush1.bf16.msra.mxu0 %v1736
  %2515 = vmatprep.subr.bf16.mxu0 %v1739
  %2516 = vmatpush1.bf16.msra.mxu0 %v1738
  %2517 = vmatprep.subr.bf16.mxu0 %v1741
  %2518 = vmatpush1.bf16.msra.mxu0 %v1740
  %2519 = vmatprep.subr.bf16.mxu0 %v1743
  %2520 = vmatpush1.bf16.msra.mxu0 %v1742
  %2521 = vmatprep.subr.bf16.mxu0 %v1745
  %2522 = vmatpush1.bf16.msra.mxu0 %v1744
  %2523 = vmatprep.subr.bf16.mxu0 %v1747
  %2524 = vmatpush1.bf16.msra.mxu0 %v1746
  %2525 = vmatprep.subr.bf16.mxu0 %v1749
  %2526 = vmatpush1.bf16.msra.mxu0 %v1748
  %2527 = vmatprep.subr.bf16.mxu0 %v1751
  %2528 = vmatpush1.bf16.msra.mxu0 %v1750
  %2529 = vmatprep.subr.bf16.mxu0 %v1753
  %2530 = vmatpush1.bf16.msra.mxu0 %v1752
  %2531 = vmatprep.subr.bf16.mxu0 %v1755
  %2532 = vmatpush1.bf16.msra.mxu0 %v1754
  %2533 = vmatprep.subr.bf16.mxu0 %v1757
  %2534 = vmatpush1.bf16.msra.mxu0 %v1756
  %2535 = vmatprep.subr.bf16.mxu0 %v1759
  %2536 = vmatpush1.bf16.msra.mxu0 %v1758
  %2537 = vmatprep.subr.bf16.mxu0 %v1761
  %2538 = vmatpush1.bf16.msra.mxu0 %v1760
  %2539 = vmatprep.subr.bf16.mxu0 %v1763
  %2540 = vmatpush1.bf16.msra.mxu0 %v1762
  %2541 = vmatprep.subr.bf16.mxu0 %v1765
  %2542 = vmatpush1.bf16.msra.mxu0 %v1764
  %2543 = vmatprep.mubr.bf16.mxu0 %v440
  %2544 = vmatmul.mubr.bf16.gmra.mrb[0].mxu0 %v438
  %v2545 = vpop.f32.mrb[0].mxu0
  %v2546 = vadd.f32 %v2505, %v2545
  %v2547 = vpop.f32.mrb[0].mxu0
  %v2548 = vadd.f32 %v2507, %v2547
  %v2549 = vpop.f32.mrb[0].mxu0
  %v2550 = vpop.f32.mrb[0].mxu0
  %2551 = vdwg.mxu0
  %2552 = vmatprep.subr.bf16.mxu0 %v1767
  %2553 = vmatpush1.bf16.msra.mxu0 %v1766
  %2554 = vmatprep.subr.bf16.mxu0 %v1769
  %2555 = vmatpush1.bf16.msra.mxu0 %v1768
  %2556 = vmatprep.subr.bf16.mxu0 %v1771
  %2557 = vmatpush1.bf16.msra.mxu0 %v1770
  %2558 = vmatprep.subr.bf16.mxu0 %v1773
  %2559 = vmatpush1.bf16.msra.mxu0 %v1772
  %2560 = vmatprep.subr.bf16.mxu0 %v1775
  %2561 = vmatpush1.bf16.msra.mxu0 %v1774
  %2562 = vmatprep.subr.bf16.mxu0 %v1777
  %2563 = vmatpush1.bf16.msra.mxu0 %v1776
  %2564 = vmatprep.subr.bf16.mxu0 %v1779
  %2565 = vmatpush1.bf16.msra.mxu0 %v1778
  %2566 = vmatprep.subr.bf16.mxu0 %v1781
  %2567 = vmatpush1.bf16.msra.mxu0 %v1780
  %2568 = vmatprep.subr.bf16.mxu0 %v1783
  %2569 = vmatpush1.bf16.msra.mxu0 %v1782
  %2570 = vmatprep.subr.bf16.mxu0 %v1785
  %2571 = vmatpush1.bf16.msra.mxu0 %v1784
  %2572 = vmatprep.subr.bf16.mxu0 %v1787
  %2573 = vmatpush1.bf16.msra.mxu0 %v1786
  %2574 = vmatprep.subr.bf16.mxu0 %v1789
  %2575 = vmatpush1.bf16.msra.mxu0 %v1788
  %2576 = vmatprep.subr.bf16.mxu0 %v1791
  %2577 = vmatpush1.bf16.msra.mxu0 %v1790
  %2578 = vmatprep.subr.bf16.mxu0 %v1793
  %2579 = vmatpush1.bf16.msra.mxu0 %v1792
  %2580 = vmatprep.subr.bf16.mxu0 %v1795
  %2581 = vmatpush1.bf16.msra.mxu0 %v1794
  %2582 = vmatprep.subr.bf16.mxu0 %v1797
  %2583 = vmatpush1.bf16.msra.mxu0 %v1796
  %2584 = vmatprep.mubr.bf16.mxu0 %v456
  %2585 = vmatmul.mubr.bf16.gmra.mrb[0].mxu0 %v448
  %v2586 = vpop.f32.mrb[0].mxu0
  %v2587 = vadd.f32 %v2546, %v2586
  %v2588 = vpop.f32.mrb[0].mxu0
  %v2589 = vadd.f32 %v2548, %v2588
  %v2590 = vpop.f32.mrb[0].mxu0
  %v2591 = vpop.f32.mrb[0].mxu0
  %2592 = vdwg.mxu0
  %2593 = vmatprep.subr.bf16.mxu0 %v1799
  %2594 = vmatpush1.bf16.msra.mxu0 %v1798
  %2595 = vmatprep.subr.bf16.mxu0 %v1801
  %2596 = vmatpush1.bf16.msra.mxu0 %v1800
  %2597 = vmatprep.subr.bf16.mxu0 %v1803
  %2598 = vmatpush1.bf16.msra.mxu0 %v1802
  %2599 = vmatprep.subr.bf16.mxu0 %v1805
  %2600 = vmatpush1.bf16.msra.mxu0 %v1804
  %2601 = vmatprep.subr.bf16.mxu0 %v1807
  %2602 = vmatpush1.bf16.msra.mxu0 %v1806
  %2603 = vmatprep.subr.bf16.mxu0 %v1809
  %2604 = vmatpush1.bf16.msra.mxu0 %v1808
  %2605 = vmatprep.subr.bf16.mxu0 %v1811
  %2606 = vmatpush1.bf16.msra.mxu0 %v1810
  %2607 = vmatprep.subr.bf16.mxu0 %v1813
  %2608 = vmatpush1.bf16.msra.mxu0 %v1812
  %2609 = vmatprep.subr.bf16.mxu0 %v1815
  %2610 = vmatpush1.bf16.msra.mxu0 %v1814
  %2611 = vmatprep.subr.bf16.mxu0 %v1817
  %2612 = vmatpush1.bf16.msra.mxu0 %v1816
  %2613 = vmatprep.subr.bf16.mxu0 %v1819
  %2614 = vmatpush1.bf16.msra.mxu0 %v1818
  %2615 = vmatprep.subr.bf16.mxu0 %v1821
  %2616 = vmatpush1.bf16.msra.mxu0 %v1820
  %2617 = vmatprep.subr.bf16.mxu0 %v1823
  %2618 = vmatpush1.bf16.msra.mxu0 %v1822
  %2619 = vmatprep.subr.bf16.mxu0 %v1825
  %2620 = vmatpush1.bf16.msra.mxu0 %v1824
  %2621 = vmatprep.subr.bf16.mxu0 %v1827
  %2622 = vmatpush1.bf16.msra.mxu0 %v1826
  %2623 = vmatprep.subr.bf16.mxu0 %v1829
  %2624 = vmatpush1.bf16.msra.mxu0 %v1828
  %2625 = vmatprep.mubr.bf16.mxu0 %v457
  %2626 = vmatmul.mubr.bf16.gmra.mrb[0].mxu0 %v455
  %v2627 = vpop.f32.mrb[0].mxu0
  %v2628 = vadd.f32 %v2587, %v2627
  %v2629 = vpop.f32.mrb[0].mxu0
  %v2630 = vadd.f32 %v2589, %v2629
  %v2631 = vpop.f32.mrb[0].mxu0
  %v2632 = vpop.f32.mrb[0].mxu0
  %2633 = vdwg.mxu0
  %2634 = vmatprep.subr.bf16.mxu0 %v1831
  %2635 = vmatpush1.bf16.msra.mxu0 %v1830
  %2636 = vmatprep.subr.bf16.mxu0 %v1833
  %2637 = vmatpush1.bf16.msra.mxu0 %v1832
  %2638 = vmatprep.subr.bf16.mxu0 %v1835
  %2639 = vmatpush1.bf16.msra.mxu0 %v1834
  %2640 = vmatprep.subr.bf16.mxu0 %v1837
  %2641 = vmatpush1.bf16.msra.mxu0 %v1836
  %2642 = vmatprep.subr.bf16.mxu0 %v1839
  %2643 = vmatpush1.bf16.msra.mxu0 %v1838
  %2644 = vmatprep.subr.bf16.mxu0 %v1841
  %2645 = vmatpush1.bf16.msra.mxu0 %v1840
  %2646 = vmatprep.subr.bf16.mxu0 %v1843
  %2647 = vmatpush1.bf16.msra.mxu0 %v1842
  %2648 = vmatprep.subr.bf16.mxu0 %v1845
  %2649 = vmatpush1.bf16.msra.mxu0 %v1844
  %2650 = vmatprep.subr.bf16.mxu0 %v1847
  %2651 = vmatpush1.bf16.msra.mxu0 %v1846
  %2652 = vmatprep.subr.bf16.mxu0 %v1849
  %2653 = vmatpush1.bf16.msra.mxu0 %v1848
  %2654 = vmatprep.subr.bf16.mxu0 %v1851
  %2655 = vmatpush1.bf16.msra.mxu0 %v1850
  %2656 = vmatprep.subr.bf16.mxu0 %v1853
  %2657 = vmatpush1.bf16.msra.mxu0 %v1852
  %2658 = vmatprep.subr.bf16.mxu0 %v1855
  %2659 = vmatpush1.bf16.msra.mxu0 %v1854
  %2660 = vmatprep.subr.bf16.mxu0 %v1857
  %2661 = vmatpush1.bf16.msra.mxu0 %v1856
  %2662 = vmatprep.subr.bf16.mxu0 %v1859
  %2663 = vmatpush1.bf16.msra.mxu0 %v1858
  %2664 = vmatprep.subr.bf16.mxu0 %v1861
  %2665 = vmatpush1.bf16.msra.mxu0 %v1860
  %2666 = vmatprep.mubr.bf16.mxu0 %v473
  %2667 = vmatmul.mubr.bf16.gmra.mrb[0].mxu0 %v465
  %v2668 = vpop.f32.mrb[0].mxu0
  %v2669 = vadd.f32 %v2628, %v2668
  %v2670 = vpop.f32.mrb[0].mxu0
  %v2671 = vadd.f32 %v2630, %v2670
  %v2672 = vpop.f32.mrb[0].mxu0
  %v2673 = vpop.f32.mrb[0].mxu0
  %2674 = vdwg.mxu0
  %2675 = vmatprep.subr.bf16.mxu0 %v1863
  %2676 = vmatpush1.bf16.msra.mxu0 %v1862
  %2677 = vmatprep.subr.bf16.mxu0 %v1865
  %2678 = vmatpush1.bf16.msra.mxu0 %v1864
  %2679 = vmatprep.subr.bf16.mxu0 %v1867
  %2680 = vmatpush1.bf16.msra.mxu0 %v1866
  %2681 = vmatprep.subr.bf16.mxu0 %v1869
  %2682 = vmatpush1.bf16.msra.mxu0 %v1868
  %2683 = vmatprep.subr.bf16.mxu0 %v1871
  %2684 = vmatpush1.bf16.msra.mxu0 %v1870
  %2685 = vmatprep.subr.bf16.mxu0 %v1873
  %2686 = vmatpush1.bf16.msra.mxu0 %v1872
  %2687 = vmatprep.subr.bf16.mxu0 %v1875
  %2688 = vmatpush1.bf16.msra.mxu0 %v1874
  %2689 = vmatprep.subr.bf16.mxu0 %v1877
  %2690 = vmatpush1.bf16.msra.mxu0 %v1876
  %2691 = vmatprep.subr.bf16.mxu0 %v1879
  %2692 = vmatpush1.bf16.msra.mxu0 %v1878
  %2693 = vmatprep.subr.bf16.mxu0 %v1881
  %2694 = vmatpush1.bf16.msra.mxu0 %v1880
  %2695 = vmatprep.subr.bf16.mxu0 %v1883
  %2696 = vmatpush1.bf16.msra.mxu0 %v1882
  %2697 = vmatprep.subr.bf16.mxu0 %v1885
  %2698 = vmatpush1.bf16.msra.mxu0 %v1884
  %2699 = vmatprep.subr.bf16.mxu0 %v1887
  %2700 = vmatpush1.bf16.msra.mxu0 %v1886
  %2701 = vmatprep.subr.bf16.mxu0 %v1889
  %2702 = vmatpush1.bf16.msra.mxu0 %v1888
  %2703 = vmatprep.subr.bf16.mxu0 %v1891
  %2704 = vmatpush1.bf16.msra.mxu0 %v1890
  %2705 = vmatprep.subr.bf16.mxu0 %v1893
  %2706 = vmatpush1.bf16.msra.mxu0 %v1892
  %2707 = vmatprep.mubr.bf16.mxu0 %v474
  %2708 = vmatmul.mubr.bf16.gmra.mrb[0].mxu0 %v472
  %v2709 = vpop.f32.mrb[0].mxu0
  %v2710 = vadd.f32 %v2669, %v2709
  %v2711 = vpop.f32.mrb[0].mxu0
  %v2712 = vadd.f32 %v2671, %v2711
  %v2713 = vpop.f32.mrb[0].mxu0
  %v2714 = vpop.f32.mrb[0].mxu0
  %2715 = vdwg.mxu0
  %2716 = vmatprep.subr.bf16.mxu0 %v1895
  %2717 = vmatpush1.bf16.msra.mxu0 %v1894
  %2718 = vmatprep.subr.bf16.mxu0 %v1897
  %2719 = vmatpush1.bf16.msra.mxu0 %v1896
  %2720 = vmatprep.subr.bf16.mxu0 %v1899
  %2721 = vmatpush1.bf16.msra.mxu0 %v1898
  %2722 = vmatprep.subr.bf16.mxu0 %v1901
  %2723 = vmatpush1.bf16.msra.mxu0 %v1900
  %2724 = vmatprep.subr.bf16.mxu0 %v1903
  %2725 = vmatpush1.bf16.msra.mxu0 %v1902
  %2726 = vmatprep.subr.bf16.mxu0 %v1905
  %2727 = vmatpush1.bf16.msra.mxu0 %v1904
  %2728 = vmatprep.subr.bf16.mxu0 %v1907
  %2729 = vmatpush1.bf16.msra.mxu0 %v1906
  %2730 = vmatprep.subr.bf16.mxu0 %v1909
  %2731 = vmatpush1.bf16.msra.mxu0 %v1908
  %2732 = vmatprep.subr.bf16.mxu0 %v1911
  %2733 = vmatpush1.bf16.msra.mxu0 %v1910
  %2734 = vmatprep.subr.bf16.mxu0 %v1913
  %2735 = vmatpush1.bf16.msra.mxu0 %v1912
  %2736 = vmatprep.subr.bf16.mxu0 %v1915
  %2737 = vmatpush1.bf16.msra.mxu0 %v1914
  %2738 = vmatprep.subr.bf16.mxu0 %v1917
  %2739 = vmatpush1.bf16.msra.mxu0 %v1916
  %2740 = vmatprep.subr.bf16.mxu0 %v1919
  %2741 = vmatpush1.bf16.msra.mxu0 %v1918
  %2742 = vmatprep.subr.bf16.mxu0 %v1921
  %2743 = vmatpush1.bf16.msra.mxu0 %v1920
  %2744 = vmatprep.subr.bf16.mxu0 %v1923
  %2745 = vmatpush1.bf16.msra.mxu0 %v1922
  %2746 = vmatprep.subr.bf16.mxu0 %v1925
  %2747 = vmatpush1.bf16.msra.mxu0 %v1924
  %2748 = vmatprep.mubr.bf16.mxu0 %v490
  %2749 = vmatmul.mubr.bf16.gmra.mrb[0].mxu0 %v482
  %v2750 = vpop.f32.mrb[0].mxu0
  %v2751 = vadd.f32 %v2710, %v2750
  %v2752 = vpop.f32.mrb[0].mxu0
  %v2753 = vadd.f32 %v2712, %v2752
  %v2754 = vpop.f32.mrb[0].mxu0
  %v2755 = vpop.f32.mrb[0].mxu0
  %2756 = vdwg.mxu0
  %2757 = vmatprep.subr.bf16.mxu0 %v1927
  %2758 = vmatpush1.bf16.msra.mxu0 %v1926
  %2759 = vmatprep.subr.bf16.mxu0 %v1929
  %2760 = vmatpush1.bf16.msra.mxu0 %v1928
  %2761 = vmatprep.subr.bf16.mxu0 %v1931
  %2762 = vmatpush1.bf16.msra.mxu0 %v1930
  %2763 = vmatprep.subr.bf16.mxu0 %v1933
  %2764 = vmatpush1.bf16.msra.mxu0 %v1932
  %2765 = vmatprep.subr.bf16.mxu0 %v1935
  %2766 = vmatpush1.bf16.msra.mxu0 %v1934
  %2767 = vmatprep.subr.bf16.mxu0 %v1937
  %2768 = vmatpush1.bf16.msra.mxu0 %v1936
  %2769 = vmatprep.subr.bf16.mxu0 %v1939
  %2770 = vmatpush1.bf16.msra.mxu0 %v1938
  %2771 = vmatprep.subr.bf16.mxu0 %v1941
  %2772 = vmatpush1.bf16.msra.mxu0 %v1940
  %2773 = vmatprep.subr.bf16.mxu0 %v1943
  %2774 = vmatpush1.bf16.msra.mxu0 %v1942
  %2775 = vmatprep.subr.bf16.mxu0 %v1945
  %2776 = vmatpush1.bf16.msra.mxu0 %v1944
  %2777 = vmatprep.subr.bf16.mxu0 %v1947
  %2778 = vmatpush1.bf16.msra.mxu0 %v1946
  %2779 = vmatprep.subr.bf16.mxu0 %v1949
  %2780 = vmatpush1.bf16.msra.mxu0 %v1948
  %2781 = vmatprep.subr.bf16.mxu0 %v1951
  %2782 = vmatpush1.bf16.msra.mxu0 %v1950
  %2783 = vmatprep.subr.bf16.mxu0 %v1953
  %2784 = vmatpush1.bf16.msra.mxu0 %v1952
  %2785 = vmatprep.subr.bf16.mxu0 %v1955
  %2786 = vmatpush1.bf16.msra.mxu0 %v1954
  %2787 = vmatprep.subr.bf16.mxu0 %v1957
  %2788 = vmatpush1.bf16.msra.mxu0 %v1956
  %2789 = vmatprep.mubr.bf16.mxu0 %v491
  %2790 = vmatmul.mubr.bf16.gmra.mrb[0].mxu0 %v489
  %v2791 = vpop.f32.mrb[0].mxu0
  %v2792 = vadd.f32 %v2751, %v2791
  %v2793 = vpop.f32.mrb[0].mxu0
  %v2794 = vadd.f32 %v2753, %v2793
  %v2795 = vpop.f32.mrb[0].mxu0
  %v2796 = vpop.f32.mrb[0].mxu0
  %2797 = vdwg.mxu0
  %2798 = vmatprep.subr.bf16.mxu0 %v1959
  %2799 = vmatpush1.bf16.msra.mxu0 %v1958
  %2800 = vmatprep.subr.bf16.mxu0 %v1961
  %2801 = vmatpush1.bf16.msra.mxu0 %v1960
  %2802 = vmatprep.subr.bf16.mxu0 %v1963
  %2803 = vmatpush1.bf16.msra.mxu0 %v1962
  %2804 = vmatprep.subr.bf16.mxu0 %v1965
  %2805 = vmatpush1.bf16.msra.mxu0 %v1964
  %2806 = vmatprep.subr.bf16.mxu0 %v1967
  %2807 = vmatpush1.bf16.msra.mxu0 %v1966
  %2808 = vmatprep.subr.bf16.mxu0 %v1969
  %2809 = vmatpush1.bf16.msra.mxu0 %v1968
  %2810 = vmatprep.subr.bf16.mxu0 %v1971
  %2811 = vmatpush1.bf16.msra.mxu0 %v1970
  %2812 = vmatprep.subr.bf16.mxu0 %v1973
  %2813 = vmatpush1.bf16.msra.mxu0 %v1972
  %2814 = vmatprep.subr.bf16.mxu0 %v1975
  %2815 = vmatpush1.bf16.msra.mxu0 %v1974
  %2816 = vmatprep.subr.bf16.mxu0 %v1977
  %2817 = vmatpush1.bf16.msra.mxu0 %v1976
  %2818 = vmatprep.subr.bf16.mxu0 %v1979
  %2819 = vmatpush1.bf16.msra.mxu0 %v1978
  %2820 = vmatprep.subr.bf16.mxu0 %v1981
  %2821 = vmatpush1.bf16.msra.mxu0 %v1980
  %2822 = vmatprep.subr.bf16.mxu0 %v1983
  %2823 = vmatpush1.bf16.msra.mxu0 %v1982
  %2824 = vmatprep.subr.bf16.mxu0 %v1985
  %2825 = vmatpush1.bf16.msra.mxu0 %v1984
  %2826 = vmatprep.subr.bf16.mxu0 %v1987
  %2827 = vmatpush1.bf16.msra.mxu0 %v1986
  %2828 = vmatprep.subr.bf16.mxu0 %v1989
  %2829 = vmatpush1.bf16.msra.mxu0 %v1988
  %2830 = vmatprep.mubr.bf16.mxu0 %v507
  %2831 = vmatmul.mubr.bf16.gmra.mrb[0].mxu0 %v499
  %v2832 = vpop.f32.mrb[0].mxu0
  %v2833 = vadd.f32 %v2792, %v2832
  %v2834 = vpop.f32.mrb[0].mxu0
  %v2835 = vadd.f32 %v2794, %v2834
  %v2836 = vpop.f32.mrb[0].mxu0
  %v2837 = vpop.f32.mrb[0].mxu0
  %2838 = vdwg.mxu0
  %2839 = vmatprep.subr.bf16.mxu0 %v1991
  %2840 = vmatpush1.bf16.msra.mxu0 %v1990
  %2841 = vmatprep.subr.bf16.mxu0 %v1993
  %2842 = vmatpush1.bf16.msra.mxu0 %v1992
  %2843 = vmatprep.subr.bf16.mxu0 %v1995
  %2844 = vmatpush1.bf16.msra.mxu0 %v1994
  %2845 = vmatprep.subr.bf16.mxu0 %v1997
  %2846 = vmatpush1.bf16.msra.mxu0 %v1996
  %2847 = vmatprep.subr.bf16.mxu0 %v1999
  %2848 = vmatpush1.bf16.msra.mxu0 %v1998
  %2849 = vmatprep.subr.bf16.mxu0 %v2001
  %2850 = vmatpush1.bf16.msra.mxu0 %v2000
  %2851 = vmatprep.subr.bf16.mxu0 %v2003
  %2852 = vmatpush1.bf16.msra.mxu0 %v2002
  %2853 = vmatprep.subr.bf16.mxu0 %v2005
  %2854 = vmatpush1.bf16.msra.mxu0 %v2004
  %2855 = vmatprep.subr.bf16.mxu0 %v2007
  %2856 = vmatpush1.bf16.msra.mxu0 %v2006
  %2857 = vmatprep.subr.bf16.mxu0 %v2009
  %2858 = vmatpush1.bf16.msra.mxu0 %v2008
  %2859 = vmatprep.subr.bf16.mxu0 %v2011
  %2860 = vmatpush1.bf16.msra.mxu0 %v2010
  %2861 = vmatprep.subr.bf16.mxu0 %v2013
  %2862 = vmatpush1.bf16.msra.mxu0 %v2012
  %2863 = vmatprep.subr.bf16.mxu0 %v2015
  %2864 = vmatpush1.bf16.msra.mxu0 %v2014
  %2865 = vmatprep.subr.bf16.mxu0 %v2017
  %2866 = vmatpush1.bf16.msra.mxu0 %v2016
  %2867 = vmatprep.subr.bf16.mxu0 %v2019
  %2868 = vmatpush1.bf16.msra.mxu0 %v2018
  %2869 = vmatprep.subr.bf16.mxu0 %v2021
  %2870 = vmatpush1.bf16.msra.mxu0 %v2020
  %2871 = vmatprep.mubr.bf16.mxu0 %v508
  %2872 = vmatmul.mubr.bf16.gmra.mrb[0].mxu0 %v506
  %v2873 = vpop.f32.mrb[0].mxu0
  %v2874 = vadd.f32 %v2833, %v2873
  %v2875 = vpop.f32.mrb[0].mxu0
  %v2876 = vadd.f32 %v2835, %v2875
  %v2877 = vpop.f32.mrb[0].mxu0
  %v2878 = vpop.f32.mrb[0].mxu0
  %2879 = vdwg.mxu0
  %2880 = vmatprep.subr.bf16.mxu0 %v2023
  %2881 = vmatpush1.bf16.msra.mxu0 %v2022
  %2882 = vmatprep.subr.bf16.mxu0 %v2025
  %2883 = vmatpush1.bf16.msra.mxu0 %v2024
  %2884 = vmatprep.subr.bf16.mxu0 %v2027
  %2885 = vmatpush1.bf16.msra.mxu0 %v2026
  %2886 = vmatprep.subr.bf16.mxu0 %v2029
  %2887 = vmatpush1.bf16.msra.mxu0 %v2028
  %2888 = vmatprep.subr.bf16.mxu0 %v2031
  %2889 = vmatpush1.bf16.msra.mxu0 %v2030
  %2890 = vmatprep.subr.bf16.mxu0 %v2033
  %2891 = vmatpush1.bf16.msra.mxu0 %v2032
  %2892 = vmatprep.subr.bf16.mxu0 %v2035
  %2893 = vmatpush1.bf16.msra.mxu0 %v2034
  %2894 = vmatprep.subr.bf16.mxu0 %v2037
  %2895 = vmatpush1.bf16.msra.mxu0 %v2036
  %2896 = vmatprep.subr.bf16.mxu0 %v2039
  %2897 = vmatpush1.bf16.msra.mxu0 %v2038
  %2898 = vmatprep.subr.bf16.mxu0 %v2041
  %2899 = vmatpush1.bf16.msra.mxu0 %v2040
  %2900 = vmatprep.subr.bf16.mxu0 %v2043
  %2901 = vmatpush1.bf16.msra.mxu0 %v2042
  %2902 = vmatprep.subr.bf16.mxu0 %v2045
  %2903 = vmatpush1.bf16.msra.mxu0 %v2044
  %2904 = vmatprep.subr.bf16.mxu0 %v2047
  %2905 = vmatpush1.bf16.msra.mxu0 %v2046
  %2906 = vmatprep.subr.bf16.mxu0 %v2049
  %2907 = vmatpush1.bf16.msra.mxu0 %v2048
  %2908 = vmatprep.subr.bf16.mxu0 %v2051
  %2909 = vmatpush1.bf16.msra.mxu0 %v2050
  %2910 = vmatprep.subr.bf16.mxu0 %v2053
  %2911 = vmatpush1.bf16.msra.mxu0 %v2052
  %2912 = vmatprep.mubr.bf16.mxu0 %v524
  %2913 = vmatmul.mubr.bf16.gmra.mrb[0].mxu0 %v516
  %v2914 = vpop.f32.mrb[0].mxu0
  %v2915 = vadd.f32 %v2874, %v2914
  %v2916 = vpop.f32.mrb[0].mxu0
  %v2917 = vadd.f32 %v2876, %v2916
  %v2918 = vpop.f32.mrb[0].mxu0
  %v2919 = vpop.f32.mrb[0].mxu0
  %2920 = vdwg.mxu0
  %2921 = vmatprep.subr.bf16.mxu0 %v2055
  %2922 = vmatpush1.bf16.msra.mxu0 %v2054
  %2923 = vmatprep.subr.bf16.mxu0 %v2057
  %2924 = vmatpush1.bf16.msra.mxu0 %v2056
  %2925 = vmatprep.subr.bf16.mxu0 %v2059
  %2926 = vmatpush1.bf16.msra.mxu0 %v2058
  %2927 = vmatprep.subr.bf16.mxu0 %v2061
  %2928 = vmatpush1.bf16.msra.mxu0 %v2060
  %2929 = vmatprep.subr.bf16.mxu0 %v2063
  %2930 = vmatpush1.bf16.msra.mxu0 %v2062
  %2931 = vmatprep.subr.bf16.mxu0 %v2065
  %2932 = vmatpush1.bf16.msra.mxu0 %v2064
  %2933 = vmatprep.subr.bf16.mxu0 %v2067
  %2934 = vmatpush1.bf16.msra.mxu0 %v2066
  %2935 = vmatprep.subr.bf16.mxu0 %v2069
  %2936 = vmatpush1.bf16.msra.mxu0 %v2068
  %2937 = vmatprep.subr.bf16.mxu0 %v2071
  %2938 = vmatpush1.bf16.msra.mxu0 %v2070
  %2939 = vmatprep.subr.bf16.mxu0 %v2073
  %2940 = vmatpush1.bf16.msra.mxu0 %v2072
  %2941 = vmatprep.subr.bf16.mxu0 %v2075
  %2942 = vmatpush1.bf16.msra.mxu0 %v2074
  %2943 = vmatprep.subr.bf16.mxu0 %v2077
  %2944 = vmatpush1.bf16.msra.mxu0 %v2076
  %2945 = vmatprep.subr.bf16.mxu0 %v2079
  %2946 = vmatpush1.bf16.msra.mxu0 %v2078
  %2947 = vmatprep.subr.bf16.mxu0 %v2081
  %2948 = vmatpush1.bf16.msra.mxu0 %v2080
  %2949 = vmatprep.subr.bf16.mxu0 %v2083
  %2950 = vmatpush1.bf16.msra.mxu0 %v2082
  %2951 = vmatprep.subr.bf16.mxu0 %v2085
  %2952 = vmatpush1.bf16.msra.mxu0 %v2084
  %2953 = vmatprep.mubr.bf16.mxu0 %v525
  %2954 = vmatmul.mubr.bf16.gmra.mrb[0].mxu0 %v523
  %v2955 = vpop.f32.mrb[0].mxu0
  %v2956 = vadd.f32 %v2915, %v2955
  %v2957 = vpop.f32.mrb[0].mxu0
  %v2958 = vadd.f32 %v2917, %v2957
  %v2959 = vpop.f32.mrb[0].mxu0
  %v2960 = vpop.f32.mrb[0].mxu0
  %2961 = vdwg.mxu0
  %v2962 = vmax.f32 %v2956, 0.0
  %v2963 = vmax.f32 %v2958, 0.0
  %2964 = vst [vmem:[%s3] sm:$0xf] %v2962
  %2965 = vst [vmem:[%s4] sm:$0xf] %v2963
  // Predicated region
  $region14: #{glo_forward.4} parent=0 // pred_check
    _
  $region15: #{glo_forward.4} parent=0 // pred_check_branch
    %2967 = sbr.rel (0) target = $region17
  $region16: #{glo_forward.4} parent=0 // pred_region
    _
  $region17: #{glo_forward.4} parent=0 // pred_fallthru
    _
  // Predicated region
  $region18: #{glo_forward.4} parent=0 // pred_check
    _
  $region19: #{glo_forward.4} parent=0 // pred_check_branch
    %2969 = sbr.rel (0) target = $region21
  $region20: #{glo_forward.4} parent=0 // pred_region
    _
  $region21: #{glo_forward.4} parent=0 // pred_fallthru
    _
  // Predicated region
  $region22: #{glo_forward.4} parent=0 // pred_check
    _
  $region23: #{glo_forward.4} parent=0 // pred_check_branch
    %2971 = sbr.rel (0) target = $region25
  $region24: #{glo_forward.4} parent=0 // pred_region
    _
  $region25: #{glo_forward.4} parent=0 // pred_fallthru
    _
  // Predicated region
  $region26: #{glo_forward.4} parent=0 // pred_check
    _
  $region27: #{glo_forward.4} parent=0 // pred_check_branch
    %2973 = sbr.rel (0) target = $region29
  $region28: #{glo_forward.4} parent=0 // pred_region
    _
  $region29: #{glo_forward.4} parent=0 // pred_fallthru
    _

// kernel: glo_forward.6
$region0: #{glo_forward.6}
  #allocation0 [shape = 'u32[]', space=smem, size = 0x4, offset = 0x4, fixed_abs, tag = 'smem constant byte address 0x4 - core index']
  #allocation1 [shape = 'u32[144,128]{1,0:T(1,128)}', space=vmem, size = 0x12000, scoped, tag = 'internal scratch']
  %s0 = inlined_call_operand.vmem [shape: f32[8,4,512], index: 0, kind: input, shape index: {}]
  %s1 = inlined_call_operand.vmem [shape: f32[4,128], index: 1, kind: input, shape index: {}]
  %s2 = inlined_call_operand.vmem [shape: f32[4,128], index: 2, kind: input, shape index: {}]
  %s3 = inlined_call_operand.vmem [shape: bf16[128,512], index: 3, kind: input, shape index: {}]
  %s4 = inlined_call_operand.vmem [shape: bf16[256,512], index: 4, kind: input, shape index: {}]
  %s5 = inlined_call_operand.vmem [shape: f32[1,512], index: 5, kind: input, shape index: {}]
  %s6 = inlined_call_operand.vmem [shape: bf16[8,4,128], index: 6, kind: output, shape index: {}]
  %s7 = sld [smem:[#allocation0]]
  $region34: #{glo_forward.6} parent=0
    _
  %s9 = ssub.s32 1, %s7
  %s10 = scalar_select 0, %s9, %s7
  // Predicated region
  $region2: #{glo_forward.6} parent=0 // pred_check
    _
  $region3: #{glo_forward.6} parent=0 // pred_check_branch
    %12 = sbr.rel (0) target = $region5
  $region4: #{glo_forward.6} parent=0 // pred_region
    _
  $region5: #{glo_forward.6} parent=0 // pred_fallthru
    _
  // Predicated region
  $region6: #{glo_forward.6} parent=0 // pred_check
    _
  $region7: #{glo_forward.6} parent=0 // pred_check_branch
    %14 = sbr.rel (0) target = $region9
  $region8: #{glo_forward.6} parent=0 // pred_region
    _
  $region9: #{glo_forward.6} parent=0 // pred_fallthru
    _
  // Predicated region
  $region10: #{glo_forward.6} parent=0 // pred_check
    _
  $region11: #{glo_forward.6} parent=0 // pred_check_branch
    %16 = sbr.rel (0) target = $region13
  $region12: #{glo_forward.6} parent=0 // pred_region
    _
  $region13: #{glo_forward.6} parent=0 // pred_fallthru
    _
  // Predicated region
  $region14: #{glo_forward.6} parent=0 // pred_check
    _
  $region15: #{glo_forward.6} parent=0 // pred_check_branch
    %18 = sbr.rel (0) target = $region17
  $region16: #{glo_forward.6} parent=0 // pred_region
    _
  $region17: #{glo_forward.6} parent=0 // pred_fallthru
    _
  // Predicated region
  $region18: #{glo_forward.6} parent=0 // pred_check
    _
  $region19: #{glo_forward.6} parent=0 // pred_check_branch
    %20 = sbr.rel (0) target = $region21
  $region20: #{glo_forward.6} parent=0 // pred_region
    _
  $region21: #{glo_forward.6} parent=0 // pred_fallthru
    _
  // Predicated region
  $region22: #{glo_forward.6} parent=0 // pred_check
    _
  $region23: #{glo_forward.6} parent=0 // pred_check_branch
    %22 = sbr.rel (0) target = $region25
  $region24: #{glo_forward.6} parent=0 // pred_region
    _
  $region25: #{glo_forward.6} parent=0 // pred_fallthru
    _
  %v24 = vld [vmem:[%s3] sm:$0xff]
  %v25 = vld [vmem:[%s3 + $0x8] sm:$0xff]
  %v26 = vld [vmem:[%s3 + $0x10] sm:$0xff]
  %v27 = vld [vmem:[%s3 + $0x18] sm:$0xff]
  %v28 = vld [vmem:[%s3 + $0x20] sm:$0xff]
  %v29 = vld [vmem:[%s3 + $0x28] sm:$0xff]
  %v30 = vld [vmem:[%s3 + $0x30] sm:$0xff]
  %v31 = vld [vmem:[%s3 + $0x38] sm:$0xff]
  %v32 = vld [vmem:[%s3 + $0x40] sm:$0xff]
  %v33 = vld [vmem:[%s3 + $0x48] sm:$0xff]
  %v34 = vld [vmem:[%s3 + $0x50] sm:$0xff]
  %v35 = vld [vmem:[%s3 + $0x58] sm:$0xff]
  %v36 = vld [vmem:[%s3 + $0x60] sm:$0xff]
  %v37 = vld [vmem:[%s3 + $0x68] sm:$0xff]
  %v38 = vld [vmem:[%s3 + $0x70] sm:$0xff]
  %v39 = vld [vmem:[%s3 + $0x78] sm:$0xff]
  %v40 = vld [vmem:[%s3 + $0x80] sm:$0xff]
  %v41 = vld [vmem:[%s3 + $0x88] sm:$0xff]
  %v42 = vld [vmem:[%s3 + $0x90] sm:$0xff]
  %v43 = vld [vmem:[%s3 + $0x98] sm:$0xff]
  %v44 = vld [vmem:[%s3 + $0xa0] sm:$0xff]
  %v45 = vld [vmem:[%s3 + $0xa8] sm:$0xff]
  %v46 = vld [vmem:[%s3 + $0xb0] sm:$0xff]
  %v47 = vld [vmem:[%s3 + $0xb8] sm:$0xff]
  %v48 = vld [vmem:[%s3 + $0xc0] sm:$0xff]
  %v49 = vld [vmem:[%s3 + $0xc8] sm:$0xff]
  %v50 = vld [vmem:[%s3 + $0xd0] sm:$0xff]
  %v51 = vld [vmem:[%s3 + $0xd8] sm:$0xff]
  %v52 = vld [vmem:[%s3 + $0xe0] sm:$0xff]
  %v53 = vld [vmem:[%s3 + $0xe8] sm:$0xff]
  %v54 = vld [vmem:[%s3 + $0xf0] sm:$0xff]
  %v55 = vld [vmem:[%s3 + $0xf8] sm:$0xff]
  %v56 = vld [vmem:[%s4] sm:$0xff]
  %v57 = vld [vmem:[%s4 + $0x8] sm:$0xff]
  %v58 = vld [vmem:[%s4 + $0x10] sm:$0xff]
  %v59 = vld [vmem:[%s4 + $0x18] sm:$0xff]
  %v60 = vld [vmem:[%s4 + $0x20] sm:$0xff]
  %v61 = vld [vmem:[%s4 + $0x28] sm:$0xff]
  %v62 = vld [vmem:[%s4 + $0x30] sm:$0xff]
  %v63 = vld [vmem:[%s4 + $0x38] sm:$0xff]
  %v64 = vld [vmem:[%s4 + $0x40] sm:$0xff]
  %v65 = vld [vmem:[%s4 + $0x48] sm:$0xff]
  %v66 = vld [vmem:[%s4 + $0x50] sm:$0xff]
  %v67 = vld [vmem:[%s4 + $0x58] sm:$0xff]
  %v68 = vld [vmem:[%s4 + $0x60] sm:$0xff]
  %v69 = vld [vmem:[%s4 + $0x68] sm:$0xff]
  %v70 = vld [vmem:[%s4 + $0x70] sm:$0xff]
  %v71 = vld [vmem:[%s4 + $0x78] sm:$0xff]
  %v72 = vld [vmem:[%s4 + $0x80] sm:$0xff]
  %v73 = vld [vmem:[%s4 + $0x88] sm:$0xff]
  %v74 = vld [vmem:[%s4 + $0x90] sm:$0xff]
  %v75 = vld [vmem:[%s4 + $0x98] sm:$0xff]
  %v76 = vld [vmem:[%s4 + $0xa0] sm:$0xff]
  %v77 = vld [vmem:[%s4 + $0xa8] sm:$0xff]
  %v78 = vld [vmem:[%s4 + $0xb0] sm:$0xff]
  %v79 = vld [vmem:[%s4 + $0xb8] sm:$0xff]
  %v80 = vld [vmem:[%s4 + $0xc0] sm:$0xff]
  %v81 = vld [vmem:[%s4 + $0xc8] sm:$0xff]
  %v82 = vld [vmem:[%s4 + $0xd0] sm:$0xff]
  %v83 = vld [vmem:[%s4 + $0xd8] sm:$0xff]
  %v84 = vld [vmem:[%s4 + $0xe0] sm:$0xff]
  %v85 = vld [vmem:[%s4 + $0xe8] sm:$0xff]
  %v86 = vld [vmem:[%s4 + $0xf0] sm:$0xff]
  %v87 = vld [vmem:[%s4 + $0xf8] sm:$0xff]
  %v88 = vld [vmem:[%s4 + $0x100] sm:$0xff]
  %v89 = vld [vmem:[%s4 + $0x108] sm:$0xff]
  %v90 = vld [vmem:[%s4 + $0x110] sm:$0xff]
  %v91 = vld [vmem:[%s4 + $0x118] sm:$0xff]
  %v92 = vld [vmem:[%s4 + $0x120] sm:$0xff]
  %v93 = vld [vmem:[%s4 + $0x128] sm:$0xff]
  %v94 = vld [vmem:[%s4 + $0x130] sm:$0xff]
  %v95 = vld [vmem:[%s4 + $0x138] sm:$0xff]
  %v96 = vld [vmem:[%s4 + $0x140] sm:$0xff]
  %v97 = vld [vmem:[%s4 + $0x148] sm:$0xff]
  %v98 = vld [vmem:[%s4 + $0x150] sm:$0xff]
  %v99 = vld [vmem:[%s4 + $0x158] sm:$0xff]
  %v100 = vld [vmem:[%s4 + $0x160] sm:$0xff]
  %v101 = vld [vmem:[%s4 + $0x168] sm:$0xff]
  %v102 = vld [vmem:[%s4 + $0x170] sm:$0xff]
  %v103 = vld [vmem:[%s4 + $0x178] sm:$0xff]
  %v104 = vld [vmem:[%s4 + $0x180] sm:$0xff]
  %v105 = vld [vmem:[%s4 + $0x188] sm:$0xff]
  %v106 = vld [vmem:[%s4 + $0x190] sm:$0xff]
  %v107 = vld [vmem:[%s4 + $0x198] sm:$0xff]
  %v108 = vld [vmem:[%s4 + $0x1a0] sm:$0xff]
  %v109 = vld [vmem:[%s4 + $0x1a8] sm:$0xff]
  %v110 = vld [vmem:[%s4 + $0x1b0] sm:$0xff]
  %v111 = vld [vmem:[%s4 + $0x1b8] sm:$0xff]
  %v112 = vld [vmem:[%s4 + $0x1c0] sm:$0xff]
  %v113 = vld [vmem:[%s4 + $0x1c8] sm:$0xff]
  %v114 = vld [vmem:[%s4 + $0x1d0] sm:$0xff]
  %v115 = vld [vmem:[%s4 + $0x1d8] sm:$0xff]
  %v116 = vld [vmem:[%s4 + $0x1e0] sm:$0xff]
  %v117 = vld [vmem:[%s4 + $0x1e8] sm:$0xff]
  %v118 = vld [vmem:[%s4 + $0x1f0] sm:$0xff]
  %v119 = vld [vmem:[%s4 + $0x1f8] sm:$0xff]
  %v120 = vld [vmem:[%s5] sm:$0xf]
  %v121 = vld [vmem:[%s1] sm:$0xf]
  %v122 = vld [vmem:[%s2] sm:$0xf]
  %v123 = vld [vmem:[%s0] sm:$0xff]
  %v124 = vld [vmem:[%s0 + $0x8] sm:$0xff]
  %v157 = vunpack.c.l.b16 %v24
  %v158 = vunpack.c.h.b16 %v24
  %v159 = vunpack.c.l.b16 %v25
  %v160 = vunpack.c.h.b16 %v25
  %v161 = vunpack.c.l.b16 %v26
  %v162 = vunpack.c.h.b16 %v26
  %v163 = vunpack.c.l.b16 %v27
  %v164 = vunpack.c.h.b16 %v27
  %v165 = vunpack.c.l.b16 %v28
  %v166 = vunpack.c.h.b16 %v28
  %v167 = vunpack.c.l.b16 %v29
  %v168 = vunpack.c.h.b16 %v29
  %v169 = vunpack.c.l.b16 %v30
  %v170 = vunpack.c.h.b16 %v30
  %v171 = vunpack.c.l.b16 %v31
  %v172 = vunpack.c.h.b16 %v31
  %v173 = vunpack.c.l.b16 %v32
  %v174 = vunpack.c.h.b16 %v32
  %v175 = vunpack.c.l.b16 %v33
  %v176 = vunpack.c.h.b16 %v33
  %v177 = vunpack.c.l.b16 %v34
  %v178 = vunpack.c.h.b16 %v34
  %v179 = vunpack.c.l.b16 %v35
  %v180 = vunpack.c.h.b16 %v35
  %v181 = vunpack.c.l.b16 %v36
  %v182 = vunpack.c.h.b16 %v36
  %v183 = vunpack.c.l.b16 %v37
  %v184 = vunpack.c.h.b16 %v37
  %v185 = vunpack.c.l.b16 %v38
  %v186 = vunpack.c.h.b16 %v38
  %v187 = vunpack.c.l.b16 %v39
  %v188 = vunpack.c.h.b16 %v39
  %v189 = vunpack.c.l.b16 %v40
  %v190 = vunpack.c.h.b16 %v40
  %v191 = vunpack.c.l.b16 %v41
  %v192 = vunpack.c.h.b16 %v41
  %v193 = vunpack.c.l.b16 %v42
  %v194 = vunpack.c.h.b16 %v42
  %v195 = vunpack.c.l.b16 %v43
  %v196 = vunpack.c.h.b16 %v43
  %v197 = vunpack.c.l.b16 %v44
  %v198 = vunpack.c.h.b16 %v44
  %v199 = vunpack.c.l.b16 %v45
  %v200 = vunpack.c.h.b16 %v45
  %v201 = vunpack.c.l.b16 %v46
  %v202 = vunpack.c.h.b16 %v46
  %v203 = vunpack.c.l.b16 %v47
  %v204 = vunpack.c.h.b16 %v47
  %v205 = vunpack.c.l.b16 %v48
  %v206 = vunpack.c.h.b16 %v48
  %v207 = vunpack.c.l.b16 %v49
  %v208 = vunpack.c.h.b16 %v49
  %v209 = vunpack.c.l.b16 %v50
  %v210 = vunpack.c.h.b16 %v50
  %v211 = vunpack.c.l.b16 %v51
  %v212 = vunpack.c.h.b16 %v51
  %v213 = vunpack.c.l.b16 %v52
  %v214 = vunpack.c.h.b16 %v52
  %v215 = vunpack.c.l.b16 %v53
  %v216 = vunpack.c.h.b16 %v53
  %v217 = vunpack.c.l.b16 %v54
  %v218 = vunpack.c.h.b16 %v54
  %v219 = vunpack.c.l.b16 %v55
  %v220 = vunpack.c.h.b16 %v55
  %v221 = vpack.c.b16 %v161, %v157
  %v222 = vpack.c.b16 %v162, %v158
  %v223 = vpack.c.b16 %v163, %v159
  %v224 = vpack.c.b16 %v164, %v160
  %v225 = vpack.c.b16 %v169, %v165
  %v226 = vpack.c.b16 %v170, %v166
  %v227 = vpack.c.b16 %v171, %v167
  %v228 = vpack.c.b16 %v172, %v168
  %v229 = vpack.c.b16 %v177, %v173
  %v230 = vpack.c.b16 %v178, %v174
  %v231 = vpack.c.b16 %v179, %v175
  %v232 = vpack.c.b16 %v180, %v176
  %v233 = vpack.c.b16 %v185, %v181
  %v234 = vpack.c.b16 %v186, %v182
  %v235 = vpack.c.b16 %v187, %v183
  %v236 = vpack.c.b16 %v188, %v184
  %v237 = vpack.c.b16 %v193, %v189
  %v238 = vpack.c.b16 %v194, %v190
  %v239 = vpack.c.b16 %v195, %v191
  %v240 = vpack.c.b16 %v196, %v192
  %v241 = vpack.c.b16 %v201, %v197
  %v242 = vpack.c.b16 %v202, %v198
  %v243 = vpack.c.b16 %v203, %v199
  %v244 = vpack.c.b16 %v204, %v200
  %v245 = vpack.c.b16 %v209, %v205
  %v246 = vpack.c.b16 %v210, %v206
  %v247 = vpack.c.b16 %v211, %v207
  %v248 = vpack.c.b16 %v212, %v208
  %v249 = vpack.c.b16 %v217, %v213
  %v250 = vpack.c.b16 %v218, %v214
  %v251 = vpack.c.b16 %v219, %v215
  %v252 = vpack.c.b16 %v220, %v216
  %285 = vmatprep.subr.bf16.mxu0 %v222
  %286 = vmatpush1.bf16.msra.mxu0 %v221
  %287 = vmatprep.subr.bf16.mxu0 %v226
  %288 = vmatpush1.bf16.msra.mxu0 %v225
  %289 = vmatprep.subr.bf16.mxu0 %v230
  %290 = vmatpush1.bf16.msra.mxu0 %v229
  %291 = vmatprep.subr.bf16.mxu0 %v234
  %292 = vmatpush1.bf16.msra.mxu0 %v233
  %293 = vmatprep.subr.bf16.mxu0 %v238
  %294 = vmatpush1.bf16.msra.mxu0 %v237
  %295 = vmatprep.subr.bf16.mxu0 %v242
  %296 = vmatpush1.bf16.msra.mxu0 %v241
  %297 = vmatprep.subr.bf16.mxu0 %v246
  %298 = vmatpush1.bf16.msra.mxu0 %v245
  %299 = vmatprep.subr.bf16.mxu0 %v250
  %300 = vmatpush1.bf16.msra.mxu0 %v249
  %301 = vmatprep.subr.bf16.mxu0 0
  %302 = vmatpush1.bf16.msra.mxu0 0
  %303 = vmatprep.subr.bf16.mxu0 0
  %304 = vmatpush1.bf16.msra.mxu0 0
  %305 = vmatprep.subr.bf16.mxu0 0
  %306 = vmatpush1.bf16.msra.mxu0 0
  %307 = vmatprep.subr.bf16.mxu0 0
  %308 = vmatpush1.bf16.msra.mxu0 0
  %309 = vmatprep.subr.bf16.mxu0 0
  %310 = vmatpush1.bf16.msra.mxu0 0
  %311 = vmatprep.subr.bf16.mxu0 0
  %312 = vmatpush1.bf16.msra.mxu0 0
  %313 = vmatprep.subr.bf16.mxu0 0
  %314 = vmatpush1.bf16.msra.mxu0 0
  %315 = vmatprep.subr.bf16.mxu0 0
  %316 = vmatpush1.bf16.msra.mxu0 0
  %317 = vmatprep.mubr.bf16.mxu0 0
  %318 = vmatmul.mubr.bf16.gmra.mrb[0].mxu0 0
  %v319 = vpop.f32.mrb[0].mxu0
  %v320 = vadd.f32 0.0, %v319
  %v321 = vpop.f32.mrb[0].mxu0
  %v322 = vadd.f32 0.0, %v321
  %v323 = vpop.f32.mrb[0].mxu0
  %v324 = vpop.f32.mrb[0].mxu0
  %325 = vdwg.mxu0
  %326 = vmatprep.subr.bf16.mxu0 %v224
  %327 = vmatpush1.bf16.msra.mxu0 %v223
  %328 = vmatprep.subr.bf16.mxu0 %v228
  %329 = vmatpush1.bf16.msra.mxu0 %v227
  %330 = vmatprep.subr.bf16.mxu0 %v232
  %331 = vmatpush1.bf16.msra.mxu0 %v231
  %332 = vmatprep.subr.bf16.mxu0 %v236
  %333 = vmatpush1.bf16.msra.mxu0 %v235
  %334 = vmatprep.subr.bf16.mxu0 %v240
  %335 = vmatpush1.bf16.msra.mxu0 %v239
  %336 = vmatprep.subr.bf16.mxu0 %v244
  %337 = vmatpush1.bf16.msra.mxu0 %v243
  %338 = vmatprep.subr.bf16.mxu0 %v248
  %339 = vmatpush1.bf16.msra.mxu0 %v247
  %340 = vmatprep.subr.bf16.mxu0 %v252
  %341 = vmatpush1.bf16.msra.mxu0 %v251
  %342 = vmatprep.subr.bf16.mxu0 0
  %343 = vmatpush1.bf16.msra.mxu0 0
  %344 = vmatprep.subr.bf16.mxu0 0
  %345 = vmatpush1.bf16.msra.mxu0 0
  %346 = vmatprep.subr.bf16.mxu0 0
  %347 = vmatpush1.bf16.msra.mxu0 0
  %348 = vmatprep.subr.bf16.mxu0 0
  %349 = vmatpush1.bf16.msra.mxu0 0
  %350 = vmatprep.subr.bf16.mxu0 0
  %351 = vmatpush1.bf16.msra.mxu0 0
  %352 = vmatprep.subr.bf16.mxu0 0
  %353 = vmatpush1.bf16.msra.mxu0 0
  %354 = vmatprep.subr.bf16.mxu0 0
  %355 = vmatpush1.bf16.msra.mxu0 0
  %356 = vmatprep.subr.bf16.mxu0 0
  %357 = vmatpush1.bf16.msra.mxu0 0
  %358 = vmatprep.mubr.bf16.mxu0 0
  %359 = vmatmul.mubr.bf16.gmra.mrb[0].mxu0 0
  %v360 = vpop.f32.mrb[0].mxu0
  %v361 = vadd.f32 0.0, %v360
  %v362 = vpop.f32.mrb[0].mxu0
  %v363 = vadd.f32 0.0, %v362
  %v364 = vpop.f32.mrb[0].mxu0
  %v365 = vpop.f32.mrb[0].mxu0
  %366 = vdwg.mxu0
  %v371 = vcombine.low %v320, %v322
  %v372 = vcombine.low %v361, %v363
  %v375 = vadd.f32 %v123, %v371
  %v376 = vadd.f32 %v124, %v372
  %v377 = vxor.u32 %v375, 2147483648
  %v378 = vmul.f32 %v377, 1.442695
  %v379 = vpow.pop %v378
  %v380 = vadd.f32 %v379, 1.0
  %v381 = vrcp.pop %v380
  %v382 = vmul.f32 1.0, %v381
  %v384 = vrot.slane %v375, 4
  %v386 = vxor.u32 %v384, 2147483648
  %v387 = vmul.f32 %v386, 1.442695
  %v388 = vpow.pop %v387
  %v389 = vadd.f32 %v388, 1.0
  %v390 = vrcp.pop %v389
  %v391 = vmul.f32 1.0, %v390
  %v392 = vtanh.pop %v376
  %v394 = vrot.slane %v376, 4
  %v396 = vxor.u32 %v394, 2147483648
  %v397 = vmul.f32 %v396, 1.442695
  %v398 = vpow.pop %v397
  %v399 = vadd.f32 %v398, 1.0
  %v400 = vrcp.pop %v399
  %v401 = vmul.f32 1.0, %v400
  %v402 = vmul.f32 %v391, 0.0
  %v403 = vmul.f32 %v382, %v392
  %v404 = vadd.f32 %v402, %v403
  %v405 = vtanh.pop %v404
  %v406 = vmul.f32 %v401, %v405
  %v407 = vpack.c.bf16 %v406, %v406
  %v408 = vpack.c.bf16 %v121, %v121
  %v410 = vlaneseq
  %v411 = vshrl.u32 %v410, 7
  %v412 = vsub.s32 0, %v411
  %v413 = vrot.slane %v120, %v412
  %v414 = vlaneseq
  %v415 = vshrl.u32 %v414, 7
  %v416 = vsub.s32 1, %v415
  %v417 = vrot.slane %v120, %v416
  %v418 = vlaneseq
  %v419 = vshrl.u32 %v418, 7
  %v420 = vsub.s32 2, %v419
  %v421 = vrot.slane %v120, %v420
  %v422 = vlaneseq
  %v423 = vshrl.u32 %v422, 7
  %v424 = vsub.s32 3, %v423
  %v425 = vrot.slane %v120, %v424
  %v494 = vunpack.c.l.b16 %v56
  %v495 = vunpack.c.h.b16 %v56
  %v496 = vunpack.c.l.b16 %v57
  %v497 = vunpack.c.h.b16 %v57
  %v498 = vunpack.c.l.b16 %v58
  %v499 = vunpack.c.h.b16 %v58
  %v500 = vunpack.c.l.b16 %v59
  %v501 = vunpack.c.h.b16 %v59
  %v502 = vunpack.c.l.b16 %v60
  %v503 = vunpack.c.h.b16 %v60
  %v504 = vunpack.c.l.b16 %v61
  %v505 = vunpack.c.h.b16 %v61
  %v506 = vunpack.c.l.b16 %v62
  %v507 = vunpack.c.h.b16 %v62
  %v508 = vunpack.c.l.b16 %v63
  %v509 = vunpack.c.h.b16 %v63
  %v510 = vunpack.c.l.b16 %v64
  %v511 = vunpack.c.h.b16 %v64
  %v512 = vunpack.c.l.b16 %v65
  %v513 = vunpack.c.h.b16 %v65
  %v514 = vunpack.c.l.b16 %v66
  %v515 = vunpack.c.h.b16 %v66
  %v516 = vunpack.c.l.b16 %v67
  %v517 = vunpack.c.h.b16 %v67
  %v518 = vunpack.c.l.b16 %v68
  %v519 = vunpack.c.h.b16 %v68
  %v520 = vunpack.c.l.b16 %v69
  %v521 = vunpack.c.h.b16 %v69
  %v522 = vunpack.c.l.b16 %v70
  %v523 = vunpack.c.h.b16 %v70
  %v524 = vunpack.c.l.b16 %v71
  %v525 = vunpack.c.h.b16 %v71
  %v526 = vunpack.c.l.b16 %v72
  %v527 = vunpack.c.h.b16 %v72
  %v528 = vunpack.c.l.b16 %v73
  %v529 = vunpack.c.h.b16 %v73
  %v530 = vunpack.c.l.b16 %v74
  %v531 = vunpack.c.h.b16 %v74
  %v532 = vunpack.c.l.b16 %v75
  %v533 = vunpack.c.h.b16 %v75
  %v534 = vunpack.c.l.b16 %v76
  %v535 = vunpack.c.h.b16 %v76
  %v536 = vunpack.c.l.b16 %v77
  %v537 = vunpack.c.h.b16 %v77
  %v538 = vunpack.c.l.b16 %v78
  %v539 = vunpack.c.h.b16 %v78
  %v540 = vunpack.c.l.b16 %v79
  %v541 = vunpack.c.h.b16 %v79
  %v542 = vunpack.c.l.b16 %v80
  %v543 = vunpack.c.h.b16 %v80
  %v544 = vunpack.c.l.b16 %v81
  %v545 = vunpack.c.h.b16 %v81
  %v546 = vunpack.c.l.b16 %v82
  %v547 = vunpack.c.h.b16 %v82
  %v548 = vunpack.c.l.b16 %v83
  %v549 = vunpack.c.h.b16 %v83
  %v550 = vunpack.c.l.b16 %v84
  %v551 = vunpack.c.h.b16 %v84
  %v552 = vunpack.c.l.b16 %v85
  %v553 = vunpack.c.h.b16 %v85
  %v554 = vunpack.c.l.b16 %v86
  %v555 = vunpack.c.h.b16 %v86
  %v556 = vunpack.c.l.b16 %v87
  %v557 = vunpack.c.h.b16 %v87
  %v558 = vunpack.c.l.b16 %v88
  %v559 = vunpack.c.h.b16 %v88
  %v560 = vunpack.c.l.b16 %v89
  %v561 = vunpack.c.h.b16 %v89
  %v562 = vunpack.c.l.b16 %v90
  %v563 = vunpack.c.h.b16 %v90
  %v564 = vunpack.c.l.b16 %v91
  %v565 = vunpack.c.h.b16 %v91
  %v566 = vunpack.c.l.b16 %v92
  %v567 = vunpack.c.h.b16 %v92
  %v568 = vunpack.c.l.b16 %v93
  %v569 = vunpack.c.h.b16 %v93
  %v570 = vunpack.c.l.b16 %v94
  %v571 = vunpack.c.h.b16 %v94
  %v572 = vunpack.c.l.b16 %v95
  %v573 = vunpack.c.h.b16 %v95
  %v574 = vunpack.c.l.b16 %v96
  %v575 = vunpack.c.h.b16 %v96
  %v576 = vunpack.c.l.b16 %v97
  %v577 = vunpack.c.h.b16 %v97
  %v578 = vunpack.c.l.b16 %v98
  %v579 = vunpack.c.h.b16 %v98
  %v580 = vunpack.c.l.b16 %v99
  %v581 = vunpack.c.h.b16 %v99
  %v582 = vunpack.c.l.b16 %v100
  %v583 = vunpack.c.h.b16 %v100
  %v584 = vunpack.c.l.b16 %v101
  %v585 = vunpack.c.h.b16 %v101
  %v586 = vunpack.c.l.b16 %v102
  %v587 = vunpack.c.h.b16 %v102
  %v588 = vunpack.c.l.b16 %v103
  %v589 = vunpack.c.h.b16 %v103
  %v590 = vunpack.c.l.b16 %v104
  %v591 = vunpack.c.h.b16 %v104
  %v592 = vunpack.c.l.b16 %v105
  %v593 = vunpack.c.h.b16 %v105
  %v594 = vunpack.c.l.b16 %v106
  %v595 = vunpack.c.h.b16 %v106
  %v596 = vunpack.c.l.b16 %v107
  %v597 = vunpack.c.h.b16 %v107
  %v598 = vunpack.c.l.b16 %v108
  %v599 = vunpack.c.h.b16 %v108
  %v600 = vunpack.c.l.b16 %v109
  %v601 = vunpack.c.h.b16 %v109
  %v602 = vunpack.c.l.b16 %v110
  %v603 = vunpack.c.h.b16 %v110
  %v604 = vunpack.c.l.b16 %v111
  %v605 = vunpack.c.h.b16 %v111
  %v606 = vunpack.c.l.b16 %v112
  %v607 = vunpack.c.h.b16 %v112
  %v608 = vunpack.c.l.b16 %v113
  %v609 = vunpack.c.h.b16 %v113
  %v610 = vunpack.c.l.b16 %v114
  %v611 = vunpack.c.h.b16 %v114
  %v612 = vunpack.c.l.b16 %v115
  %v613 = vunpack.c.h.b16 %v115
  %v614 = vunpack.c.l.b16 %v116
  %v615 = vunpack.c.h.b16 %v116
  %v616 = vunpack.c.l.b16 %v117
  %v617 = vunpack.c.h.b16 %v117
  %v618 = vunpack.c.l.b16 %v118
  %v619 = vunpack.c.h.b16 %v118
  %v620 = vunpack.c.l.b16 %v119
  %v621 = vunpack.c.h.b16 %v119
  %v622 = vpack.c.b16 %v498, %v494
  %v623 = vpack.c.b16 %v499, %v495
  %v624 = vpack.c.b16 %v500, %v496
  %v625 = vpack.c.b16 %v501, %v497
  %v626 = vpack.c.b16 %v506, %v502
  %v627 = vpack.c.b16 %v507, %v503
  %v628 = vpack.c.b16 %v508, %v504
  %v629 = vpack.c.b16 %v509, %v505
  %v630 = vpack.c.b16 %v514, %v510
  %v631 = vpack.c.b16 %v515, %v511
  %v632 = vpack.c.b16 %v516, %v512
  %v633 = vpack.c.b16 %v517, %v513
  %v634 = vpack.c.b16 %v522, %v518
  %v635 = vpack.c.b16 %v523, %v519
  %v636 = vpack.c.b16 %v524, %v520
  %v637 = vpack.c.b16 %v525, %v521
  %v638 = vpack.c.b16 %v530, %v526
  %v639 = vpack.c.b16 %v531, %v527
  %v640 = vpack.c.b16 %v532, %v528
  %v641 = vpack.c.b16 %v533, %v529
  %v642 = vpack.c.b16 %v538, %v534
  %v643 = vpack.c.b16 %v539, %v535
  %v644 = vpack.c.b16 %v540, %v536
  %v645 = vpack.c.b16 %v541, %v537
  %v646 = vpack.c.b16 %v546, %v542
  %v647 = vpack.c.b16 %v547, %v543
  %v648 = vpack.c.b16 %v548, %v544
  %v649 = vpack.c.b16 %v549, %v545
  %v650 = vpack.c.b16 %v554, %v550
  %v651 = vpack.c.b16 %v555, %v551
  %v652 = vpack.c.b16 %v556, %v552
  %v653 = vpack.c.b16 %v557, %v553
  %v654 = vpack.c.b16 %v562, %v558
  %v655 = vpack.c.b16 %v563, %v559
  %v656 = vpack.c.b16 %v564, %v560
  %v657 = vpack.c.b16 %v565, %v561
  %v658 = vpack.c.b16 %v570, %v566
  %v659 = vpack.c.b16 %v571, %v567
  %v660 = vpack.c.b16 %v572, %v568
  %v661 = vpack.c.b16 %v573, %v569
  %v662 = vpack.c.b16 %v578, %v574
  %v663 = vpack.c.b16 %v579, %v575
  %v664 = vpack.c.b16 %v580, %v576
  %v665 = vpack.c.b16 %v581, %v577
  %v666 = vpack.c.b16 %v586, %v582
  %v667 = vpack.c.b16 %v587, %v583
  %v668 = vpack.c.b16 %v588, %v584
  %v669 = vpack.c.b16 %v589, %v585
  %v670 = vpack.c.b16 %v594, %v590
  %v671 = vpack.c.b16 %v595, %v591
  %v672 = vpack.c.b16 %v596, %v592
  %v673 = vpack.c.b16 %v597, %v593
  %v674 = vpack.c.b16 %v602, %v598
  %v675 = vpack.c.b16 %v603, %v599
  %v676 = vpack.c.b16 %v604, %v600
  %v677 = vpack.c.b16 %v605, %v601
  %v678 = vpack.c.b16 %v610, %v606
  %v679 = vpack.c.b16 %v611, %v607
  %v680 = vpack.c.b16 %v612, %v608
  %v681 = vpack.c.b16 %v613, %v609
  %v682 = vpack.c.b16 %v618, %v614
  %v683 = vpack.c.b16 %v619, %v615
  %v684 = vpack.c.b16 %v620, %v616
  %v685 = vpack.c.b16 %v621, %v617
  %750 = vmatprep.subr.bf16.mxu0 %v623
  %751 = vmatpush1.bf16.msra.mxu0 %v622
  %752 = vmatprep.subr.bf16.mxu0 %v627
  %753 = vmatpush1.bf16.msra.mxu0 %v626
  %754 = vmatprep.subr.bf16.mxu0 %v631
  %755 = vmatpush1.bf16.msra.mxu0 %v630
  %756 = vmatprep.subr.bf16.mxu0 %v635
  %757 = vmatpush1.bf16.msra.mxu0 %v634
  %758 = vmatprep.subr.bf16.mxu0 %v639
  %759 = vmatpush1.bf16.msra.mxu0 %v638
  %760 = vmatprep.subr.bf16.mxu0 %v643
  %761 = vmatpush1.bf16.msra.mxu0 %v642
  %762 = vmatprep.subr.bf16.mxu0 %v647
  %763 = vmatpush1.bf16.msra.mxu0 %v646
  %764 = vmatprep.subr.bf16.mxu0 %v651
  %765 = vmatpush1.bf16.msra.mxu0 %v650
  %766 = vmatprep.subr.bf16.mxu0 %v655
  %767 = vmatpush1.bf16.msra.mxu0 %v654
  %768 = vmatprep.subr.bf16.mxu0 %v659
  %769 = vmatpush1.bf16.msra.mxu0 %v658
  %770 = vmatprep.subr.bf16.mxu0 %v663
  %771 = vmatpush1.bf16.msra.mxu0 %v662
  %772 = vmatprep.subr.bf16.mxu0 %v667
  %773 = vmatpush1.bf16.msra.mxu0 %v666
  %774 = vmatprep.subr.bf16.mxu0 %v671
  %775 = vmatpush1.bf16.msra.mxu0 %v670
  %776 = vmatprep.subr.bf16.mxu0 %v675
  %777 = vmatpush1.bf16.msra.mxu0 %v674
  %778 = vmatprep.subr.bf16.mxu0 %v679
  %779 = vmatpush1.bf16.msra.mxu0 %v678
  %780 = vmatprep.subr.bf16.mxu0 %v683
  %781 = vmatpush1.bf16.msra.mxu0 %v682
  %782 = vmatprep.mubr.bf16.mxu0 %v408
  %783 = vmatmul.mubr.bf16.gmra.mrb[0].mxu0 %v407
  %v784 = vpop.f32.mrb[0].mxu0
  %v785 = vadd.f32 %v413, %v784
  %v786 = vpop.f32.mrb[0].mxu0
  %v787 = vadd.f32 %v417, %v786
  %v788 = vpop.f32.mrb[0].mxu0
  %v789 = vpop.f32.mrb[0].mxu0
  %790 = vdwg.mxu0
  %791 = vmatprep.subr.bf16.mxu0 %v625
  %792 = vmatpush1.bf16.msra.mxu0 %v624
  %793 = vmatprep.subr.bf16.mxu0 %v629
  %794 = vmatpush1.bf16.msra.mxu0 %v628
  %795 = vmatprep.subr.bf16.mxu0 %v633
  %796 = vmatpush1.bf16.msra.mxu0 %v632
  %797 = vmatprep.subr.bf16.mxu0 %v637
  %798 = vmatpush1.bf16.msra.mxu0 %v636
  %799 = vmatprep.subr.bf16.mxu0 %v641
  %800 = vmatpush1.bf16.msra.mxu0 %v640
  %801 = vmatprep.subr.bf16.mxu0 %v645
  %802 = vmatpush1.bf16.msra.mxu0 %v644
  %803 = vmatprep.subr.bf16.mxu0 %v649
  %804 = vmatpush1.bf16.msra.mxu0 %v648
  %805 = vmatprep.subr.bf16.mxu0 %v653
  %806 = vmatpush1.bf16.msra.mxu0 %v652
  %807 = vmatprep.subr.bf16.mxu0 %v657
  %808 = vmatpush1.bf16.msra.mxu0 %v656
  %809 = vmatprep.subr.bf16.mxu0 %v661
  %810 = vmatpush1.bf16.msra.mxu0 %v660
  %811 = vmatprep.subr.bf16.mxu0 %v665
  %812 = vmatpush1.bf16.msra.mxu0 %v664
  %813 = vmatprep.subr.bf16.mxu0 %v669
  %814 = vmatpush1.bf16.msra.mxu0 %v668
  %815 = vmatprep.subr.bf16.mxu0 %v673
  %816 = vmatpush1.bf16.msra.mxu0 %v672
  %817 = vmatprep.subr.bf16.mxu0 %v677
  %818 = vmatpush1.bf16.msra.mxu0 %v676
  %819 = vmatprep.subr.bf16.mxu0 %v681
  %820 = vmatpush1.bf16.msra.mxu0 %v680
  %821 = vmatprep.subr.bf16.mxu0 %v685
  %822 = vmatpush1.bf16.msra.mxu0 %v684
  %823 = vmatprep.mubr.bf16.mxu0 %v408
  %824 = vmatmul.mubr.bf16.gmra.mrb[0].mxu0 %v407
  %v825 = vpop.f32.mrb[0].mxu0
  %v826 = vadd.f32 %v421, %v825
  %v827 = vpop.f32.mrb[0].mxu0
  %v828 = vadd.f32 %v425, %v827
  %v829 = vpop.f32.mrb[0].mxu0
  %v830 = vpop.f32.mrb[0].mxu0
  %831 = vdwg.mxu0
  %v832 = vxor.u32 %v785, 2147483648
  %v833 = vmul.f32 %v832, 1.442695
  %v834 = vpow.pop %v833
  %v835 = vadd.f32 %v834, 1.0
  %v836 = vrcp.pop %v835
  %v837 = vmul.f32 1.0, %v836
  %v838 = vxor.u32 %v787, 2147483648
  %v839 = vmul.f32 %v838, 1.442695
  %v840 = vpow.pop %v839
  %v841 = vadd.f32 %v840, 1.0
  %v842 = vrcp.pop %v841
  %v843 = vmul.f32 1.0, %v842
  %v844 = vtanh.pop %v826
  %v845 = vxor.u32 %v828, 2147483648
  %v846 = vmul.f32 %v845, 1.442695
  %v847 = vpow.pop %v846
  %v848 = vadd.f32 %v847, 1.0
  %v849 = vrcp.pop %v848
  %v850 = vmul.f32 1.0, %v849
  %v851 = vmul.f32 %v843, %v122
  %v852 = vmul.f32 %v837, %v844
  %v853 = vadd.f32 %v851, %v852
  %v854 = vtanh.pop %v853
  %v855 = vmul.f32 %v850, %v854
  %v856 = vpack.c.bf16 %v855, %v855
  %857 = vst [vmem:[%s6] sm:$0x3] %v856
  %s858 = scalar_lea.vmem %s0, 16
  %v859 = vld [vmem:[%s858] sm:$0xff]
  %v860 = vld [vmem:[%s858 + $0x8] sm:$0xff]
  %861 = vmatprep.subr.bf16.mxu0 %v222
  %862 = vmatpush1.bf16.msra.mxu0 %v221
  %863 = vmatprep.subr.bf16.mxu0 %v226
  %864 = vmatpush1.bf16.msra.mxu0 %v225
  %865 = vmatprep.subr.bf16.mxu0 %v230
  %866 = vmatpush1.bf16.msra.mxu0 %v229
  %867 = vmatprep.subr.bf16.mxu0 %v234
  %868 = vmatpush1.bf16.msra.mxu0 %v233
  %869 = vmatprep.subr.bf16.mxu0 %v238
  %870 = vmatpush1.bf16.msra.mxu0 %v237
  %871 = vmatprep.subr.bf16.mxu0 %v242
  %872 = vmatpush1.bf16.msra.mxu0 %v241
  %873 = vmatprep.subr.bf16.mxu0 %v246
  %874 = vmatpush1.bf16.msra.mxu0 %v245
  %875 = vmatprep.subr.bf16.mxu0 %v250
  %876 = vmatpush1.bf16.msra.mxu0 %v249
  %877 = vmatprep.subr.bf16.mxu0 0
  %878 = vmatpush1.bf16.msra.mxu0 0
  %879 = vmatprep.subr.bf16.mxu0 0
  %880 = vmatpush1.bf16.msra.mxu0 0
  %881 = vmatprep.subr.bf16.mxu0 0
  %882 = vmatpush1.bf16.msra.mxu0 0
  %883 = vmatprep.subr.bf16.mxu0 0
  %884 = vmatpush1.bf16.msra.mxu0 0
  %885 = vmatprep.subr.bf16.mxu0 0
  %886 = vmatpush1.bf16.msra.mxu0 0
  %887 = vmatprep.subr.bf16.mxu0 0
  %888 = vmatpush1.bf16.msra.mxu0 0
  %889 = vmatprep.subr.bf16.mxu0 0
  %890 = vmatpush1.bf16.msra.mxu0 0
  %891 = vmatprep.subr.bf16.mxu0 0
  %892 = vmatpush1.bf16.msra.mxu0 0
  %893 = vmatprep.mubr.bf16.mxu0 0
  %894 = vmatmul.mubr.bf16.gmra.mrb[0].mxu0 %v407
  %v895 = vpop.f32.mrb[0].mxu0
  %v896 = vadd.f32 0.0, %v895
  %v897 = vpop.f32.mrb[0].mxu0
  %v898 = vadd.f32 0.0, %v897
  %v899 = vpop.f32.mrb[0].mxu0
  %v900 = vpop.f32.mrb[0].mxu0
  %901 = vdwg.mxu0
  %902 = vmatprep.subr.bf16.mxu0 %v224
  %903 = vmatpush1.bf16.msra.mxu0 %v223
  %904 = vmatprep.subr.bf16.mxu0 %v228
  %905 = vmatpush1.bf16.msra.mxu0 %v227
  %906 = vmatprep.subr.bf16.mxu0 %v232
  %907 = vmatpush1.bf16.msra.mxu0 %v231
  %908 = vmatprep.subr.bf16.mxu0 %v236
  %909 = vmatpush1.bf16.msra.mxu0 %v235
  %910 = vmatprep.subr.bf16.mxu0 %v240
  %911 = vmatpush1.bf16.msra.mxu0 %v239
  %912 = vmatprep.subr.bf16.mxu0 %v244
  %913 = vmatpush1.bf16.msra.mxu0 %v243
  %914 = vmatprep.subr.bf16.mxu0 %v248
  %915 = vmatpush1.bf16.msra.mxu0 %v247
  %916 = vmatprep.subr.bf16.mxu0 %v252
  %917 = vmatpush1.bf16.msra.mxu0 %v251
  %918 = vmatprep.subr.bf16.mxu0 0
  %919 = vmatpush1.bf16.msra.mxu0 0
  %920 = vmatprep.subr.bf16.mxu0 0
  %921 = vmatpush1.bf16.msra.mxu0 0
  %922 = vmatprep.subr.bf16.mxu0 0
  %923 = vmatpush1.bf16.msra.mxu0 0
  %924 = vmatprep.subr.bf16.mxu0 0
  %925 = vmatpush1.bf16.msra.mxu0 0
  %926 = vmatprep.subr.bf16.mxu0 0
  %927 = vmatpush1.bf16.msra.mxu0 0
  %928 = vmatprep.subr.bf16.mxu0 0
  %929 = vmatpush1.bf16.msra.mxu0 0
  %930 = vmatprep.subr.bf16.mxu0 0
  %931 = vmatpush1.bf16.msra.mxu0 0
  %932 = vmatprep.subr.bf16.mxu0 0
  %933 = vmatpush1.bf16.msra.mxu0 0
  %934 = vmatprep.mubr.bf16.mxu0 0
  %935 = vmatmul.mubr.bf16.gmra.mrb[0].mxu0 %v407
  %v936 = vpop.f32.mrb[0].mxu0
  %v937 = vadd.f32 0.0, %v936
  %v938 = vpop.f32.mrb[0].mxu0
  %v939 = vadd.f32 0.0, %v938
  %v940 = vpop.f32.mrb[0].mxu0
  %v941 = vpop.f32.mrb[0].mxu0
  %942 = vdwg.mxu0
  %v947 = vcombine.low %v896, %v898
  %v948 = vcombine.low %v937, %v939
  %v951 = vadd.f32 %v859, %v947
  %v952 = vadd.f32 %v860, %v948
  %v953 = vxor.u32 %v951, 2147483648
  %v954 = vmul.f32 %v953, 1.442695
  %v955 = vpow.pop %v954
  %v956 = vadd.f32 %v955, 1.0
  %v957 = vrcp.pop %v956
  %v958 = vmul.f32 1.0, %v957
  %v960 = vrot.slane %v951, 4
  %v962 = vxor.u32 %v960, 2147483648
  %v963 = vmul.f32 %v962, 1.442695
  %v964 = vpow.pop %v963
  %v965 = vadd.f32 %v964, 1.0
  %v966 = vrcp.pop %v965
  %v967 = vmul.f32 1.0, %v966
  %v968 = vtanh.pop %v952
  %v970 = vrot.slane %v952, 4
  %v972 = vxor.u32 %v970, 2147483648
  %v973 = vmul.f32 %v972, 1.442695
  %v974 = vpow.pop %v973
  %v975 = vadd.f32 %v974, 1.0
  %v976 = vrcp.pop %v975
  %v977 = vmul.f32 1.0, %v976
  %v978 = vmul.f32 %v967, %v404
  %v979 = vmul.f32 %v958, %v968
  %v980 = vadd.f32 %v978, %v979
  %v981 = vtanh.pop %v980
  %v982 = vmul.f32 %v977, %v981
  %v983 = vpack.c.bf16 %v982, %v982
  %984 = vmatprep.subr.bf16.mxu0 %v623
  %985 = vmatpush1.bf16.msra.mxu0 %v622
  %986 = vmatprep.subr.bf16.mxu0 %v627
  %987 = vmatpush1.bf16.msra.mxu0 %v626
  %988 = vmatprep.subr.bf16.mxu0 %v631
  %989 = vmatpush1.bf16.msra.mxu0 %v630
  %990 = vmatprep.subr.bf16.mxu0 %v635
  %991 = vmatpush1.bf16.msra.mxu0 %v634
  %992 = vmatprep.subr.bf16.mxu0 %v639
  %993 = vmatpush1.bf16.msra.mxu0 %v638
  %994 = vmatprep.subr.bf16.mxu0 %v643
  %995 = vmatpush1.bf16.msra.mxu0 %v642
  %996 = vmatprep.subr.bf16.mxu0 %v647
  %997 = vmatpush1.bf16.msra.mxu0 %v646
  %998 = vmatprep.subr.bf16.mxu0 %v651
  %999 = vmatpush1.bf16.msra.mxu0 %v650
  %1000 = vmatprep.subr.bf16.mxu0 %v655
  %1001 = vmatpush1.bf16.msra.mxu0 %v654
  %1002 = vmatprep.subr.bf16.mxu0 %v659
  %1003 = vmatpush1.bf16.msra.mxu0 %v658
  %1004 = vmatprep.subr.bf16.mxu0 %v663
  %1005 = vmatpush1.bf16.msra.mxu0 %v662
  %1006 = vmatprep.subr.bf16.mxu0 %v667
  %1007 = vmatpush1.bf16.msra.mxu0 %v666
  %1008 = vmatprep.subr.bf16.mxu0 %v671
  %1009 = vmatpush1.bf16.msra.mxu0 %v670
  %1010 = vmatprep.subr.bf16.mxu0 %v675
  %1011 = vmatpush1.bf16.msra.mxu0 %v674
  %1012 = vmatprep.subr.bf16.mxu0 %v679
  %1013 = vmatpush1.bf16.msra.mxu0 %v678
  %1014 = vmatprep.subr.bf16.mxu0 %v683
  %1015 = vmatpush1.bf16.msra.mxu0 %v682
  %1016 = vmatprep.mubr.bf16.mxu0 %v856
  %1017 = vmatmul.mubr.bf16.gmra.mrb[0].mxu0 %v983
  %v1018 = vpop.f32.mrb[0].mxu0
  %v1019 = vadd.f32 %v413, %v1018
  %v1020 = vpop.f32.mrb[0].mxu0
  %v1021 = vadd.f32 %v417, %v1020
  %v1022 = vpop.f32.mrb[0].mxu0
  %v1023 = vpop.f32.mrb[0].mxu0
  %1024 = vdwg.mxu0
  %1025 = vmatprep.subr.bf16.mxu0 %v625
  %1026 = vmatpush1.bf16.msra.mxu0 %v624
  %1027 = vmatprep.subr.bf16.mxu0 %v629
  %1028 = vmatpush1.bf16.msra.mxu0 %v628
  %1029 = vmatprep.subr.bf16.mxu0 %v633
  %1030 = vmatpush1.bf16.msra.mxu0 %v632
  %1031 = vmatprep.subr.bf16.mxu0 %v637
  %1032 = vmatpush1.bf16.msra.mxu0 %v636
  %1033 = vmatprep.subr.bf16.mxu0 %v641
  %1034 = vmatpush1.bf16.msra.mxu0 %v640
  %1035 = vmatprep.subr.bf16.mxu0 %v645
  %1036 = vmatpush1.bf16.msra.mxu0 %v644
  %1037 = vmatprep.subr.bf16.mxu0 %v649
  %1038 = vmatpush1.bf16.msra.mxu0 %v648
  %1039 = vmatprep.subr.bf16.mxu0 %v653
  %1040 = vmatpush1.bf16.msra.mxu0 %v652
  %1041 = vmatprep.subr.bf16.mxu0 %v657
  %1042 = vmatpush1.bf16.msra.mxu0 %v656
  %1043 = vmatprep.subr.bf16.mxu0 %v661
  %1044 = vmatpush1.bf16.msra.mxu0 %v660
  %1045 = vmatprep.subr.bf16.mxu0 %v665
  %1046 = vmatpush1.bf16.msra.mxu0 %v664
  %1047 = vmatprep.subr.bf16.mxu0 %v669
  %1048 = vmatpush1.bf16.msra.mxu0 %v668
  %1049 = vmatprep.subr.bf16.mxu0 %v673
  %1050 = vmatpush1.bf16.msra.mxu0 %v672
  %1051 = vmatprep.subr.bf16.mxu0 %v677
  %1052 = vmatpush1.bf16.msra.mxu0 %v676
  %1053 = vmatprep.subr.bf16.mxu0 %v681
  %1054 = vmatpush1.bf16.msra.mxu0 %v680
  %1055 = vmatprep.subr.bf16.mxu0 %v685
  %1056 = vmatpush1.bf16.msra.mxu0 %v684
  %1057 = vmatprep.mubr.bf16.mxu0 %v856
  %1058 = vmatmul.mubr.bf16.gmra.mrb[0].mxu0 %v983
  %v1059 = vpop.f32.mrb[0].mxu0
  %v1060 = vadd.f32 %v421, %v1059
  %v1061 = vpop.f32.mrb[0].mxu0
  %v1062 = vadd.f32 %v425, %v1061
  %v1063 = vpop.f32.mrb[0].mxu0
  %v1064 = vpop.f32.mrb[0].mxu0
  %1065 = vdwg.mxu0
  %v1066 = vxor.u32 %v1019, 2147483648
  %v1067 = vmul.f32 %v1066, 1.442695
  %v1068 = vpow.pop %v1067
  %v1069 = vadd.f32 %v1068, 1.0
  %v1070 = vrcp.pop %v1069
  %v1071 = vmul.f32 1.0, %v1070
  %v1072 = vxor.u32 %v1021, 2147483648
  %v1073 = vmul.f32 %v1072, 1.442695
  %v1074 = vpow.pop %v1073
  %v1075 = vadd.f32 %v1074, 1.0
  %v1076 = vrcp.pop %v1075
  %v1077 = vmul.f32 1.0, %v1076
  %v1078 = vtanh.pop %v1060
  %v1079 = vxor.u32 %v1062, 2147483648
  %v1080 = vmul.f32 %v1079, 1.442695
  %v1081 = vpow.pop %v1080
  %v1082 = vadd.f32 %v1081, 1.0
  %v1083 = vrcp.pop %v1082
  %v1084 = vmul.f32 1.0, %v1083
  %v1085 = vmul.f32 %v1077, %v853
  %v1086 = vmul.f32 %v1071, %v1078
  %v1087 = vadd.f32 %v1085, %v1086
  %v1088 = vtanh.pop %v1087
  %v1089 = vmul.f32 %v1084, %v1088
  %v1090 = vpack.c.bf16 %v1089, %v1089
  %s1091 = scalar_lea.vmem %s6, 2
  %1092 = vst [vmem:[%s1091] sm:$0x3] %v1090
  %s1093 = scalar_lea.vmem %s0, 32
  %v1094 = vld [vmem:[%s1093] sm:$0xff]
  %v1095 = vld [vmem:[%s1093 + $0x8] sm:$0xff]
  %1096 = vmatprep.subr.bf16.mxu0 %v222
  %1097 = vmatpush1.bf16.msra.mxu0 %v221
  %1098 = vmatprep.subr.bf16.mxu0 %v226
  %1099 = vmatpush1.bf16.msra.mxu0 %v225
  %1100 = vmatprep.subr.bf16.mxu0 %v230
  %1101 = vmatpush1.bf16.msra.mxu0 %v229
  %1102 = vmatprep.subr.bf16.mxu0 %v234
  %1103 = vmatpush1.bf16.msra.mxu0 %v233
  %1104 = vmatprep.subr.bf16.mxu0 %v238
  %1105 = vmatpush1.bf16.msra.mxu0 %v237
  %1106 = vmatprep.subr.bf16.mxu0 %v242
  %1107 = vmatpush1.bf16.msra.mxu0 %v241
  %1108 = vmatprep.subr.bf16.mxu0 %v246
  %1109 = vmatpush1.bf16.msra.mxu0 %v245
  %1110 = vmatprep.subr.bf16.mxu0 %v250
  %1111 = vmatpush1.bf16.msra.mxu0 %v249
  %1112 = vmatprep.subr.bf16.mxu0 0
  %1113 = vmatpush1.bf16.msra.mxu0 0
  %1114 = vmatprep.subr.bf16.mxu0 0
  %1115 = vmatpush1.bf16.msra.mxu0 0
  %1116 = vmatprep.subr.bf16.mxu0 0
  %1117 = vmatpush1.bf16.msra.mxu0 0
  %1118 = vmatprep.subr.bf16.mxu0 0
  %1119 = vmatpush1.bf16.msra.mxu0 0
  %1120 = vmatprep.subr.bf16.mxu0 0
  %1121 = vmatpush1.bf16.msra.mxu0 0
  %1122 = vmatprep.subr.bf16.mxu0 0
  %1123 = vmatpush1.bf16.msra.mxu0 0
  %1124 = vmatprep.subr.bf16.mxu0 0
  %1125 = vmatpush1.bf16.msra.mxu0 0
  %1126 = vmatprep.subr.bf16.mxu0 0
  %1127 = vmatpush1.bf16.msra.mxu0 0
  %1128 = vmatprep.mubr.bf16.mxu0 0
  %1129 = vmatmul.mubr.bf16.gmra.mrb[0].mxu0 %v983
  %v1130 = vpop.f32.mrb[0].mxu0
  %v1131 = vadd.f32 0.0, %v1130
  %v1132 = vpop.f32.mrb[0].mxu0
  %v1133 = vadd.f32 0.0, %v1132
  %v1134 = vpop.f32.mrb[0].mxu0
  %v1135 = vpop.f32.mrb[0].mxu0
  %1136 = vdwg.mxu0
  %1137 = vmatprep.subr.bf16.mxu0 %v224
  %1138 = vmatpush1.bf16.msra.mxu0 %v223
  %1139 = vmatprep.subr.bf16.mxu0 %v228
  %1140 = vmatpush1.bf16.msra.mxu0 %v227
  %1141 = vmatprep.subr.bf16.mxu0 %v232
  %1142 = vmatpush1.bf16.msra.mxu0 %v231
  %1143 = vmatprep.subr.bf16.mxu0 %v236
  %1144 = vmatpush1.bf16.msra.mxu0 %v235
  %1145 = vmatprep.subr.bf16.mxu0 %v240
  %1146 = vmatpush1.bf16.msra.mxu0 %v239
  %1147 = vmatprep.subr.bf16.mxu0 %v244
  %1148 = vmatpush1.bf16.msra.mxu0 %v243
  %1149 = vmatprep.subr.bf16.mxu0 %v248
  %1150 = vmatpush1.bf16.msra.mxu0 %v247
  %1151 = vmatprep.subr.bf16.mxu0 %v252
  %1152 = vmatpush1.bf16.msra.mxu0 %v251
  %1153 = vmatprep.subr.bf16.mxu0 0
  %1154 = vmatpush1.bf16.msra.mxu0 0
  %1155 = vmatprep.subr.bf16.mxu0 0
  %1156 = vmatpush1.bf16.msra.mxu0 0
  %1157 = vmatprep.subr.bf16.mxu0 0
  %1158 = vmatpush1.bf16.msra.mxu0 0
  %1159 = vmatprep.subr.bf16.mxu0 0
  %1160 = vmatpush1.bf16.msra.mxu0 0
  %1161 = vmatprep.subr.bf16.mxu0 0
  %1162 = vmatpush1.bf16.msra.mxu0 0
  %1163 = vmatprep.subr.bf16.mxu0 0
  %1164 = vmatpush1.bf16.msra.mxu0 0
  %1165 = vmatprep.subr.bf16.mxu0 0
  %1166 = vmatpush1.bf16.msra.mxu0 0
  %1167 = vmatprep.subr.bf16.mxu0 0
  %1168 = vmatpush1.bf16.msra.mxu0 0
  %1169 = vmatprep.mubr.bf16.mxu0 0
  %1170 = vmatmul.mubr.bf16.gmra.mrb[0].mxu0 %v983
  %v1171 = vpop.f32.mrb[0].mxu0
  %v1172 = vadd.f32 0.0, %v1171
  %v1173 = vpop.f32.mrb[0].mxu0
  %v1174 = vadd.f32 0.0, %v1173
  %v1175 = vpop.f32.mrb[0].mxu0
  %v1176 = vpop.f32.mrb[0].mxu0
  %1177 = vdwg.mxu0
  %v1182 = vcombine.low %v1131, %v1133
  %v1183 = vcombine.low %v1172, %v1174
  %v1186 = vadd.f32 %v1094, %v1182
  %v1187 = vadd.f32 %v1095, %v1183
  %v1188 = vxor.u32 %v1186, 2147483648
  %v1189 = vmul.f32 %v1188, 1.442695
  %v1190 = vpow.pop %v1189
  %v1191 = vadd.f32 %v1190, 1.0
  %v1192 = vrcp.pop %v1191
  %v1193 = vmul.f32 1.0, %v1192
  %v1195 = vrot.slane %v1186, 4
  %v1197 = vxor.u32 %v1195, 2147483648
  %v1198 = vmul.f32 %v1197, 1.442695
  %v1199 = vpow.pop %v1198
  %v1200 = vadd.f32 %v1199, 1.0
  %v1201 = vrcp.pop %v1200
  %v1202 = vmul.f32 1.0, %v1201
  %v1203 = vtanh.pop %v1187
  %v1205 = vrot.slane %v1187, 4
  %v1207 = vxor.u32 %v1205, 2147483648
  %v1208 = vmul.f32 %v1207, 1.442695
  %v1209 = vpow.pop %v1208
  %v1210 = vadd.f32 %v1209, 1.0
  %v1211 = vrcp.pop %v1210
  %v1212 = vmul.f32 1.0, %v1211
  %v1213 = vmul.f32 %v1202, %v980
  %v1214 = vmul.f32 %v1193, %v1203
  %v1215 = vadd.f32 %v1213, %v1214
  %v1216 = vtanh.pop %v1215
  %v1217 = vmul.f32 %v1212, %v1216
  %v1218 = vpack.c.bf16 %v1217, %v1217
  %1219 = vmatprep.subr.bf16.mxu0 %v623
  %1220 = vmatpush1.bf16.msra.mxu0 %v622
  %1221 = vmatprep.subr.bf16.mxu0 %v627
  %1222 = vmatpush1.bf16.msra.mxu0 %v626
  %1223 = vmatprep.subr.bf16.mxu0 %v631
  %1224 = vmatpush1.bf16.msra.mxu0 %v630
  %1225 = vmatprep.subr.bf16.mxu0 %v635
  %1226 = vmatpush1.bf16.msra.mxu0 %v634
  %1227 = vmatprep.subr.bf16.mxu0 %v639
  %1228 = vmatpush1.bf16.msra.mxu0 %v638
  %1229 = vmatprep.subr.bf16.mxu0 %v643
  %1230 = vmatpush1.bf16.msra.mxu0 %v642
  %1231 = vmatprep.subr.bf16.mxu0 %v647
  %1232 = vmatpush1.bf16.msra.mxu0 %v646
  %1233 = vmatprep.subr.bf16.mxu0 %v651
  %1234 = vmatpush1.bf16.msra.mxu0 %v650
  %1235 = vmatprep.subr.bf16.mxu0 %v655
  %1236 = vmatpush1.bf16.msra.mxu0 %v654
  %1237 = vmatprep.subr.bf16.mxu0 %v659
  %1238 = vmatpush1.bf16.msra.mxu0 %v658
  %1239 = vmatprep.subr.bf16.mxu0 %v663
  %1240 = vmatpush1.bf16.msra.mxu0 %v662
  %1241 = vmatprep.subr.bf16.mxu0 %v667
  %1242 = vmatpush1.bf16.msra.mxu0 %v666
  %1243 = vmatprep.subr.bf16.mxu0 %v671
  %1244 = vmatpush1.bf16.msra.mxu0 %v670
  %1245 = vmatprep.subr.bf16.mxu0 %v675
  %1246 = vmatpush1.bf16.msra.mxu0 %v674
  %1247 = vmatprep.subr.bf16.mxu0 %v679
  %1248 = vmatpush1.bf16.msra.mxu0 %v678
  %1249 = vmatprep.subr.bf16.mxu0 %v683
  %1250 = vmatpush1.bf16.msra.mxu0 %v682
  %1251 = vmatprep.mubr.bf16.mxu0 %v1090
  %1252 = vmatmul.mubr.bf16.gmra.mrb[0].mxu0 %v1218
  %v1253 = vpop.f32.mrb[0].mxu0
  %v1254 = vadd.f32 %v413, %v1253
  %v1255 = vpop.f32.mrb[0].mxu0
  %v1256 = vadd.f32 %v417, %v1255
  %v1257 = vpop.f32.mrb[0].mxu0
  %v1258 = vpop.f32.mrb[0].mxu0
  %1259 = vdwg.mxu0
  %1260 = vmatprep.subr.bf16.mxu0 %v625
  %1261 = vmatpush1.bf16.msra.mxu0 %v624
  %1262 = vmatprep.subr.bf16.mxu0 %v629
  %1263 = vmatpush1.bf16.msra.mxu0 %v628
  %1264 = vmatprep.subr.bf16.mxu0 %v633
  %1265 = vmatpush1.bf16.msra.mxu0 %v632
  %1266 = vmatprep.subr.bf16.mxu0 %v637
  %1267 = vmatpush1.bf16.msra.mxu0 %v636
  %1268 = vmatprep.subr.bf16.mxu0 %v641
  %1269 = vmatpush1.bf16.msra.mxu0 %v640
  %1270 = vmatprep.subr.bf16.mxu0 %v645
  %1271 = vmatpush1.bf16.msra.mxu0 %v644
  %1272 = vmatprep.subr.bf16.mxu0 %v649
  %1273 = vmatpush1.bf16.msra.mxu0 %v648
  %1274 = vmatprep.subr.bf16.mxu0 %v653
  %1275 = vmatpush1.bf16.msra.mxu0 %v652
  %1276 = vmatprep.subr.bf16.mxu0 %v657
  %1277 = vmatpush1.bf16.msra.mxu0 %v656
  %1278 = vmatprep.subr.bf16.mxu0 %v661
  %1279 = vmatpush1.bf16.msra.mxu0 %v660
  %1280 = vmatprep.subr.bf16.mxu0 %v665
  %1281 = vmatpush1.bf16.msra.mxu0 %v664
  %1282 = vmatprep.subr.bf16.mxu0 %v669
  %1283 = vmatpush1.bf16.msra.mxu0 %v668
  %1284 = vmatprep.subr.bf16.mxu0 %v673
  %1285 = vmatpush1.bf16.msra.mxu0 %v672
  %1286 = vmatprep.subr.bf16.mxu0 %v677
  %1287 = vmatpush1.bf16.msra.mxu0 %v676
  %1288 = vmatprep.subr.bf16.mxu0 %v681
  %1289 = vmatpush1.bf16.msra.mxu0 %v680
  %1290 = vmatprep.subr.bf16.mxu0 %v685
  %1291 = vmatpush1.bf16.msra.mxu0 %v684
  %1292 = vmatprep.mubr.bf16.mxu0 %v1090
  %1293 = vmatmul.mubr.bf16.gmra.mrb[0].mxu0 %v1218
  %v1294 = vpop.f32.mrb[0].mxu0
  %v1295 = vadd.f32 %v421, %v1294
  %v1296 = vpop.f32.mrb[0].mxu0
  %v1297 = vadd.f32 %v425, %v1296
  %v1298 = vpop.f32.mrb[0].mxu0
  %v1299 = vpop.f32.mrb[0].mxu0
  %1300 = vdwg.mxu0
  %v1301 = vxor.u32 %v1254, 2147483648
  %v1302 = vmul.f32 %v1301, 1.442695
  %v1303 = vpow.pop %v1302
  %v1304 = vadd.f32 %v1303, 1.0
  %v1305 = vrcp.pop %v1304
  %v1306 = vmul.f32 1.0, %v1305
  %v1307 = vxor.u32 %v1256, 2147483648
  %v1308 = vmul.f32 %v1307, 1.442695
  %v1309 = vpow.pop %v1308
  %v1310 = vadd.f32 %v1309, 1.0
  %v1311 = vrcp.pop %v1310
  %v1312 = vmul.f32 1.0, %v1311
  %v1313 = vtanh.pop %v1295
  %v1314 = vxor.u32 %v1297, 2147483648
  %v1315 = vmul.f32 %v1314, 1.442695
  %v1316 = vpow.pop %v1315
  %v1317 = vadd.f32 %v1316, 1.0
  %v1318 = vrcp.pop %v1317
  %v1319 = vmul.f32 1.0, %v1318
  %v1320 = vmul.f32 %v1312, %v1087
  %v1321 = vmul.f32 %v1306, %v1313
  %v1322 = vadd.f32 %v1320, %v1321
  %v1323 = vtanh.pop %v1322
  %v1324 = vmul.f32 %v1319, %v1323
  %v1325 = vpack.c.bf16 %v1324, %v1324
  %s1326 = scalar_lea.vmem %s6, 4
  %1327 = vst [vmem:[%s1326] sm:$0x3] %v1325
  %s1328 = scalar_lea.vmem %s0, 48
  %v1329 = vld [vmem:[%s1328] sm:$0xff]
  %v1330 = vld [vmem:[%s1328 + $0x8] sm:$0xff]
  %1331 = vmatprep.subr.bf16.mxu0 %v222
  %1332 = vmatpush1.bf16.msra.mxu0 %v221
  %1333 = vmatprep.subr.bf16.mxu0 %v226
  %1334 = vmatpush1.bf16.msra.mxu0 %v225
  %1335 = vmatprep.subr.bf16.mxu0 %v230
  %1336 = vmatpush1.bf16.msra.mxu0 %v229
  %1337 = vmatprep.subr.bf16.mxu0 %v234
  %1338 = vmatpush1.bf16.msra.mxu0 %v233
  %1339 = vmatprep.subr.bf16.mxu0 %v238
  %1340 = vmatpush1.bf16.msra.mxu0 %v237
  %1341 = vmatprep.subr.bf16.mxu0 %v242
  %1342 = vmatpush1.bf16.msra.mxu0 %v241
  %1343 = vmatprep.subr.bf16.mxu0 %v246
  %1344 = vmatpush1.bf16.msra.mxu0 %v245
  %1345 = vmatprep.subr.bf16.mxu0 %v250
  %1346 = vmatpush1.bf16.msra.mxu0 %v249
  %1347 = vmatprep.subr.bf16.mxu0 0
  %1348 = vmatpush1.bf16.msra.mxu0 0
  %1349 = vmatprep.subr.bf16.mxu0 0
  %1350 = vmatpush1.bf16.msra.mxu0 0
  %1351 = vmatprep.subr.bf16.mxu0 0
  %1352 = vmatpush1.bf16.msra.mxu0 0
  %1353 = vmatprep.subr.bf16.mxu0 0
  %1354 = vmatpush1.bf16.msra.mxu0 0
  %1355 = vmatprep.subr.bf16.mxu0 0
  %1356 = vmatpush1.bf16.msra.mxu0 0
  %1357 = vmatprep.subr.bf16.mxu0 0
  %1358 = vmatpush1.bf16.msra.mxu0 0
  %1359 = vmatprep.subr.bf16.mxu0 0
  %1360 = vmatpush1.bf16.msra.mxu0 0
  %1361 = vmatprep.subr.bf16.mxu0 0
  %1362 = vmatpush1.bf16.msra.mxu0 0
  %1363 = vmatprep.mubr.bf16.mxu0 0
  %1364 = vmatmul.mubr.bf16.gmra.mrb[0].mxu0 %v1218
  %v1365 = vpop.f32.mrb[0].mxu0
  %v1366 = vadd.f32 0.0, %v1365
  %v1367 = vpop.f32.mrb[0].mxu0
  %v1368 = vadd.f32 0.0, %v1367
  %v1369 = vpop.f32.mrb[0].mxu0
  %v1370 = vpop.f32.mrb[0].mxu0
  %1371 = vdwg.mxu0
  %1372 = vmatprep.subr.bf16.mxu0 %v224
  %1373 = vmatpush1.bf16.msra.mxu0 %v223
  %1374 = vmatprep.subr.bf16.mxu0 %v228
  %1375 = vmatpush1.bf16.msra.mxu0 %v227
  %1376 = vmatprep.subr.bf16.mxu0 %v232
  %1377 = vmatpush1.bf16.msra.mxu0 %v231
  %1378 = vmatprep.subr.bf16.mxu0 %v236
  %1379 = vmatpush1.bf16.msra.mxu0 %v235
  %1380 = vmatprep.subr.bf16.mxu0 %v240
  %1381 = vmatpush1.bf16.msra.mxu0 %v239
  %1382 = vmatprep.subr.bf16.mxu0 %v244
  %1383 = vmatpush1.bf16.msra.mxu0 %v243
  %1384 = vmatprep.subr.bf16.mxu0 %v248
  %1385 = vmatpush1.bf16.msra.mxu0 %v247
  %1386 = vmatprep.subr.bf16.mxu0 %v252
  %1387 = vmatpush1.bf16.msra.mxu0 %v251
  %1388 = vmatprep.subr.bf16.mxu0 0
  %1389 = vmatpush1.bf16.msra.mxu0 0
  %1390 = vmatprep.subr.bf16.mxu0 0
  %1391 = vmatpush1.bf16.msra.mxu0 0
  %1392 = vmatprep.subr.bf16.mxu0 0
  %1393 = vmatpush1.bf16.msra.mxu0 0
  %1394 = vmatprep.subr.bf16.mxu0 0
  %1395 = vmatpush1.bf16.msra.mxu0 0
  %1396 = vmatprep.subr.bf16.mxu0 0
  %1397 = vmatpush1.bf16.msra.mxu0 0
  %1398 = vmatprep.subr.bf16.mxu0 0
  %1399 = vmatpush1.bf16.msra.mxu0 0
  %1400 = vmatprep.subr.bf16.mxu0 0
  %1401 = vmatpush1.bf16.msra.mxu0 0
  %1402 = vmatprep.subr.bf16.mxu0 0
  %1403 = vmatpush1.bf16.msra.mxu0 0
  %1404 = vmatprep.mubr.bf16.mxu0 0
  %1405 = vmatmul.mubr.bf16.gmra.mrb[0].mxu0 %v1218
  %v1406 = vpop.f32.mrb[0].mxu0
  %v1407 = vadd.f32 0.0, %v1406
  %v1408 = vpop.f32.mrb[0].mxu0
  %v1409 = vadd.f32 0.0, %v1408
  %v1410 = vpop.f32.mrb[0].mxu0
  %v1411 = vpop.f32.mrb[0].mxu0
  %1412 = vdwg.mxu0
  %v1417 = vcombine.low %v1366, %v1368
  %v1418 = vcombine.low %v1407, %v1409
  %v1421 = vadd.f32 %v1329, %v1417
  %v1422 = vadd.f32 %v1330, %v1418
  %v1423 = vxor.u32 %v1421, 2147483648
  %v1424 = vmul.f32 %v1423, 1.442695
  %v1425 = vpow.pop %v1424
  %v1426 = vadd.f32 %v1425, 1.0
  %v1427 = vrcp.pop %v1426
  %v1428 = vmul.f32 1.0, %v1427
  %v1430 = vrot.slane %v1421, 4
  %v1432 = vxor.u32 %v1430, 2147483648
  %v1433 = vmul.f32 %v1432, 1.442695
  %v1434 = vpow.pop %v1433
  %v1435 = vadd.f32 %v1434, 1.0
  %v1436 = vrcp.pop %v1435
  %v1437 = vmul.f32 1.0, %v1436
  %v1438 = vtanh.pop %v1422
  %v1440 = vrot.slane %v1422, 4
  %v1442 = vxor.u32 %v1440, 2147483648
  %v1443 = vmul.f32 %v1442, 1.442695
  %v1444 = vpow.pop %v1443
  %v1445 = vadd.f32 %v1444, 1.0
  %v1446 = vrcp.pop %v1445
  %v1447 = vmul.f32 1.0, %v1446
  %v1448 = vmul.f32 %v1437, %v1215
  %v1449 = vmul.f32 %v1428, %v1438
  %v1450 = vadd.f32 %v1448, %v1449
  %v1451 = vtanh.pop %v1450
  %v1452 = vmul.f32 %v1447, %v1451
  %v1453 = vpack.c.bf16 %v1452, %v1452
  %1454 = vmatprep.subr.bf16.mxu0 %v623
  %1455 = vmatpush1.bf16.msra.mxu0 %v622
  %1456 = vmatprep.subr.bf16.mxu0 %v627
  %1457 = vmatpush1.bf16.msra.mxu0 %v626
  %1458 = vmatprep.subr.bf16.mxu0 %v631
  %1459 = vmatpush1.bf16.msra.mxu0 %v630
  %1460 = vmatprep.subr.bf16.mxu0 %v635
  %1461 = vmatpush1.bf16.msra.mxu0 %v634
  %1462 = vmatprep.subr.bf16.mxu0 %v639
  %1463 = vmatpush1.bf16.msra.mxu0 %v638
  %1464 = vmatprep.subr.bf16.mxu0 %v643
  %1465 = vmatpush1.bf16.msra.mxu0 %v642
  %1466 = vmatprep.subr.bf16.mxu0 %v647
  %1467 = vmatpush1.bf16.msra.mxu0 %v646
  %1468 = vmatprep.subr.bf16.mxu0 %v651
  %1469 = vmatpush1.bf16.msra.mxu0 %v650
  %1470 = vmatprep.subr.bf16.mxu0 %v655
  %1471 = vmatpush1.bf16.msra.mxu0 %v654
  %1472 = vmatprep.subr.bf16.mxu0 %v659
  %1473 = vmatpush1.bf16.msra.mxu0 %v658
  %1474 = vmatprep.subr.bf16.mxu0 %v663
  %1475 = vmatpush1.bf16.msra.mxu0 %v662
  %1476 = vmatprep.subr.bf16.mxu0 %v667
  %1477 = vmatpush1.bf16.msra.mxu0 %v666
  %1478 = vmatprep.subr.bf16.mxu0 %v671
  %1479 = vmatpush1.bf16.msra.mxu0 %v670
  %1480 = vmatprep.subr.bf16.mxu0 %v675
  %1481 = vmatpush1.bf16.msra.mxu0 %v674
  %1482 = vmatprep.subr.bf16.mxu0 %v679
  %1483 = vmatpush1.bf16.msra.mxu0 %v678
  %1484 = vmatprep.subr.bf16.mxu0 %v683
  %1485 = vmatpush1.bf16.msra.mxu0 %v682
  %1486 = vmatprep.mubr.bf16.mxu0 %v1325
  %1487 = vmatmul.mubr.bf16.gmra.mrb[0].mxu0 %v1453
  %v1488 = vpop.f32.mrb[0].mxu0
  %v1489 = vadd.f32 %v413, %v1488
  %v1490 = vpop.f32.mrb[0].mxu0
  %v1491 = vadd.f32 %v417, %v1490
  %v1492 = vpop.f32.mrb[0].mxu0
  %v1493 = vpop.f32.mrb[0].mxu0
  %1494 = vdwg.mxu0
  %1495 = vmatprep.subr.bf16.mxu0 %v625
  %1496 = vmatpush1.bf16.msra.mxu0 %v624
  %1497 = vmatprep.subr.bf16.mxu0 %v629
  %1498 = vmatpush1.bf16.msra.mxu0 %v628
  %1499 = vmatprep.subr.bf16.mxu0 %v633
  %1500 = vmatpush1.bf16.msra.mxu0 %v632
  %1501 = vmatprep.subr.bf16.mxu0 %v637
  %1502 = vmatpush1.bf16.msra.mxu0 %v636
  %1503 = vmatprep.subr.bf16.mxu0 %v641
  %1504 = vmatpush1.bf16.msra.mxu0 %v640
  %1505 = vmatprep.subr.bf16.mxu0 %v645
  %1506 = vmatpush1.bf16.msra.mxu0 %v644
  %1507 = vmatprep.subr.bf16.mxu0 %v649
  %1508 = vmatpush1.bf16.msra.mxu0 %v648
  %1509 = vmatprep.subr.bf16.mxu0 %v653
  %1510 = vmatpush1.bf16.msra.mxu0 %v652
  %1511 = vmatprep.subr.bf16.mxu0 %v657
  %1512 = vmatpush1.bf16.msra.mxu0 %v656
  %1513 = vmatprep.subr.bf16.mxu0 %v661
  %1514 = vmatpush1.bf16.msra.mxu0 %v660
  %1515 = vmatprep.subr.bf16.mxu0 %v665
  %1516 = vmatpush1.bf16.msra.mxu0 %v664
  %1517 = vmatprep.subr.bf16.mxu0 %v669
  %1518 = vmatpush1.bf16.msra.mxu0 %v668
  %1519 = vmatprep.subr.bf16.mxu0 %v673
  %1520 = vmatpush1.bf16.msra.mxu0 %v672
  %1521 = vmatprep.subr.bf16.mxu0 %v677
  %1522 = vmatpush1.bf16.msra.mxu0 %v676
  %1523 = vmatprep.subr.bf16.mxu0 %v681
  %1524 = vmatpush1.bf16.msra.mxu0 %v680
  %1525 = vmatprep.subr.bf16.mxu0 %v685
  %1526 = vmatpush1.bf16.msra.mxu0 %v684
  %1527 = vmatprep.mubr.bf16.mxu0 %v1325
  %1528 = vmatmul.mubr.bf16.gmra.mrb[0].mxu0 %v1453
  %v1529 = vpop.f32.mrb[0].mxu0
  %v1530 = vadd.f32 %v421, %v1529
  %v1531 = vpop.f32.mrb[0].mxu0
  %v1532 = vadd.f32 %v425, %v1531
  %v1533 = vpop.f32.mrb[0].mxu0
  %v1534 = vpop.f32.mrb[0].mxu0
  %1535 = vdwg.mxu0
  %v1536 = vxor.u32 %v1489, 2147483648
  %v1537 = vmul.f32 %v1536, 1.442695
  %v1538 = vpow.pop %v1537
  %v1539 = vadd.f32 %v1538, 1.0
  %v1540 = vrcp.pop %v1539
  %v1541 = vmul.f32 1.0, %v1540
  %v1542 = vxor.u32 %v1491, 2147483648
  %v1543 = vmul.f32 %v1542, 1.442695
  %v1544 = vpow.pop %v1543
  %v1545 = vadd.f32 %v1544, 1.0
  %v1546 = vrcp.pop %v1545
  %v1547 = vmul.f32 1.0, %v1546
  %v1548 = vtanh.pop %v1530
  %v1549 = vxor.u32 %v1532, 2147483648
  %v1550 = vmul.f32 %v1549, 1.442695
  %v1551 = vpow.pop %v1550
  %v1552 = vadd.f32 %v1551, 1.0
  %v1553 = vrcp.pop %v1552
  %v1554 = vmul.f32 1.0, %v1553
  %v1555 = vmul.f32 %v1547, %v1322
  %v1556 = vmul.f32 %v1541, %v1548
  %v1557 = vadd.f32 %v1555, %v1556
  %v1558 = vtanh.pop %v1557
  %v1559 = vmul.f32 %v1554, %v1558
  %v1560 = vpack.c.bf16 %v1559, %v1559
  %s1561 = scalar_lea.vmem %s6, 6
  %1562 = vst [vmem:[%s1561] sm:$0x3] %v1560
  %s1563 = scalar_lea.vmem %s0, 64
  %v1564 = vld [vmem:[%s1563] sm:$0xff]
  %v1565 = vld [vmem:[%s1563 + $0x8] sm:$0xff]
  %1566 = vmatprep.subr.bf16.mxu0 %v222
  %1567 = vmatpush1.bf16.msra.mxu0 %v221
  %1568 = vmatprep.subr.bf16.mxu0 %v226
  %1569 = vmatpush1.bf16.msra.mxu0 %v225
  %1570 = vmatprep.subr.bf16.mxu0 %v230
  %1571 = vmatpush1.bf16.msra.mxu0 %v229
  %1572 = vmatprep.subr.bf16.mxu0 %v234
  %1573 = vmatpush1.bf16.msra.mxu0 %v233
  %1574 = vmatprep.subr.bf16.mxu0 %v238
  %1575 = vmatpush1.bf16.msra.mxu0 %v237
  %1576 = vmatprep.subr.bf16.mxu0 %v242
  %1577 = vmatpush1.bf16.msra.mxu0 %v241
  %1578 = vmatprep.subr.bf16.mxu0 %v246
  %1579 = vmatpush1.bf16.msra.mxu0 %v245
  %1580 = vmatprep.subr.bf16.mxu0 %v250
  %1581 = vmatpush1.bf16.msra.mxu0 %v249
  %1582 = vmatprep.subr.bf16.mxu0 0
  %1583 = vmatpush1.bf16.msra.mxu0 0
  %1584 = vmatprep.subr.bf16.mxu0 0
  %1585 = vmatpush1.bf16.msra.mxu0 0
  %1586 = vmatprep.subr.bf16.mxu0 0
  %1587 = vmatpush1.bf16.msra.mxu0 0
  %1588 = vmatprep.subr.bf16.mxu0 0
  %1589 = vmatpush1.bf16.msra.mxu0 0
  %1590 = vmatprep.subr.bf16.mxu0 0
  %1591 = vmatpush1.bf16.msra.mxu0 0
  %1592 = vmatprep.subr.bf16.mxu0 0
  %1593 = vmatpush1.bf16.msra.mxu0 0
  %1594 = vmatprep.subr.bf16.mxu0 0
  %1595 = vmatpush1.bf16.msra.mxu0 0
  %1596 = vmatprep.subr.bf16.mxu0 0
  %1597 = vmatpush1.bf16.msra.mxu0 0
  %1598 = vmatprep.mubr.bf16.mxu0 0
  %1599 = vmatmul.mubr.bf16.gmra.mrb[0].mxu0 %v1453
  %v1600 = vpop.f32.mrb[0].mxu0
  %v1601 = vadd.f32 0.0, %v1600
  %v1602 = vpop.f32.mrb[0].mxu0
  %v1603 = vadd.f32 0.0, %v1602
  %v1604 = vpop.f32.mrb[0].mxu0
  %v1605 = vpop.f32.mrb[0].mxu0
  %1606 = vdwg.mxu0
  %1607 = vmatprep.subr.bf16.mxu0 %v224
  %1608 = vmatpush1.bf16.msra.mxu0 %v223
  %1609 = vmatprep.subr.bf16.mxu0 %v228
  %1610 = vmatpush1.bf16.msra.mxu0 %v227
  %1611 = vmatprep.subr.bf16.mxu0 %v232
  %1612 = vmatpush1.bf16.msra.mxu0 %v231
  %1613 = vmatprep.subr.bf16.mxu0 %v236
  %1614 = vmatpush1.bf16.msra.mxu0 %v235
  %1615 = vmatprep.subr.bf16.mxu0 %v240
  %1616 = vmatpush1.bf16.msra.mxu0 %v239
  %1617 = vmatprep.subr.bf16.mxu0 %v244
  %1618 = vmatpush1.bf16.msra.mxu0 %v243
  %1619 = vmatprep.subr.bf16.mxu0 %v248
  %1620 = vmatpush1.bf16.msra.mxu0 %v247
  %1621 = vmatprep.subr.bf16.mxu0 %v252
  %1622 = vmatpush1.bf16.msra.mxu0 %v251
  %1623 = vmatprep.subr.bf16.mxu0 0
  %1624 = vmatpush1.bf16.msra.mxu0 0
  %1625 = vmatprep.subr.bf16.mxu0 0
  %1626 = vmatpush1.bf16.msra.mxu0 0
  %1627 = vmatprep.subr.bf16.mxu0 0
  %1628 = vmatpush1.bf16.msra.mxu0 0
  %1629 = vmatprep.subr.bf16.mxu0 0
  %1630 = vmatpush1.bf16.msra.mxu0 0
  %1631 = vmatprep.subr.bf16.mxu0 0
  %1632 = vmatpush1.bf16.msra.mxu0 0
  %1633 = vmatprep.subr.bf16.mxu0 0
  %1634 = vmatpush1.bf16.msra.mxu0 0
  %1635 = vmatprep.subr.bf16.mxu0 0
  %1636 = vmatpush1.bf16.msra.mxu0 0
  %1637 = vmatprep.subr.bf16.mxu0 0
  %1638 = vmatpush1.bf16.msra.mxu0 0
  %1639 = vmatprep.mubr.bf16.mxu0 0
  %1640 = vmatmul.mubr.bf16.gmra.mrb[0].mxu0 %v1453
  %v1641 = vpop.f32.mrb[0].mxu0
  %v1642 = vadd.f32 0.0, %v1641
  %v1643 = vpop.f32.mrb[0].mxu0
  %v1644 = vadd.f32 0.0, %v1643
  %v1645 = vpop.f32.mrb[0].mxu0
  %v1646 = vpop.f32.mrb[0].mxu0
  %1647 = vdwg.mxu0
  %v1652 = vcombine.low %v1601, %v1603
  %v1653 = vcombine.low %v1642, %v1644
  %v1656 = vadd.f32 %v1564, %v1652
  %v1657 = vadd.f32 %v1565, %v1653
  %v1658 = vxor.u32 %v1656, 2147483648
  %v1659 = vmul.f32 %v1658, 1.442695
  %v1660 = vpow.pop %v1659
  %v1661 = vadd.f32 %v1660, 1.0
  %v1662 = vrcp.pop %v1661
  %v1663 = vmul.f32 1.0, %v1662
  %v1665 = vrot.slane %v1656, 4
  %v1667 = vxor.u32 %v1665, 2147483648
  %v1668 = vmul.f32 %v1667, 1.442695
  %v1669 = vpow.pop %v1668
  %v1670 = vadd.f32 %v1669, 1.0
  %v1671 = vrcp.pop %v1670
  %v1672 = vmul.f32 1.0, %v1671
  %v1673 = vtanh.pop %v1657
  %v1675 = vrot.slane %v1657, 4
  %v1677 = vxor.u32 %v1675, 2147483648
  %v1678 = vmul.f32 %v1677, 1.442695
  %v1679 = vpow.pop %v1678
  %v1680 = vadd.f32 %v1679, 1.0
  %v1681 = vrcp.pop %v1680
  %v1682 = vmul.f32 1.0, %v1681
  %v1683 = vmul.f32 %v1672, %v1450
  %v1684 = vmul.f32 %v1663, %v1673
  %v1685 = vadd.f32 %v1683, %v1684
  %v1686 = vtanh.pop %v1685
  %v1687 = vmul.f32 %v1682, %v1686
  %v1688 = vpack.c.bf16 %v1687, %v1687
  %1689 = vmatprep.subr.bf16.mxu0 %v623
  %1690 = vmatpush1.bf16.msra.mxu0 %v622
  %1691 = vmatprep.subr.bf16.mxu0 %v627
  %1692 = vmatpush1.bf16.msra.mxu0 %v626
  %1693 = vmatprep.subr.bf16.mxu0 %v631
  %1694 = vmatpush1.bf16.msra.mxu0 %v630
  %1695 = vmatprep.subr.bf16.mxu0 %v635
  %1696 = vmatpush1.bf16.msra.mxu0 %v634
  %1697 = vmatprep.subr.bf16.mxu0 %v639
  %1698 = vmatpush1.bf16.msra.mxu0 %v638
  %1699 = vmatprep.subr.bf16.mxu0 %v643
  %1700 = vmatpush1.bf16.msra.mxu0 %v642
  %1701 = vmatprep.subr.bf16.mxu0 %v647
  %1702 = vmatpush1.bf16.msra.mxu0 %v646
  %1703 = vmatprep.subr.bf16.mxu0 %v651
  %1704 = vmatpush1.bf16.msra.mxu0 %v650
  %1705 = vmatprep.subr.bf16.mxu0 %v655
  %1706 = vmatpush1.bf16.msra.mxu0 %v654
  %1707 = vmatprep.subr.bf16.mxu0 %v659
  %1708 = vmatpush1.bf16.msra.mxu0 %v658
  %1709 = vmatprep.subr.bf16.mxu0 %v663
  %1710 = vmatpush1.bf16.msra.mxu0 %v662
  %1711 = vmatprep.subr.bf16.mxu0 %v667
  %1712 = vmatpush1.bf16.msra.mxu0 %v666
  %1713 = vmatprep.subr.bf16.mxu0 %v671
  %1714 = vmatpush1.bf16.msra.mxu0 %v670
  %1715 = vmatprep.subr.bf16.mxu0 %v675
  %1716 = vmatpush1.bf16.msra.mxu0 %v674
  %1717 = vmatprep.subr.bf16.mxu0 %v679
  %1718 = vmatpush1.bf16.msra.mxu0 %v678
  %1719 = vmatprep.subr.bf16.mxu0 %v683
  %1720 = vmatpush1.bf16.msra.mxu0 %v682
  %1721 = vmatprep.mubr.bf16.mxu0 %v1560
  %1722 = vmatmul.mubr.bf16.gmra.mrb[0].mxu0 %v1688
  %v1723 = vpop.f32.mrb[0].mxu0
  %v1724 = vadd.f32 %v413, %v1723
  %v1725 = vpop.f32.mrb[0].mxu0
  %v1726 = vadd.f32 %v417, %v1725
  %v1727 = vpop.f32.mrb[0].mxu0
  %v1728 = vpop.f32.mrb[0].mxu0
  %1729 = vdwg.mxu0
  %1730 = vmatprep.subr.bf16.mxu0 %v625
  %1731 = vmatpush1.bf16.msra.mxu0 %v624
  %1732 = vmatprep.subr.bf16.mxu0 %v629
  %1733 = vmatpush1.bf16.msra.mxu0 %v628
  %1734 = vmatprep.subr.bf16.mxu0 %v633
  %1735 = vmatpush1.bf16.msra.mxu0 %v632
  %1736 = vmatprep.subr.bf16.mxu0 %v637
  %1737 = vmatpush1.bf16.msra.mxu0 %v636
  %1738 = vmatprep.subr.bf16.mxu0 %v641
  %1739 = vmatpush1.bf16.msra.mxu0 %v640
  %1740 = vmatprep.subr.bf16.mxu0 %v645
  %1741 = vmatpush1.bf16.msra.mxu0 %v644
  %1742 = vmatprep.subr.bf16.mxu0 %v649
  %1743 = vmatpush1.bf16.msra.mxu0 %v648
  %1744 = vmatprep.subr.bf16.mxu0 %v653
  %1745 = vmatpush1.bf16.msra.mxu0 %v652
  %1746 = vmatprep.subr.bf16.mxu0 %v657
  %1747 = vmatpush1.bf16.msra.mxu0 %v656
  %1748 = vmatprep.subr.bf16.mxu0 %v661
  %1749 = vmatpush1.bf16.msra.mxu0 %v660
  %1750 = vmatprep.subr.bf16.mxu0 %v665
  %1751 = vmatpush1.bf16.msra.mxu0 %v664
  %1752 = vmatprep.subr.bf16.mxu0 %v669
  %1753 = vmatpush1.bf16.msra.mxu0 %v668
  %1754 = vmatprep.subr.bf16.mxu0 %v673
  %1755 = vmatpush1.bf16.msra.mxu0 %v672
  %1756 = vmatprep.subr.bf16.mxu0 %v677
  %1757 = vmatpush1.bf16.msra.mxu0 %v676
  %1758 = vmatprep.subr.bf16.mxu0 %v681
  %1759 = vmatpush1.bf16.msra.mxu0 %v680
  %1760 = vmatprep.subr.bf16.mxu0 %v685
  %1761 = vmatpush1.bf16.msra.mxu0 %v684
  %1762 = vmatprep.mubr.bf16.mxu0 %v1560
  %1763 = vmatmul.mubr.bf16.gmra.mrb[0].mxu0 %v1688
  %v1764 = vpop.f32.mrb[0].mxu0
  %v1765 = vadd.f32 %v421, %v1764
  %v1766 = vpop.f32.mrb[0].mxu0
  %v1767 = vadd.f32 %v425, %v1766
  %v1768 = vpop.f32.mrb[0].mxu0
  %v1769 = vpop.f32.mrb[0].mxu0
  %1770 = vdwg.mxu0
  %v1771 = vxor.u32 %v1724, 2147483648
  %v1772 = vmul.f32 %v1771, 1.442695
  %v1773 = vpow.pop %v1772
  %v1774 = vadd.f32 %v1773, 1.0
  %v1775 = vrcp.pop %v1774
  %v1776 = vmul.f32 1.0, %v1775
  %v1777 = vxor.u32 %v1726, 2147483648
  %v1778 = vmul.f32 %v1777, 1.442695
  %v1779 = vpow.pop %v1778
  %v1780 = vadd.f32 %v1779, 1.0
  %v1781 = vrcp.pop %v1780
  %v1782 = vmul.f32 1.0, %v1781
  %v1783 = vtanh.pop %v1765
  %v1784 = vxor.u32 %v1767, 2147483648
  %v1785 = vmul.f32 %v1784, 1.442695
  %v1786 = vpow.pop %v1785
  %v1787 = vadd.f32 %v1786, 1.0
  %v1788 = vrcp.pop %v1787
  %v1789 = vmul.f32 1.0, %v1788
  %v1790 = vmul.f32 %v1782, %v1557
  %v1791 = vmul.f32 %v1776, %v1783
  %v1792 = vadd.f32 %v1790, %v1791
  %v1793 = vtanh.pop %v1792
  %v1794 = vmul.f32 %v1789, %v1793
  %v1795 = vpack.c.bf16 %v1794, %v1794
  %s1796 = scalar_lea.vmem %s6, 8
  %1797 = vst [vmem:[%s1796] sm:$0x3] %v1795
  %s1798 = scalar_lea.vmem %s0, 80
  %v1799 = vld [vmem:[%s1798] sm:$0xff]
  %v1800 = vld [vmem:[%s1798 + $0x8] sm:$0xff]
  %1801 = vmatprep.subr.bf16.mxu0 %v222
  %1802 = vmatpush1.bf16.msra.mxu0 %v221
  %1803 = vmatprep.subr.bf16.mxu0 %v226
  %1804 = vmatpush1.bf16.msra.mxu0 %v225
  %1805 = vmatprep.subr.bf16.mxu0 %v230
  %1806 = vmatpush1.bf16.msra.mxu0 %v229
  %1807 = vmatprep.subr.bf16.mxu0 %v234
  %1808 = vmatpush1.bf16.msra.mxu0 %v233
  %1809 = vmatprep.subr.bf16.mxu0 %v238
  %1810 = vmatpush1.bf16.msra.mxu0 %v237
  %1811 = vmatprep.subr.bf16.mxu0 %v242
  %1812 = vmatpush1.bf16.msra.mxu0 %v241
  %1813 = vmatprep.subr.bf16.mxu0 %v246
  %1814 = vmatpush1.bf16.msra.mxu0 %v245
  %1815 = vmatprep.subr.bf16.mxu0 %v250
  %1816 = vmatpush1.bf16.msra.mxu0 %v249
  %1817 = vmatprep.subr.bf16.mxu0 0
  %1818 = vmatpush1.bf16.msra.mxu0 0
  %1819 = vmatprep.subr.bf16.mxu0 0
  %1820 = vmatpush1.bf16.msra.mxu0 0
  %1821 = vmatprep.subr.bf16.mxu0 0
  %1822 = vmatpush1.bf16.msra.mxu0 0
  %1823 = vmatprep.subr.bf16.mxu0 0
  %1824 = vmatpush1.bf16.msra.mxu0 0
  %1825 = vmatprep.subr.bf16.mxu0 0
  %1826 = vmatpush1.bf16.msra.mxu0 0
  %1827 = vmatprep.subr.bf16.mxu0 0
  %1828 = vmatpush1.bf16.msra.mxu0 0
  %1829 = vmatprep.subr.bf16.mxu0 0
  %1830 = vmatpush1.bf16.msra.mxu0 0
  %1831 = vmatprep.subr.bf16.mxu0 0
  %1832 = vmatpush1.bf16.msra.mxu0 0
  %1833 = vmatprep.mubr.bf16.mxu0 0
  %1834 = vmatmul.mubr.bf16.gmra.mrb[0].mxu0 %v1688
  %v1835 = vpop.f32.mrb[0].mxu0
  %v1836 = vadd.f32 0.0, %v1835
  %v1837 = vpop.f32.mrb[0].mxu0
  %v1838 = vadd.f32 0.0, %v1837
  %v1839 = vpop.f32.mrb[0].mxu0
  %v1840 = vpop.f32.mrb[0].mxu0
  %1841 = vdwg.mxu0
  %1842 = vmatprep.subr.bf16.mxu0 %v224
  %1843 = vmatpush1.bf16.msra.mxu0 %v223
  %1844 = vmatprep.subr.bf16.mxu0 %v228
  %1845 = vmatpush1.bf16.msra.mxu0 %v227
  %1846 = vmatprep.subr.bf16.mxu0 %v232
  %1847 = vmatpush1.bf16.msra.mxu0 %v231
  %1848 = vmatprep.subr.bf16.mxu0 %v236
  %1849 = vmatpush1.bf16.msra.mxu0 %v235
  %1850 = vmatprep.subr.bf16.mxu0 %v240
  %1851 = vmatpush1.bf16.msra.mxu0 %v239
  %1852 = vmatprep.subr.bf16.mxu0 %v244
  %1853 = vmatpush1.bf16.msra.mxu0 %v243
  %1854 = vmatprep.subr.bf16.mxu0 %v248
  %1855 = vmatpush1.bf16.msra.mxu0 %v247
  %1856 = vmatprep.subr.bf16.mxu0 %v252
  %1857 = vmatpush1.bf16.msra.mxu0 %v251
  %1858 = vmatprep.subr.bf16.mxu0 0
  %1859 = vmatpush1.bf16.msra.mxu0 0
  %1860 = vmatprep.subr.bf16.mxu0 0
  %1861 = vmatpush1.bf16.msra.mxu0 0
  %1862 = vmatprep.subr.bf16.mxu0 0
  %1863 = vmatpush1.bf16.msra.mxu0 0
  %1864 = vmatprep.subr.bf16.mxu0 0
  %1865 = vmatpush1.bf16.msra.mxu0 0
  %1866 = vmatprep.subr.bf16.mxu0 0
  %1867 = vmatpush1.bf16.msra.mxu0 0
  %1868 = vmatprep.subr.bf16.mxu0 0
  %1869 = vmatpush1.bf16.msra.mxu0 0
  %1870 = vmatprep.subr.bf16.mxu0 0
  %1871 = vmatpush1.bf16.msra.mxu0 0
  %1872 = vmatprep.subr.bf16.mxu0 0
  %1873 = vmatpush1.bf16.msra.mxu0 0
  %1874 = vmatprep.mubr.bf16.mxu0 0
  %1875 = vmatmul.mubr.bf16.gmra.mrb[0].mxu0 %v1688
  %v1876 = vpop.f32.mrb[0].mxu0
  %v1877 = vadd.f32 0.0, %v1876
  %v1878 = vpop.f32.mrb[0].mxu0
  %v1879 = vadd.f32 0.0, %v1878
  %v1880 = vpop.f32.mrb[0].mxu0
  %v1881 = vpop.f32.mrb[0].mxu0
  %1882 = vdwg.mxu0
  %v1887 = vcombine.low %v1836, %v1838
  %v1888 = vcombine.low %v1877, %v1879
  %v1891 = vadd.f32 %v1799, %v1887
  %v1892 = vadd.f32 %v1800, %v1888
  %v1893 = vxor.u32 %v1891, 2147483648
  %v1894 = vmul.f32 %v1893, 1.442695
  %v1895 = vpow.pop %v1894
  %v1896 = vadd.f32 %v1895, 1.0
  %v1897 = vrcp.pop %v1896
  %v1898 = vmul.f32 1.0, %v1897
  %v1900 = vrot.slane %v1891, 4
  %v1902 = vxor.u32 %v1900, 2147483648
  %v1903 = vmul.f32 %v1902, 1.442695
  %v1904 = vpow.pop %v1903
  %v1905 = vadd.f32 %v1904, 1.0
  %v1906 = vrcp.pop %v1905
  %v1907 = vmul.f32 1.0, %v1906
  %v1908 = vtanh.pop %v1892
  %v1910 = vrot.slane %v1892, 4
  %v1912 = vxor.u32 %v1910, 2147483648
  %v1913 = vmul.f32 %v1912, 1.442695
  %v1914 = vpow.pop %v1913
  %v1915 = vadd.f32 %v1914, 1.0
  %v1916 = vrcp.pop %v1915
  %v1917 = vmul.f32 1.0, %v1916
  %v1918 = vmul.f32 %v1907, %v1685
  %v1919 = vmul.f32 %v1898, %v1908
  %v1920 = vadd.f32 %v1918, %v1919
  %v1921 = vtanh.pop %v1920
  %v1922 = vmul.f32 %v1917, %v1921
  %v1923 = vpack.c.bf16 %v1922, %v1922
  %1924 = vmatprep.subr.bf16.mxu0 %v623
  %1925 = vmatpush1.bf16.msra.mxu0 %v622
  %1926 = vmatprep.subr.bf16.mxu0 %v627
  %1927 = vmatpush1.bf16.msra.mxu0 %v626
  %1928 = vmatprep.subr.bf16.mxu0 %v631
  %1929 = vmatpush1.bf16.msra.mxu0 %v630
  %1930 = vmatprep.subr.bf16.mxu0 %v635
  %1931 = vmatpush1.bf16.msra.mxu0 %v634
  %1932 = vmatprep.subr.bf16.mxu0 %v639
  %1933 = vmatpush1.bf16.msra.mxu0 %v638
  %1934 = vmatprep.subr.bf16.mxu0 %v643
  %1935 = vmatpush1.bf16.msra.mxu0 %v642
  %1936 = vmatprep.subr.bf16.mxu0 %v647
  %1937 = vmatpush1.bf16.msra.mxu0 %v646
  %1938 = vmatprep.subr.bf16.mxu0 %v651
  %1939 = vmatpush1.bf16.msra.mxu0 %v650
  %1940 = vmatprep.subr.bf16.mxu0 %v655
  %1941 = vmatpush1.bf16.msra.mxu0 %v654
  %1942 = vmatprep.subr.bf16.mxu0 %v659
  %1943 = vmatpush1.bf16.msra.mxu0 %v658
  %1944 = vmatprep.subr.bf16.mxu0 %v663
  %1945 = vmatpush1.bf16.msra.mxu0 %v662
  %1946 = vmatprep.subr.bf16.mxu0 %v667
  %1947 = vmatpush1.bf16.msra.mxu0 %v666
  %1948 = vmatprep.subr.bf16.mxu0 %v671
  %1949 = vmatpush1.bf16.msra.mxu0 %v670
  %1950 = vmatprep.subr.bf16.mxu0 %v675
  %1951 = vmatpush1.bf16.msra.mxu0 %v674
  %1952 = vmatprep.subr.bf16.mxu0 %v679
  %1953 = vmatpush1.bf16.msra.mxu0 %v678
  %1954 = vmatprep.subr.bf16.mxu0 %v683
  %1955 = vmatpush1.bf16.msra.mxu0 %v682
  %1956 = vmatprep.mubr.bf16.mxu0 %v1795
  %1957 = vmatmul.mubr.bf16.gmra.mrb[0].mxu0 %v1923
  %v1958 = vpop.f32.mrb[0].mxu0
  %v1959 = vadd.f32 %v413, %v1958
  %v1960 = vpop.f32.mrb[0].mxu0
  %v1961 = vadd.f32 %v417, %v1960
  %v1962 = vpop.f32.mrb[0].mxu0
  %v1963 = vpop.f32.mrb[0].mxu0
  %1964 = vdwg.mxu0
  %1965 = vmatprep.subr.bf16.mxu0 %v625
  %1966 = vmatpush1.bf16.msra.mxu0 %v624
  %1967 = vmatprep.subr.bf16.mxu0 %v629
  %1968 = vmatpush1.bf16.msra.mxu0 %v628
  %1969 = vmatprep.subr.bf16.mxu0 %v633
  %1970 = vmatpush1.bf16.msra.mxu0 %v632
  %1971 = vmatprep.subr.bf16.mxu0 %v637
  %1972 = vmatpush1.bf16.msra.mxu0 %v636
  %1973 = vmatprep.subr.bf16.mxu0 %v641
  %1974 = vmatpush1.bf16.msra.mxu0 %v640
  %1975 = vmatprep.subr.bf16.mxu0 %v645
  %1976 = vmatpush1.bf16.msra.mxu0 %v644
  %1977 = vmatprep.subr.bf16.mxu0 %v649
  %1978 = vmatpush1.bf16.msra.mxu0 %v648
  %1979 = vmatprep.subr.bf16.mxu0 %v653
  %1980 = vmatpush1.bf16.msra.mxu0 %v652
  %1981 = vmatprep.subr.bf16.mxu0 %v657
  %1982 = vmatpush1.bf16.msra.mxu0 %v656
  %1983 = vmatprep.subr.bf16.mxu0 %v661
  %1984 = vmatpush1.bf16.msra.mxu0 %v660
  %1985 = vmatprep.subr.bf16.mxu0 %v665
  %1986 = vmatpush1.bf16.msra.mxu0 %v664
  %1987 = vmatprep.subr.bf16.mxu0 %v669
  %1988 = vmatpush1.bf16.msra.mxu0 %v668
  %1989 = vmatprep.subr.bf16.mxu0 %v673
  %1990 = vmatpush1.bf16.msra.mxu0 %v672
  %1991 = vmatprep.subr.bf16.mxu0 %v677
  %1992 = vmatpush1.bf16.msra.mxu0 %v676
  %1993 = vmatprep.subr.bf16.mxu0 %v681
  %1994 = vmatpush1.bf16.msra.mxu0 %v680
  %1995 = vmatprep.subr.bf16.mxu0 %v685
  %1996 = vmatpush1.bf16.msra.mxu0 %v684
  %1997 = vmatprep.mubr.bf16.mxu0 %v1795
  %1998 = vmatmul.mubr.bf16.gmra.mrb[0].mxu0 %v1923
  %v1999 = vpop.f32.mrb[0].mxu0
  %v2000 = vadd.f32 %v421, %v1999
  %v2001 = vpop.f32.mrb[0].mxu0
  %v2002 = vadd.f32 %v425, %v2001
  %v2003 = vpop.f32.mrb[0].mxu0
  %v2004 = vpop.f32.mrb[0].mxu0
  %2005 = vdwg.mxu0
  %v2006 = vxor.u32 %v1959, 2147483648
  %v2007 = vmul.f32 %v2006, 1.442695
  %v2008 = vpow.pop %v2007
  %v2009 = vadd.f32 %v2008, 1.0
  %v2010 = vrcp.pop %v2009
  %v2011 = vmul.f32 1.0, %v2010
  %v2012 = vxor.u32 %v1961, 2147483648
  %v2013 = vmul.f32 %v2012, 1.442695
  %v2014 = vpow.pop %v2013
  %v2015 = vadd.f32 %v2014, 1.0
  %v2016 = vrcp.pop %v2015
  %v2017 = vmul.f32 1.0, %v2016
  %v2018 = vtanh.pop %v2000
  %v2019 = vxor.u32 %v2002, 2147483648
  %v2020 = vmul.f32 %v2019, 1.442695
  %v2021 = vpow.pop %v2020
  %v2022 = vadd.f32 %v2021, 1.0
  %v2023 = vrcp.pop %v2022
  %v2024 = vmul.f32 1.0, %v2023
  %v2025 = vmul.f32 %v2017, %v1792
  %v2026 = vmul.f32 %v2011, %v2018
  %v2027 = vadd.f32 %v2025, %v2026
  %v2028 = vtanh.pop %v2027
  %v2029 = vmul.f32 %v2024, %v2028
  %v2030 = vpack.c.bf16 %v2029, %v2029
  %s2031 = scalar_lea.vmem %s6, 10
  %2032 = vst [vmem:[%s2031] sm:$0x3] %v2030
  %s2033 = scalar_lea.vmem %s0, 96
  %v2034 = vld [vmem:[%s2033] sm:$0xff]
  %v2035 = vld [vmem:[%s2033 + $0x8] sm:$0xff]
  %2036 = vmatprep.subr.bf16.mxu0 %v222
  %2037 = vmatpush1.bf16.msra.mxu0 %v221
  %2038 = vmatprep.subr.bf16.mxu0 %v226
  %2039 = vmatpush1.bf16.msra.mxu0 %v225
  %2040 = vmatprep.subr.bf16.mxu0 %v230
  %2041 = vmatpush1.bf16.msra.mxu0 %v229
  %2042 = vmatprep.subr.bf16.mxu0 %v234
  %2043 = vmatpush1.bf16.msra.mxu0 %v233
  %2044 = vmatprep.subr.bf16.mxu0 %v238
  %2045 = vmatpush1.bf16.msra.mxu0 %v237
  %2046 = vmatprep.subr.bf16.mxu0 %v242
  %2047 = vmatpush1.bf16.msra.mxu0 %v241
  %2048 = vmatprep.subr.bf16.mxu0 %v246
  %2049 = vmatpush1.bf16.msra.mxu0 %v245
  %2050 = vmatprep.subr.bf16.mxu0 %v250
  %2051 = vmatpush1.bf16.msra.mxu0 %v249
  %2052 = vmatprep.subr.bf16.mxu0 0
  %2053 = vmatpush1.bf16.msra.mxu0 0
  %2054 = vmatprep.subr.bf16.mxu0 0
  %2055 = vmatpush1.bf16.msra.mxu0 0
  %2056 = vmatprep.subr.bf16.mxu0 0
  %2057 = vmatpush1.bf16.msra.mxu0 0
  %2058 = vmatprep.subr.bf16.mxu0 0
  %2059 = vmatpush1.bf16.msra.mxu0 0
  %2060 = vmatprep.subr.bf16.mxu0 0
  %2061 = vmatpush1.bf16.msra.mxu0 0
  %2062 = vmatprep.subr.bf16.mxu0 0
  %2063 = vmatpush1.bf16.msra.mxu0 0
  %2064 = vmatprep.subr.bf16.mxu0 0
  %2065 = vmatpush1.bf16.msra.mxu0 0
  %2066 = vmatprep.subr.bf16.mxu0 0
  %2067 = vmatpush1.bf16.msra.mxu0 0
  %2068 = vmatprep.mubr.bf16.mxu0 0
  %2069 = vmatmul.mubr.bf16.gmra.mrb[0].mxu0 %v1923
  %v2070 = vpop.f32.mrb[0].mxu0
  %v2071 = vadd.f32 0.0, %v2070
  %v2072 = vpop.f32.mrb[0].mxu0
  %v2073 = vadd.f32 0.0, %v2072
  %v2074 = vpop.f32.mrb[0].mxu0
  %v2075 = vpop.f32.mrb[0].mxu0
  %2076 = vdwg.mxu0
  %2077 = vmatprep.subr.bf16.mxu0 %v224
  %2078 = vmatpush1.bf16.msra.mxu0 %v223
  %2079 = vmatprep.subr.bf16.mxu0 %v228
  %2080 = vmatpush1.bf16.msra.mxu0 %v227
  %2081 = vmatprep.subr.bf16.mxu0 %v232
  %2082 = vmatpush1.bf16.msra.mxu0 %v231
  %2083 = vmatprep.subr.bf16.mxu0 %v236
  %2084 = vmatpush1.bf16.msra.mxu0 %v235
  %2085 = vmatprep.subr.bf16.mxu0 %v240
  %2086 = vmatpush1.bf16.msra.mxu0 %v239
  %2087 = vmatprep.subr.bf16.mxu0 %v244
  %2088 = vmatpush1.bf16.msra.mxu0 %v243
  %2089 = vmatprep.subr.bf16.mxu0 %v248
  %2090 = vmatpush1.bf16.msra.mxu0 %v247
  %2091 = vmatprep.subr.bf16.mxu0 %v252
  %2092 = vmatpush1.bf16.msra.mxu0 %v251
  %2093 = vmatprep.subr.bf16.mxu0 0
  %2094 = vmatpush1.bf16.msra.mxu0 0
  %2095 = vmatprep.subr.bf16.mxu0 0
  %2096 = vmatpush1.bf16.msra.mxu0 0
  %2097 = vmatprep.subr.bf16.mxu0 0
  %2098 = vmatpush1.bf16.msra.mxu0 0
  %2099 = vmatprep.subr.bf16.mxu0 0
  %2100 = vmatpush1.bf16.msra.mxu0 0
  %2101 = vmatprep.subr.bf16.mxu0 0
  %2102 = vmatpush1.bf16.msra.mxu0 0
  %2103 = vmatprep.subr.bf16.mxu0 0
  %2104 = vmatpush1.bf16.msra.mxu0 0
  %2105 = vmatprep.subr.bf16.mxu0 0
  %2106 = vmatpush1.bf16.msra.mxu0 0
  %2107 = vmatprep.subr.bf16.mxu0 0
  %2108 = vmatpush1.bf16.msra.mxu0 0
  %2109 = vmatprep.mubr.bf16.mxu0 0
  %2110 = vmatmul.mubr.bf16.gmra.mrb[0].mxu0 %v1923
  %v2111 = vpop.f32.mrb[0].mxu0
  %v2112 = vadd.f32 0.0, %v2111
  %v2113 = vpop.f32.mrb[0].mxu0
  %v2114 = vadd.f32 0.0, %v2113
  %v2115 = vpop.f32.mrb[0].mxu0
  %v2116 = vpop.f32.mrb[0].mxu0
  %2117 = vdwg.mxu0
  %v2122 = vcombine.low %v2071, %v2073
  %v2123 = vcombine.low %v2112, %v2114
  %v2126 = vadd.f32 %v2034, %v2122
  %v2127 = vadd.f32 %v2035, %v2123
  %v2128 = vxor.u32 %v2126, 2147483648
  %v2129 = vmul.f32 %v2128, 1.442695
  %v2130 = vpow.pop %v2129
  %v2131 = vadd.f32 %v2130, 1.0
  %v2132 = vrcp.pop %v2131
  %v2133 = vmul.f32 1.0, %v2132
  %v2135 = vrot.slane %v2126, 4
  %v2137 = vxor.u32 %v2135, 2147483648
  %v2138 = vmul.f32 %v2137, 1.442695
  %v2139 = vpow.pop %v2138
  %v2140 = vadd.f32 %v2139, 1.0
  %v2141 = vrcp.pop %v2140
  %v2142 = vmul.f32 1.0, %v2141
  %v2143 = vtanh.pop %v2127
  %v2145 = vrot.slane %v2127, 4
  %v2147 = vxor.u32 %v2145, 2147483648
  %v2148 = vmul.f32 %v2147, 1.442695
  %v2149 = vpow.pop %v2148
  %v2150 = vadd.f32 %v2149, 1.0
  %v2151 = vrcp.pop %v2150
  %v2152 = vmul.f32 1.0, %v2151
  %v2153 = vmul.f32 %v2142, %v1920
  %v2154 = vmul.f32 %v2133, %v2143
  %v2155 = vadd.f32 %v2153, %v2154
  %v2156 = vtanh.pop %v2155
  %v2157 = vmul.f32 %v2152, %v2156
  %v2158 = vpack.c.bf16 %v2157, %v2157
  %2159 = vmatprep.subr.bf16.mxu0 %v623
  %2160 = vmatpush1.bf16.msra.mxu0 %v622
  %2161 = vmatprep.subr.bf16.mxu0 %v627
  %2162 = vmatpush1.bf16.msra.mxu0 %v626
  %2163 = vmatprep.subr.bf16.mxu0 %v631
  %2164 = vmatpush1.bf16.msra.mxu0 %v630
  %2165 = vmatprep.subr.bf16.mxu0 %v635
  %2166 = vmatpush1.bf16.msra.mxu0 %v634
  %2167 = vmatprep.subr.bf16.mxu0 %v639
  %2168 = vmatpush1.bf16.msra.mxu0 %v638
  %2169 = vmatprep.subr.bf16.mxu0 %v643
  %2170 = vmatpush1.bf16.msra.mxu0 %v642
  %2171 = vmatprep.subr.bf16.mxu0 %v647
  %2172 = vmatpush1.bf16.msra.mxu0 %v646
  %2173 = vmatprep.subr.bf16.mxu0 %v651
  %2174 = vmatpush1.bf16.msra.mxu0 %v650
  %2175 = vmatprep.subr.bf16.mxu0 %v655
  %2176 = vmatpush1.bf16.msra.mxu0 %v654
  %2177 = vmatprep.subr.bf16.mxu0 %v659
  %2178 = vmatpush1.bf16.msra.mxu0 %v658
  %2179 = vmatprep.subr.bf16.mxu0 %v663
  %2180 = vmatpush1.bf16.msra.mxu0 %v662
  %2181 = vmatprep.subr.bf16.mxu0 %v667
  %2182 = vmatpush1.bf16.msra.mxu0 %v666
  %2183 = vmatprep.subr.bf16.mxu0 %v671
  %2184 = vmatpush1.bf16.msra.mxu0 %v670
  %2185 = vmatprep.subr.bf16.mxu0 %v675
  %2186 = vmatpush1.bf16.msra.mxu0 %v674
  %2187 = vmatprep.subr.bf16.mxu0 %v679
  %2188 = vmatpush1.bf16.msra.mxu0 %v678
  %2189 = vmatprep.subr.bf16.mxu0 %v683
  %2190 = vmatpush1.bf16.msra.mxu0 %v682
  %2191 = vmatprep.mubr.bf16.mxu0 %v2030
  %2192 = vmatmul.mubr.bf16.gmra.mrb[0].mxu0 %v2158
  %v2193 = vpop.f32.mrb[0].mxu0
  %v2194 = vadd.f32 %v413, %v2193
  %v2195 = vpop.f32.mrb[0].mxu0
  %v2196 = vadd.f32 %v417, %v2195
  %v2197 = vpop.f32.mrb[0].mxu0
  %v2198 = vpop.f32.mrb[0].mxu0
  %2199 = vdwg.mxu0
  %2200 = vmatprep.subr.bf16.mxu0 %v625
  %2201 = vmatpush1.bf16.msra.mxu0 %v624
  %2202 = vmatprep.subr.bf16.mxu0 %v629
  %2203 = vmatpush1.bf16.msra.mxu0 %v628
  %2204 = vmatprep.subr.bf16.mxu0 %v633
  %2205 = vmatpush1.bf16.msra.mxu0 %v632
  %2206 = vmatprep.subr.bf16.mxu0 %v637
  %2207 = vmatpush1.bf16.msra.mxu0 %v636
  %2208 = vmatprep.subr.bf16.mxu0 %v641
  %2209 = vmatpush1.bf16.msra.mxu0 %v640
  %2210 = vmatprep.subr.bf16.mxu0 %v645
  %2211 = vmatpush1.bf16.msra.mxu0 %v644
  %2212 = vmatprep.subr.bf16.mxu0 %v649
  %2213 = vmatpush1.bf16.msra.mxu0 %v648
  %2214 = vmatprep.subr.bf16.mxu0 %v653
  %2215 = vmatpush1.bf16.msra.mxu0 %v652
  %2216 = vmatprep.subr.bf16.mxu0 %v657
  %2217 = vmatpush1.bf16.msra.mxu0 %v656
  %2218 = vmatprep.subr.bf16.mxu0 %v661
  %2219 = vmatpush1.bf16.msra.mxu0 %v660
  %2220 = vmatprep.subr.bf16.mxu0 %v665
  %2221 = vmatpush1.bf16.msra.mxu0 %v664
  %2222 = vmatprep.subr.bf16.mxu0 %v669
  %2223 = vmatpush1.bf16.msra.mxu0 %v668
  %2224 = vmatprep.subr.bf16.mxu0 %v673
  %2225 = vmatpush1.bf16.msra.mxu0 %v672
  %2226 = vmatprep.subr.bf16.mxu0 %v677
  %2227 = vmatpush1.bf16.msra.mxu0 %v676
  %2228 = vmatprep.subr.bf16.mxu0 %v681
  %2229 = vmatpush1.bf16.msra.mxu0 %v680
  %2230 = vmatprep.subr.bf16.mxu0 %v685
  %2231 = vmatpush1.bf16.msra.mxu0 %v684
  %2232 = vmatprep.mubr.bf16.mxu0 %v2030
  %2233 = vmatmul.mubr.bf16.gmra.mrb[0].mxu0 %v2158
  %v2234 = vpop.f32.mrb[0].mxu0
  %v2235 = vadd.f32 %v421, %v2234
  %v2236 = vpop.f32.mrb[0].mxu0
  %v2237 = vadd.f32 %v425, %v2236
  %v2238 = vpop.f32.mrb[0].mxu0
  %v2239 = vpop.f32.mrb[0].mxu0
  %2240 = vdwg.mxu0
  %v2241 = vxor.u32 %v2194, 2147483648
  %v2242 = vmul.f32 %v2241, 1.442695
  %v2243 = vpow.pop %v2242
  %v2244 = vadd.f32 %v2243, 1.0
  %v2245 = vrcp.pop %v2244
  %v2246 = vmul.f32 1.0, %v2245
  %v2247 = vxor.u32 %v2196, 2147483648
  %v2248 = vmul.f32 %v2247, 1.442695
  %v2249 = vpow.pop %v2248
  %v2250 = vadd.f32 %v2249, 1.0
  %v2251 = vrcp.pop %v2250
  %v2252 = vmul.f32 1.0, %v2251
  %v2253 = vtanh.pop %v2235
  %v2254 = vxor.u32 %v2237, 2147483648
  %v2255 = vmul.f32 %v2254, 1.442695
  %v2256 = vpow.pop %v2255
  %v2257 = vadd.f32 %v2256, 1.0
  %v2258 = vrcp.pop %v2257
  %v2259 = vmul.f32 1.0, %v2258
  %v2260 = vmul.f32 %v2252, %v2027
  %v2261 = vmul.f32 %v2246, %v2253
  %v2262 = vadd.f32 %v2260, %v2261
  %v2263 = vtanh.pop %v2262
  %v2264 = vmul.f32 %v2259, %v2263
  %v2265 = vpack.c.bf16 %v2264, %v2264
  %s2266 = scalar_lea.vmem %s6, 12
  %2267 = vst [vmem:[%s2266] sm:$0x3] %v2265
  %s2268 = scalar_lea.vmem %s0, 112
  %v2269 = vld [vmem:[%s2268] sm:$0xff]
  %v2270 = vld [vmem:[%s2268 + $0x8] sm:$0xff]
  %2271 = vmatprep.subr.bf16.mxu0 %v222
  %2272 = vmatpush1.bf16.msra.mxu0 %v221
  %2273 = vmatprep.subr.bf16.mxu0 %v226
  %2274 = vmatpush1.bf16.msra.mxu0 %v225
  %2275 = vmatprep.subr.bf16.mxu0 %v230
  %2276 = vmatpush1.bf16.msra.mxu0 %v229
  %2277 = vmatprep.subr.bf16.mxu0 %v234
  %2278 = vmatpush1.bf16.msra.mxu0 %v233
  %2279 = vmatprep.subr.bf16.mxu0 %v238
  %2280 = vmatpush1.bf16.msra.mxu0 %v237
  %2281 = vmatprep.subr.bf16.mxu0 %v242
  %2282 = vmatpush1.bf16.msra.mxu0 %v241
  %2283 = vmatprep.subr.bf16.mxu0 %v246
  %2284 = vmatpush1.bf16.msra.mxu0 %v245
  %2285 = vmatprep.subr.bf16.mxu0 %v250
  %2286 = vmatpush1.bf16.msra.mxu0 %v249
  %2287 = vmatprep.subr.bf16.mxu0 0
  %2288 = vmatpush1.bf16.msra.mxu0 0
  %2289 = vmatprep.subr.bf16.mxu0 0
  %2290 = vmatpush1.bf16.msra.mxu0 0
  %2291 = vmatprep.subr.bf16.mxu0 0
  %2292 = vmatpush1.bf16.msra.mxu0 0
  %2293 = vmatprep.subr.bf16.mxu0 0
  %2294 = vmatpush1.bf16.msra.mxu0 0
  %2295 = vmatprep.subr.bf16.mxu0 0
  %2296 = vmatpush1.bf16.msra.mxu0 0
  %2297 = vmatprep.subr.bf16.mxu0 0
  %2298 = vmatpush1.bf16.msra.mxu0 0
  %2299 = vmatprep.subr.bf16.mxu0 0
  %2300 = vmatpush1.bf16.msra.mxu0 0
  %2301 = vmatprep.subr.bf16.mxu0 0
  %2302 = vmatpush1.bf16.msra.mxu0 0
  %2303 = vmatprep.mubr.bf16.mxu0 0
  %2304 = vmatmul.mubr.bf16.gmra.mrb[0].mxu0 %v2158
  %v2305 = vpop.f32.mrb[0].mxu0
  %v2306 = vadd.f32 0.0, %v2305
  %v2307 = vpop.f32.mrb[0].mxu0
  %v2308 = vadd.f32 0.0, %v2307
  %v2309 = vpop.f32.mrb[0].mxu0
  %v2310 = vpop.f32.mrb[0].mxu0
  %2311 = vdwg.mxu0
  %2312 = vmatprep.subr.bf16.mxu0 %v224
  %2313 = vmatpush1.bf16.msra.mxu0 %v223
  %2314 = vmatprep.subr.bf16.mxu0 %v228
  %2315 = vmatpush1.bf16.msra.mxu0 %v227
  %2316 = vmatprep.subr.bf16.mxu0 %v232
  %2317 = vmatpush1.bf16.msra.mxu0 %v231
  %2318 = vmatprep.subr.bf16.mxu0 %v236
  %2319 = vmatpush1.bf16.msra.mxu0 %v235
  %2320 = vmatprep.subr.bf16.mxu0 %v240
  %2321 = vmatpush1.bf16.msra.mxu0 %v239
  %2322 = vmatprep.subr.bf16.mxu0 %v244
  %2323 = vmatpush1.bf16.msra.mxu0 %v243
  %2324 = vmatprep.subr.bf16.mxu0 %v248
  %2325 = vmatpush1.bf16.msra.mxu0 %v247
  %2326 = vmatprep.subr.bf16.mxu0 %v252
  %2327 = vmatpush1.bf16.msra.mxu0 %v251
  %2328 = vmatprep.subr.bf16.mxu0 0
  %2329 = vmatpush1.bf16.msra.mxu0 0
  %2330 = vmatprep.subr.bf16.mxu0 0
  %2331 = vmatpush1.bf16.msra.mxu0 0
  %2332 = vmatprep.subr.bf16.mxu0 0
  %2333 = vmatpush1.bf16.msra.mxu0 0
  %2334 = vmatprep.subr.bf16.mxu0 0
  %2335 = vmatpush1.bf16.msra.mxu0 0
  %2336 = vmatprep.subr.bf16.mxu0 0
  %2337 = vmatpush1.bf16.msra.mxu0 0
  %2338 = vmatprep.subr.bf16.mxu0 0
  %2339 = vmatpush1.bf16.msra.mxu0 0
  %2340 = vmatprep.subr.bf16.mxu0 0
  %2341 = vmatpush1.bf16.msra.mxu0 0
  %2342 = vmatprep.subr.bf16.mxu0 0
  %2343 = vmatpush1.bf16.msra.mxu0 0
  %2344 = vmatprep.mubr.bf16.mxu0 0
  %2345 = vmatmul.mubr.bf16.gmra.mrb[0].mxu0 %v2158
  %v2346 = vpop.f32.mrb[0].mxu0
  %v2347 = vadd.f32 0.0, %v2346
  %v2348 = vpop.f32.mrb[0].mxu0
  %v2349 = vadd.f32 0.0, %v2348
  %v2350 = vpop.f32.mrb[0].mxu0
  %v2351 = vpop.f32.mrb[0].mxu0
  %2352 = vdwg.mxu0
  %v2357 = vcombine.low %v2306, %v2308
  %v2358 = vcombine.low %v2347, %v2349
  %v2361 = vadd.f32 %v2269, %v2357
  %v2362 = vadd.f32 %v2270, %v2358
  %v2363 = vxor.u32 %v2361, 2147483648
  %v2364 = vmul.f32 %v2363, 1.442695
  %v2365 = vpow.pop %v2364
  %v2366 = vadd.f32 %v2365, 1.0
  %v2367 = vrcp.pop %v2366
  %v2368 = vmul.f32 1.0, %v2367
  %v2370 = vrot.slane %v2361, 4
  %v2372 = vxor.u32 %v2370, 2147483648
  %v2373 = vmul.f32 %v2372, 1.442695
  %v2374 = vpow.pop %v2373
  %v2375 = vadd.f32 %v2374, 1.0
  %v2376 = vrcp.pop %v2375
  %v2377 = vmul.f32 1.0, %v2376
  %v2378 = vtanh.pop %v2362
  %v2380 = vrot.slane %v2362, 4
  %v2382 = vxor.u32 %v2380, 2147483648
  %v2383 = vmul.f32 %v2382, 1.442695
  %v2384 = vpow.pop %v2383
  %v2385 = vadd.f32 %v2384, 1.0
  %v2386 = vrcp.pop %v2385
  %v2387 = vmul.f32 1.0, %v2386
  %v2388 = vmul.f32 %v2377, %v2155
  %v2389 = vmul.f32 %v2368, %v2378
  %v2390 = vadd.f32 %v2388, %v2389
  %v2391 = vtanh.pop %v2390
  %v2392 = vmul.f32 %v2387, %v2391
  %v2393 = vpack.c.bf16 %v2392, %v2392
  %2394 = vmatprep.subr.bf16.mxu0 %v623
  %2395 = vmatpush1.bf16.msra.mxu0 %v622
  %2396 = vmatprep.subr.bf16.mxu0 %v627
  %2397 = vmatpush1.bf16.msra.mxu0 %v626
  %2398 = vmatprep.subr.bf16.mxu0 %v631
  %2399 = vmatpush1.bf16.msra.mxu0 %v630
  %2400 = vmatprep.subr.bf16.mxu0 %v635
  %2401 = vmatpush1.bf16.msra.mxu0 %v634
  %2402 = vmatprep.subr.bf16.mxu0 %v639
  %2403 = vmatpush1.bf16.msra.mxu0 %v638
  %2404 = vmatprep.subr.bf16.mxu0 %v643
  %2405 = vmatpush1.bf16.msra.mxu0 %v642
  %2406 = vmatprep.subr.bf16.mxu0 %v647
  %2407 = vmatpush1.bf16.msra.mxu0 %v646
  %2408 = vmatprep.subr.bf16.mxu0 %v651
  %2409 = vmatpush1.bf16.msra.mxu0 %v650
  %2410 = vmatprep.subr.bf16.mxu0 %v655
  %2411 = vmatpush1.bf16.msra.mxu0 %v654
  %2412 = vmatprep.subr.bf16.mxu0 %v659
  %2413 = vmatpush1.bf16.msra.mxu0 %v658
  %2414 = vmatprep.subr.bf16.mxu0 %v663
  %2415 = vmatpush1.bf16.msra.mxu0 %v662
  %2416 = vmatprep.subr.bf16.mxu0 %v667
  %2417 = vmatpush1.bf16.msra.mxu0 %v666
  %2418 = vmatprep.subr.bf16.mxu0 %v671
  %2419 = vmatpush1.bf16.msra.mxu0 %v670
  %2420 = vmatprep.subr.bf16.mxu0 %v675
  %2421 = vmatpush1.bf16.msra.mxu0 %v674
  %2422 = vmatprep.subr.bf16.mxu0 %v679
  %2423 = vmatpush1.bf16.msra.mxu0 %v678
  %2424 = vmatprep.subr.bf16.mxu0 %v683
  %2425 = vmatpush1.bf16.msra.mxu0 %v682
  %2426 = vmatprep.mubr.bf16.mxu0 %v2265
  %2427 = vmatmul.mubr.bf16.gmra.mrb[0].mxu0 %v2393
  %v2428 = vpop.f32.mrb[0].mxu0
  %v2429 = vadd.f32 %v413, %v2428
  %v2430 = vpop.f32.mrb[0].mxu0
  %v2431 = vadd.f32 %v417, %v2430
  %v2432 = vpop.f32.mrb[0].mxu0
  %v2433 = vpop.f32.mrb[0].mxu0
  %2434 = vdwg.mxu0
  %2435 = vmatprep.subr.bf16.mxu0 %v625
  %2436 = vmatpush1.bf16.msra.mxu0 %v624
  %2437 = vmatprep.subr.bf16.mxu0 %v629
  %2438 = vmatpush1.bf16.msra.mxu0 %v628
  %2439 = vmatprep.subr.bf16.mxu0 %v633
  %2440 = vmatpush1.bf16.msra.mxu0 %v632
  %2441 = vmatprep.subr.bf16.mxu0 %v637
  %2442 = vmatpush1.bf16.msra.mxu0 %v636
  %2443 = vmatprep.subr.bf16.mxu0 %v641
  %2444 = vmatpush1.bf16.msra.mxu0 %v640
  %2445 = vmatprep.subr.bf16.mxu0 %v645
  %2446 = vmatpush1.bf16.msra.mxu0 %v644
  %2447 = vmatprep.subr.bf16.mxu0 %v649
  %2448 = vmatpush1.bf16.msra.mxu0 %v648
  %2449 = vmatprep.subr.bf16.mxu0 %v653
  %2450 = vmatpush1.bf16.msra.mxu0 %v652
  %2451 = vmatprep.subr.bf16.mxu0 %v657
  %2452 = vmatpush1.bf16.msra.mxu0 %v656
  %2453 = vmatprep.subr.bf16.mxu0 %v661
  %2454 = vmatpush1.bf16.msra.mxu0 %v660
  %2455 = vmatprep.subr.bf16.mxu0 %v665
  %2456 = vmatpush1.bf16.msra.mxu0 %v664
  %2457 = vmatprep.subr.bf16.mxu0 %v669
  %2458 = vmatpush1.bf16.msra.mxu0 %v668
  %2459 = vmatprep.subr.bf16.mxu0 %v673
  %2460 = vmatpush1.bf16.msra.mxu0 %v672
  %2461 = vmatprep.subr.bf16.mxu0 %v677
  %2462 = vmatpush1.bf16.msra.mxu0 %v676
  %2463 = vmatprep.subr.bf16.mxu0 %v681
  %2464 = vmatpush1.bf16.msra.mxu0 %v680
  %2465 = vmatprep.subr.bf16.mxu0 %v685
  %2466 = vmatpush1.bf16.msra.mxu0 %v684
  %2467 = vmatprep.mubr.bf16.mxu0 %v2265
  %2468 = vmatmul.mubr.bf16.gmra.mrb[0].mxu0 %v2393
  %v2469 = vpop.f32.mrb[0].mxu0
  %v2470 = vadd.f32 %v421, %v2469
  %v2471 = vpop.f32.mrb[0].mxu0
  %v2472 = vadd.f32 %v425, %v2471
  %v2473 = vpop.f32.mrb[0].mxu0
  %v2474 = vpop.f32.mrb[0].mxu0
  %2475 = vdwg.mxu0
  %v2476 = vxor.u32 %v2429, 2147483648
  %v2477 = vmul.f32 %v2476, 1.442695
  %v2478 = vpow.pop %v2477
  %v2479 = vadd.f32 %v2478, 1.0
  %v2480 = vrcp.pop %v2479
  %v2481 = vmul.f32 1.0, %v2480
  %v2482 = vxor.u32 %v2431, 2147483648
  %v2483 = vmul.f32 %v2482, 1.442695
  %v2484 = vpow.pop %v2483
  %v2485 = vadd.f32 %v2484, 1.0
  %v2486 = vrcp.pop %v2485
  %v2487 = vmul.f32 1.0, %v2486
  %v2488 = vtanh.pop %v2470
  %v2489 = vxor.u32 %v2472, 2147483648
  %v2490 = vmul.f32 %v2489, 1.442695
  %v2491 = vpow.pop %v2490
  %v2492 = vadd.f32 %v2491, 1.0
  %v2493 = vrcp.pop %v2492
  %v2494 = vmul.f32 1.0, %v2493
  %v2495 = vmul.f32 %v2487, %v2262
  %v2496 = vmul.f32 %v2481, %v2488
  %v2497 = vadd.f32 %v2495, %v2496
  %v2498 = vtanh.pop %v2497
  %v2499 = vmul.f32 %v2494, %v2498
  %v2500 = vpack.c.bf16 %v2499, %v2499
  %s2501 = scalar_lea.vmem %s6, 14
  %2502 = vst [vmem:[%s2501] sm:$0x3] %v2500
  // Predicated region
  $region26: #{glo_forward.6} parent=0 // pred_check
    _
  $region27: #{glo_forward.6} parent=0 // pred_check_branch
    %2504 = sbr.rel (0) target = $region29
  $region28: #{glo_forward.6} parent=0 // pred_region
    _
  $region29: #{glo_forward.6} parent=0 // pred_fallthru
    _
  // Predicated region
  $region30: #{glo_forward.6} parent=0 // pred_check
    _
  $region31: #{glo_forward.6} parent=0 // pred_check_branch
    %2506 = sbr.rel (0) target = $region33
  $region32: #{glo_forward.6} parent=0 // pred_region
    _
  $region33: #{glo_forward.6} parent=0 // pred_fallthru
    _

</llo_original>
